<compile_context>
chip_gen: v5e
topology: v5e:2x2
jax: 0.10.0
libtpu: 0.0.40
codegen_flags: <defaults>
</compile_context>

<pallas_src>
import functools

import numpy as np
import jax
import jax.numpy as jnp
from jax.experimental import pallas as pl
from jax.experimental.pallas import tpu as pltpu

OUT_CHANNELS = 32   # TGCN out_channels, hard-coded in the PyTorch module
BN_EPS = 1e-5


# ----------------------------------------------------------------------------
# Fused kernel: Conv2Dblock + gcn_norm/aggregation + GRU recurrence per direction,
# classifier head as an epilogue on the last grid step.
# ----------------------------------------------------------------------------
def _eeg_fused_kernel(x_ref, a_ref, perm_ref, w1_ref, b1_ref, w3_ref, b3_ref,
                      pwg_ref, sc2_ref, sh_ref, whzr_ref, whh_ref, bl_ref,
                      probs_ref, fcw_ref, fcb_ref, out_ref, hfwd_scr,
                      *, B, P, N, O, Hout):
    d = pl.program_id(0)
    G = B * P
    f32 = jnp.float32

    # ---- Conv2Dblock: tap-accumulated convolutions (static slices, no im2col) ----
    xv = x_ref[...]                                         # (G, 2, TpH, N)
    w1, b1 = w1_ref[0], b1_ref[0]                           # (2,N,N), (1,N)
    w3, b3 = w3_ref[0], b3_ref[0]                           # (8,N,N), (1,N)

    def conv_branch(wt, bias, offs):
        acc = jnp.zeros((G * Hout, N), f32)
        for kh, (par, a0) in enumerate(offs):
            tap = xv[:, par, a0:a0 + Hout, :].reshape(G * Hout, N)
            acc = acc + jnp.dot(tap, wt[kh], preferred_element_type=f32)
        y = jnp.maximum(acc + bias, 0.0)                    # (G*Hout, N)
        # -> (G*N, Hout): pooled/BN2d/GCN/gate weights were folded into one tall
        # 2-D matmul landing on the lane-dense 3*O axis.
        return jnp.swapaxes(y.reshape(G, Hout, N), 1, 2).reshape(G * N, Hout)

    y1 = conv_branch(w1, b1, [(1, 1), (0, 2)])                       # conv1 (2x1, s2)
    y3 = conv_branch(w3, b3, [(k % 2, k // 2) for k in range(8)])    # conv3 (8x1, s2, p3)

    # cat([x1,x3,x3]) + AdaptiveAvgPool + BN2d(eval) + GCN weight + gate x-weight,
    # all pre-folded into pwg / sc2 / sh at pack time.
    pwg = pwg_ref[0]                                        # (2, Hout, 3O)
    xw = (jnp.dot(y1, pwg[0], preferred_element_type=f32)
          + jnp.dot(y3, pwg[1], preferred_element_type=f32))          # (G*N, 3O)
    xw = xw.reshape(G, N, 3 * O) * sc2_ref[0] + sh_ref[0]             # (G, N, 3O)

    # ---- gcn_norm + aggregation for all periods and all three gates at once -----
    # backward direction: torch.flip(A, dims=[1]) == row permutation of the adjacency
    permB = jnp.broadcast_to(perm_ref[0], (G, N, N))
    adj = jnp.einsum('grk,gkc->grc', permB, a_ref[...],
                     preferred_element_type=f32)            # (G, N, N) adj[g, r, c]
    pos = adj > 0.0                                         # reference keeps At > 0 edges
    w = jnp.where(pos, adj, 0.0)
    rr = jax.lax.broadcasted_iota(jnp.int32, (N, N), 0)
    cc = jax.lax.broadcasted_iota(jnp.int32, (N, N), 1)
    need_loop = jnp.logical_and((rr == cc)[None], jnp.logical_not(pos))
    w = jnp.where(need_loop, 1.0, w)                        # add_remaining_self_loops
    deg = jnp.sum(w, axis=1)                                # (G, N), per target column
    dis = jnp.where(deg > 0.0, jax.lax.rsqrt(jnp.where(deg > 0.0, deg, 1.0)), 0.0)
    anorm = w * dis[:, :, None] * dis[:, None, :]
    anorm_t = jnp.swapaxes(anorm, 1, 2)                     # (G, c, r)
    gcn = jnp.einsum('gcr,grk->gck', anorm_t, xw,
                     preferred_element_type=f32)            # (G, N, 3O)
    gcn = (gcn + bl_ref[0]).reshape(B, P, N, 3 * O)         # gate + GCN biases (folded)

    # ---- GRU recurrence over periods, attention-weighted accumulation -----------
    probs = probs_ref[0]                                    # (1, P): softmax at pack time
    whzr = whzr_ref[0]                                      # (O, 2O)
    whh = whh_ref[0]                                        # (O, O)
    H = jnp.zeros((B * N, O), f32)
    Hacc = jnp.zeros((B * N, O), f32)
    # TODO(synk): for large `periods`, switch this static unroll to lax.fori_loop.
    for per in range(P):
        xg = gcn[:, per].reshape(B * N, 3 * O)              # x-side of z|r|h (pre-folded)
        hzr = jnp.dot(H, whzr, preferred_element_type=f32)  # h-side of z|r
        Z = jax.nn.sigmoid(xg[:, :O] + hzr[:, :O])
        R = jax.nn.sigmoid(xg[:, O:2 * O] + hzr[:, O:])
        Ht = jnp.tanh(xg[:, 2 * O:] +
                      jnp.dot(H * R, whh, preferred_element_type=f32))
        H = Z * H + (1.0 - Z) * Ht
        Hacc = Hacc + probs[:, per:per + 1] * H

    @pl.when(d == 0)
    def _():
        hfwd_scr[...] = Hacc                                # forward direction's H_accum

    # ---- classifier head epilogue: relu + BN1d(eval, folded) + fc + log_softmax --
    @pl.when(d == pl.num_programs(0) - 1)
    def _():
        h1 = jnp.maximum(hfwd_scr[...], 0.0).reshape(B, N, O)   # forward
        h2 = jnp.maximum(Hacc, 0.0).reshape(B, N, O)            # backward (current)
        flat = jnp.concatenate([h1[:, n, :] for n in range(N)]
                               + [h2[:, n, :] for n in range(N)], axis=-1)  # (B, 2NO)
        logits = jnp.dot(flat, fcw_ref[...], preferred_element_type=f32) + fcb_ref[...]
        m = jnp.max(logits, axis=-1, keepdims=True)
        lse = m + jnp.log(jnp.sum(jnp.exp(logits - m), axis=-1, keepdims=True))
        out_ref[...] = logits - lse


# ----------------------------------------------------------------------------
# Forward pass wrapper: minimal input prep + ONE pallas_call
# ----------------------------------------------------------------------------
def eeg_model_apply(X, A, packed):
    # TODO(synk): Dropout(p=0.3) is stochastic; eval-mode (identity) is applied.
    B, N, T, W = X.shape
    assert T % 2 == 0, "time axis must be even (stride-2 convolutions)"
    P = W
    G = B * W
    Hout = T // 2
    TpH = (T + 6) // 2
    O = packed['whh'].shape[-1]
    C = packed['fcw'].shape[-1]

    # Single copy of X (the backward node-flip is folded into that direction's conv
    # in-channel weights); pad the time axis by the conv3 halo and parity-split so
    # every conv tap is a static, unstrided slice inside the kernel.
    Xt = jnp.transpose(X, (0, 3, 2, 1)).reshape(G, T, N)              # (G, T, N)
    Xp = jnp.pad(Xt, ((0, 0), (3, 3), (0, 0)))                        # (G, T+6, N)
    Xpar = jnp.transpose(Xp.reshape(G, TpH, 2, N), (0, 2, 1, 3))      # (G, 2, TpH, N)
    At = jnp.transpose(A, (0, 3, 1, 2)).reshape(G, N, N)              # (G, N, N)

    kernel = functools.partial(_eeg_fused_kernel, B=B, P=P, N=N, O=O, Hout=Hout)
    return pl.pallas_call(
        kernel,
        out_shape=jax.ShapeDtypeStruct((B, C), jnp.float32),
        grid=(2,),
        in_specs=[
            pl.BlockSpec((G, 2, TpH, N), lambda d: (0, 0, 0, 0)),      # X (shared, single copy)
            pl.BlockSpec((G, N, N), lambda d: (0, 0, 0)),              # A (shared, single copy)
            pl.BlockSpec((1, N, N), lambda d: (d, 0, 0)),              # adjacency row-perm per dir
            pl.BlockSpec((1, 2, N, N), lambda d: (d, 0, 0, 0)),        # conv1 taps
            pl.BlockSpec((1, 1, N), lambda d: (d, 0, 0)),              # conv1 bias
            pl.BlockSpec((1, 8, N, N), lambda d: (d, 0, 0, 0)),        # conv3 taps
            pl.BlockSpec((1, 1, N), lambda d: (d, 0, 0)),              # conv3 bias
            pl.BlockSpec((1, 2, Hout, 3 * O), lambda d: (d, 0, 0, 0)), # pool+BN2d+GCN+gate weights
            pl.BlockSpec((1, N, 1), lambda d: (d, 0, 0)),              # BN2d scale (per node)
            pl.BlockSpec((1, N, 3 * O), lambda d: (d, 0, 0)),          # folded BN2d shift term
            pl.BlockSpec((1, O, 2 * O), lambda d: (d, 0, 0)),          # gate h-side (z|r)
            pl.BlockSpec((1, O, O), lambda d: (d, 0, 0)),              # gate h-side (candidate)
            pl.BlockSpec((1, 1, 3 * O), lambda d: (d, 0, 0)),          # folded gate + GCN biases
            pl.BlockSpec((1, 1, P), lambda d: (d, 0, 0)),              # attention probs
            pl.BlockSpec((2 * N * O, C), lambda d: (0, 0)),            # head fc (BN1d folded)
            pl.BlockSpec((1, C), lambda d: (0, 0)),                    # head bias (BN1d folded)
        ],
        out_specs=pl.BlockSpec((B, C), lambda d: (0, 0)),
        scratch_shapes=[pltpu.VMEM((B * N, O), jnp.float32)],          # fwd H_accum, stays resident
        compiler_params=pltpu.CompilerParams(
            dimension_semantics=("arbitrary",),   # hacc/out resident across the direction axis
            vmem_limit_bytes=32 * 1024 * 1024),
    )(Xpar, At, packed['perm'], packed['w1t'], packed['b1'], packed['w3t'],
      packed['b3'], packed['pwg'], packed['sc2'], packed['sh'], packed['whzr'],
      packed['whh'], packed['bl'], packed['probs'], packed['fcw'], packed['fcb'])


# ----------------------------------------------------------------------------
# Deterministic parameter initialization (synthetic, module-shaped) + packing
# ----------------------------------------------------------------------------
def _uniform(key, shape, lo, hi):
    return jax.random.uniform(key, shape, jnp.float32, lo, hi)


def init_conv_block(key, N):
    # conv2 (4x1 kernel) is constructed by the PyTorch module but its output is
    # unused in the forward cat([x1, x3, x3]) -> omitted here.
    ks = jax.random.split(key, 8)
    return dict(
        w1=0.3 * jax.random.normal(ks[0], (N, N, 2, 1), jnp.float32),   # Conv2d(N,N,(2,1))
        b1=0.1 * jax.random.normal(ks[1], (N,), jnp.float32),
        w3=0.3 * jax.random.normal(ks[2], (N, N, 8, 1), jnp.float32),   # Conv2d(N,N,(8,1))
        b3=0.1 * jax.random.normal(ks[3], (N,), jnp.float32),
        bn_g=_uniform(ks[4], (N,), 0.5, 1.5),
        bn_b=0.1 * jax.random.normal(ks[5], (N,), jnp.float32),
        bn_rm=0.1 * jax.random.normal(ks[6], (N,), jnp.float32),
        bn_rv=_uniform(ks[7], (N,), 0.5, 1.5),
    )


def init_a3tgcn(key, N, F, P, O):
    ks = jax.random.split(key, 6)
    return dict(
        conv=init_conv_block(ks[0], N),
        attention=jax.random.uniform(ks[1], (P,), jnp.float32),
        WG=0.3 * jax.random.normal(ks[2], (3, F, O), jnp.float32),      # GCN z/r/h weights
        bG=0.1 * jax.random.normal(ks[3], (3, 1, O), jnp.float32),      # GCN z/r/h biases
        LW=0.3 * jax.random.normal(ks[4], (3, 2 * O, O), jnp.float32),  # gate Linear(2O,O), pre-transposed
        Lb=0.1 * jax.random.normal(ks[5], (3, 1, O), jnp.float32),
    )


def init_model(key, N, F, P, num_classes, O=OUT_CHANNELS):
    ks = jax.random.split(key, 4)
    fwd = init_a3tgcn(ks[0], N, F, P, O)
    bwd = init_a3tgcn(ks[1], N, F, P, O)
    kb = jax.random.split(ks[2], 4)
    bn = jnp.stack([
        _uniform(kb[0], (N,), 0.5, 1.5),                       # gamma
        0.1 * jax.random.normal(kb[1], (N,), jnp.float32),     # beta
        0.1 * jax.random.normal(kb[2], (N,), jnp.float32),     # running_mean
        _uniform(kb[3], (N,), 0.5, 1.5),                       # running_var
    ])[:, :, None]                                             # (4, N, 1)
    kf = jax.random.split(ks[3], 2)
    fcw = 0.1 * jax.random.normal(kf[0], (N * 2 * O, num_classes), jnp.float32)
    fcb = 0.1 * jax.random.normal(kf[1], (1, num_classes), jnp.float32)
    return dict(fwd=fwd, bwd=bwd, bn=bn, fcw=fcw, fcb=fcb)


def _pool_matrices(Hout, F):
    """PyTorch AdaptiveAvgPool over a 3*Hout height, split into the y1 and (y3+y3) parts."""
    Hin = 3 * Hout
    full = np.zeros((Hin, F), np.float32)
    for f in range(F):
        s = (f * Hin) // F
        e = -((-(f + 1) * Hin) // F)
        full[s:e, f] = 1.0 / (e - s)
    p1 = full[:Hout]
    p3 = full[Hout:2 * Hout] + full[2 * Hout:]
    return np.stack([p1, p3])                                  # (2, Hout, F)


def _pack_direction(p, O, Hout, F, flip_nodes):
    conv = p['conv']
    # tap layout [kh, ci, co]; fold torch.flip(X, dims=[1]) into the in-channel axis
    w1t = jnp.transpose(conv['w1'][:, :, :, 0], (2, 1, 0))
    w3t = jnp.transpose(conv['w3'][:, :, :, 0], (2, 1, 0))
    N = conv['b1'].shape[0]
    perm = jnp.eye(N, dtype=jnp.float32)
    if flip_nodes:
        w1t = w1t[:, ::-1, :]
        w3t = w3t[:, ::-1, :]
        perm = perm[::-1]                                      # row flip of the adjacency
    scale2 = conv['bn_g'] * jax.lax.rsqrt(conv['bn_rv'] + BN_EPS)
    shift2 = conv['bn_b'] - conv['bn_rm'] * scale2
    LWx, LWh = p['LW'][:, :O, :], p['LW'][:, O:, :]
    # fold the gate x-side weights through the (linear) GCN: wg_eff_g = WG_g @ LWx_g
    wg_eff = jnp.concatenate([p['WG'][g] @ LWx[g] for g in range(3)], axis=1)   # (F, 3O)
    bl_eff = (jnp.concatenate([p['bG'][g] @ LWx[g] for g in range(3)], axis=1)
              + jnp.concatenate([p['Lb'][g] for g in range(3)], axis=1))        # (1, 3O)
    # fold AdaptiveAvgPool + eval BN2d into the same weight
    pools = _pool_matrices(Hout, F)                                             # (2, Hout, F)
    pwg = jnp.stack([pools[0] @ wg_eff, pools[1] @ wg_eff])                     # (2, Hout, 3O)
    shift_term = shift2[:, None] * jnp.sum(wg_eff, axis=0)[None, :]             # (N, 3O)
    return dict(
        perm=perm, w1t=w1t, b1=conv['b1'].reshape(1, -1),
        w3t=w3t, b3=conv['b3'].reshape(1, -1),
        pwg=pwg, sc2=scale2.reshape(-1, 1), sh=shift_term,
        whzr=jnp.concatenate([LWh[0], LWh[1]], axis=1), whh=LWh[2],
        bl=bl_eff, probs=jax.nn.softmax(p['attention']).reshape(1, -1),
    )


def pack_params(params, N, F, P, O, Hout):
    dirs = [_pack_direction(params['fwd'], O, Hout, F, False),
            _pack_direction(params['bwd'], O, Hout, F, True)]
    packed = {k: jnp.stack([dirs[0][k], dirs[1][k]]) for k in dirs[0]}
    # head: fold eval BN1d into fc; reorder rows into [fwd (n,j) | bwd (n,j)] halves
    g, b = params['bn'][0, :, 0], params['bn'][1, :, 0]
    rm, rv = params['bn'][2, :, 0], params['bn'][3, :, 0]
    s1 = g * jax.lax.rsqrt(rv + BN_EPS)
    t1 = b - rm * s1
    fcw, fcb = params['fcw'], params['fcb']                    # (N*2O, C), (1, C)
    s_flat = jnp.repeat(s1, 2 * O)
    t_flat = jnp.repeat(t1, 2 * O)
    fcw_r = (fcw * s_flat[:, None]).reshape(N, 2 * O, -1)
    packed['fcw'] = jnp.concatenate([fcw_r[:, :O, :].reshape(N * O, -1),
                                     fcw_r[:, O:, :].reshape(N * O, -1)], axis=0)
    packed['fcb'] = t_flat[None, :] @ fcw + fcb                # (1, C)
    return packed


# ----------------------------------------------------------------------------
if __name__ == "__main__":
    B, NUM_NODES, NODE_FEATURES, T, NUM_WINDOWS, NUM_CLASSES = 2, 4, 8, 16, 2, 3

    key = jax.random.PRNGKey(0)
    kx, ka, kp = jax.random.split(key, 3)
    X = jax.random.normal(kx, (B, NUM_NODES, T, NUM_WINDOWS), jnp.float32)
    # adjacency with some non-positive entries so edge filtering / self-loop logic is exercised
    A = jax.random.uniform(ka, (B, NUM_NODES, NUM_NODES, NUM_WINDOWS), jnp.float32) - 0.3

    params = init_model(kp, NUM_NODES, NODE_FEATURES, NUM_WINDOWS, NUM_CLASSES)
    packed = pack_params(params, NUM_NODES, NODE_FEATURES, NUM_WINDOWS, OUT_CHANNELS, T // 2)

    fwd = jax.jit(eeg_model_apply)
    out = jax.block_until_ready(fwd(X, A, packed))
    assert out.shape == (B, NUM_CLASSES)
    assert bool(jnp.all(jnp.isfinite(out)))
    print("KERNEL_OK")
</pallas_src>

<mosaic_0001>
module attributes {stable_mosaic.version = 11 : i64} {
  func.func @_eeg_fused_kernel(%arg0: i32, %arg1: memref<4x2x11x4xf32, #tpu.memory_space<vmem>>, %arg2: memref<4x4x4xf32, #tpu.memory_space<vmem>>, %arg3: memref<1x4x4xf32, #tpu.memory_space<vmem>>, %arg4: memref<1x2x4x4xf32, #tpu.memory_space<vmem>>, %arg5: memref<1x1x4xf32, #tpu.memory_space<vmem>>, %arg6: memref<1x8x4x4xf32, #tpu.memory_space<vmem>>, %arg7: memref<1x1x4xf32, #tpu.memory_space<vmem>>, %arg8: memref<1x2x8x96xf32, #tpu.memory_space<vmem>>, %arg9: memref<1x4x1xf32, #tpu.memory_space<vmem>>, %arg10: memref<1x4x96xf32, #tpu.memory_space<vmem>>, %arg11: memref<1x32x64xf32, #tpu.memory_space<vmem>>, %arg12: memref<1x32x32xf32, #tpu.memory_space<vmem>>, %arg13: memref<1x1x96xf32, #tpu.memory_space<vmem>>, %arg14: memref<1x1x2xf32, #tpu.memory_space<vmem>>, %arg15: memref<256x3xf32, #tpu.memory_space<vmem>>, %arg16: memref<1x3xf32, #tpu.memory_space<vmem>>, %arg17: memref<2x3xf32, #tpu.memory_space<vmem>>, %arg18: memref<8x32xf32, #tpu.memory_space<vmem>>) attributes {dimension_semantics = [#tpu.dimension_semantics<arbitrary>], iteration_bounds = array<i64: 2>, scalar_prefetch = 0 : i64, scratch_operands = 1 : i64, tpu.core_type = #tpu.core_type<tc>, window_params = [{pipeline_mode = #tpu.pipeline_mode<synchronous>, transform_indices = @transform_0, window_bounds = array<i64: 4, 2, 11, 4>}, {pipeline_mode = #tpu.pipeline_mode<synchronous>, transform_indices = @transform_1, window_bounds = array<i64: 4, 4, 4>}, {transform_indices = @transform_2, window_bounds = array<i64: 1, 4, 4>}, {transform_indices = @transform_3, window_bounds = array<i64: 1, 2, 4, 4>}, {transform_indices = @transform_4, window_bounds = array<i64: 1, 1, 4>}, {transform_indices = @transform_5, window_bounds = array<i64: 1, 8, 4, 4>}, {transform_indices = @transform_6, window_bounds = array<i64: 1, 1, 4>}, {transform_indices = @transform_7, window_bounds = array<i64: 1, 2, 8, 96>}, {transform_indices = @transform_8, window_bounds = array<i64: 1, 4, 1>}, {transform_indices = @transform_9, window_bounds = array<i64: 1, 4, 96>}, {transform_indices = @transform_10, window_bounds = array<i64: 1, 32, 64>}, {transform_indices = @transform_11, window_bounds = array<i64: 1, 32, 32>}, {transform_indices = @transform_12, window_bounds = array<i64: 1, 1, 96>}, {transform_indices = @transform_13, window_bounds = array<i64: 1, 1, 2>}, {pipeline_mode = #tpu.pipeline_mode<synchronous>, transform_indices = @transform_14, window_bounds = array<i64: 256, 3>}, {pipeline_mode = #tpu.pipeline_mode<synchronous>, transform_indices = @transform_15, window_bounds = array<i64: 1, 3>}, {pipeline_mode = #tpu.pipeline_mode<synchronous>, transform_indices = @transform_16, window_bounds = array<i64: 2, 3>}]} {
    %c0 = arith.constant 0 : index
    %c0_0 = arith.constant 0 : index
    %c0_1 = arith.constant 0 : index
    %c0_2 = arith.constant 0 : index
    %0 = vector.load %arg1[%c0, %c0_0, %c0_1, %c0_2] : memref<4x2x11x4xf32, #tpu.memory_space<vmem>>, vector<4x2x11x4xf32>
    %c0_3 = arith.constant 0 : index
    %c0_4 = arith.constant 0 : index
    %c0_5 = arith.constant 0 : index
    %c0_6 = arith.constant 0 : index
    %1 = vector.load %arg4[%c0_3, %c0_4, %c0_5, %c0_6] : memref<1x2x4x4xf32, #tpu.memory_space<vmem>>, vector<1x2x4x4xf32>
    %2 = vector.shape_cast %1 : vector<1x2x4x4xf32> to vector<2x4x4xf32>
    %c0_7 = arith.constant 0 : index
    %c0_8 = arith.constant 0 : index
    %c0_9 = arith.constant 0 : index
    %3 = vector.load %arg5[%c0_7, %c0_8, %c0_9] : memref<1x1x4xf32, #tpu.memory_space<vmem>>, vector<1x1x4xf32>
    %4 = vector.shape_cast %3 : vector<1x1x4xf32> to vector<1x4xf32>
    %c0_10 = arith.constant 0 : index
    %c0_11 = arith.constant 0 : index
    %c0_12 = arith.constant 0 : index
    %c0_13 = arith.constant 0 : index
    %5 = vector.load %arg6[%c0_10, %c0_11, %c0_12, %c0_13] : memref<1x8x4x4xf32, #tpu.memory_space<vmem>>, vector<1x8x4x4xf32>
    %6 = vector.shape_cast %5 : vector<1x8x4x4xf32> to vector<8x4x4xf32>
    %c0_14 = arith.constant 0 : index
    %c0_15 = arith.constant 0 : index
    %c0_16 = arith.constant 0 : index
    %7 = vector.load %arg7[%c0_14, %c0_15, %c0_16] : memref<1x1x4xf32, #tpu.memory_space<vmem>>, vector<1x1x4xf32>
    %8 = vector.shape_cast %7 : vector<1x1x4xf32> to vector<1x4xf32>
    %cst = arith.constant 0.000000e+00 : f32
    %9 = vector.broadcast %cst : f32 to vector<32x4xf32>
    %10 = vector.extract_strided_slice %0 {offsets = [0, 1, 1, 0], sizes = [4, 1, 8, 4], strides = [1, 1, 1, 1]} : vector<4x2x11x4xf32> to vector<4x1x8x4xf32>
    %11 = vector.shape_cast %10 : vector<4x1x8x4xf32> to vector<4x8x4xf32>
    %12 = vector.shape_cast %11 : vector<4x8x4xf32> to vector<32x4xf32>
    %13 = vector.extract_strided_slice %2 {offsets = [0, 0, 0], sizes = [1, 4, 4], strides = [1, 1, 1]} : vector<2x4x4xf32> to vector<1x4x4xf32>
    %14 = vector.shape_cast %13 : vector<1x4x4xf32> to vector<4x4xf32>
    %cst_17 = arith.constant dense<0.000000e+00> : vector<32x4xf32>
    %15 = tpu.matmul %12, %14, %cst_17 {dimension_numbers = #tpu.dot_dimension_numbers<[1], [0], [0], [1], [0, 0, 1, 1], [], []>} : vector<32x4xf32>, vector<4x4xf32>, vector<32x4xf32> -> vector<32x4xf32>
    %16 = arith.addf %9, %15 : vector<32x4xf32>
    %17 = vector.extract_strided_slice %0 {offsets = [0, 0, 2, 0], sizes = [4, 1, 8, 4], strides = [1, 1, 1, 1]} : vector<4x2x11x4xf32> to vector<4x1x8x4xf32>
    %18 = vector.shape_cast %17 : vector<4x1x8x4xf32> to vector<4x8x4xf32>
    %19 = vector.shape_cast %18 : vector<4x8x4xf32> to vector<32x4xf32>
    %20 = vector.extract_strided_slice %2 {offsets = [1, 0, 0], sizes = [1, 4, 4], strides = [1, 1, 1]} : vector<2x4x4xf32> to vector<1x4x4xf32>
    %21 = vector.shape_cast %20 : vector<1x4x4xf32> to vector<4x4xf32>
    %cst_18 = arith.constant dense<0.000000e+00> : vector<32x4xf32>
    %22 = tpu.matmul %19, %21, %cst_18 {dimension_numbers = #tpu.dot_dimension_numbers<[1], [0], [0], [1], [0, 0, 1, 1], [], []>} : vector<32x4xf32>, vector<4x4xf32>, vector<32x4xf32> -> vector<32x4xf32>
    %23 = arith.addf %16, %22 : vector<32x4xf32>
    %24 = vector.broadcast %4 : vector<1x4xf32> to vector<32x4xf32>
    %25 = arith.addf %23, %24 : vector<32x4xf32>
    %cst_19 = arith.constant 0.000000e+00 : f32
    %26 = vector.broadcast %cst_19 : f32 to vector<32x4xf32>
    %27 = arith.maximumf %25, %26 : vector<32x4xf32>
    %28 = vector.shape_cast %27 : vector<32x4xf32> to vector<4x8x4xf32>
    %29 = tpu.transpose %28, [0, 2, 1] : vector<4x8x4xf32> -> vector<4x4x8xf32>
    %30 = vector.shape_cast %29 : vector<4x4x8xf32> to vector<16x8xf32>
    %cst_20 = arith.constant 0.000000e+00 : f32
    %31 = vector.broadcast %cst_20 : f32 to vector<32x4xf32>
    %32 = vector.extract_strided_slice %0 {offsets = [0, 0, 0, 0], sizes = [4, 1, 8, 4], strides = [1, 1, 1, 1]} : vector<4x2x11x4xf32> to vector<4x1x8x4xf32>
    %33 = vector.shape_cast %32 : vector<4x1x8x4xf32> to vector<4x8x4xf32>
    %34 = vector.shape_cast %33 : vector<4x8x4xf32> to vector<32x4xf32>
    %35 = vector.extract_strided_slice %6 {offsets = [0, 0, 0], sizes = [1, 4, 4], strides = [1, 1, 1]} : vector<8x4x4xf32> to vector<1x4x4xf32>
    %36 = vector.shape_cast %35 : vector<1x4x4xf32> to vector<4x4xf32>
    %cst_21 = arith.constant dense<0.000000e+00> : vector<32x4xf32>
    %37 = tpu.matmul %34, %36, %cst_21 {dimension_numbers = #tpu.dot_dimension_numbers<[1], [0], [0], [1], [0, 0, 1, 1], [], []>} : vector<32x4xf32>, vector<4x4xf32>, vector<32x4xf32> -> vector<32x4xf32>
    %38 = arith.addf %31, %37 : vector<32x4xf32>
    %39 = vector.extract_strided_slice %0 {offsets = [0, 1, 0, 0], sizes = [4, 1, 8, 4], strides = [1, 1, 1, 1]} : vector<4x2x11x4xf32> to vector<4x1x8x4xf32>
    %40 = vector.shape_cast %39 : vector<4x1x8x4xf32> to vector<4x8x4xf32>
    %41 = vector.shape_cast %40 : vector<4x8x4xf32> to vector<32x4xf32>
    %42 = vector.extract_strided_slice %6 {offsets = [1, 0, 0], sizes = [1, 4, 4], strides = [1, 1, 1]} : vector<8x4x4xf32> to vector<1x4x4xf32>
    %43 = vector.shape_cast %42 : vector<1x4x4xf32> to vector<4x4xf32>
    %cst_22 = arith.constant dense<0.000000e+00> : vector<32x4xf32>
    %44 = tpu.matmul %41, %43, %cst_22 {dimension_numbers = #tpu.dot_dimension_numbers<[1], [0], [0], [1], [0, 0, 1, 1], [], []>} : vector<32x4xf32>, vector<4x4xf32>, vector<32x4xf32> -> vector<32x4xf32>
    %45 = arith.addf %38, %44 : vector<32x4xf32>
    %46 = vector.extract_strided_slice %0 {offsets = [0, 0, 1, 0], sizes = [4, 1, 8, 4], strides = [1, 1, 1, 1]} : vector<4x2x11x4xf32> to vector<4x1x8x4xf32>
    %47 = vector.shape_cast %46 : vector<4x1x8x4xf32> to vector<4x8x4xf32>
    %48 = vector.shape_cast %47 : vector<4x8x4xf32> to vector<32x4xf32>
    %49 = vector.extract_strided_slice %6 {offsets = [2, 0, 0], sizes = [1, 4, 4], strides = [1, 1, 1]} : vector<8x4x4xf32> to vector<1x4x4xf32>
    %50 = vector.shape_cast %49 : vector<1x4x4xf32> to vector<4x4xf32>
    %cst_23 = arith.constant dense<0.000000e+00> : vector<32x4xf32>
    %51 = tpu.matmul %48, %50, %cst_23 {dimension_numbers = #tpu.dot_dimension_numbers<[1], [0], [0], [1], [0, 0, 1, 1], [], []>} : vector<32x4xf32>, vector<4x4xf32>, vector<32x4xf32> -> vector<32x4xf32>
    %52 = arith.addf %45, %51 : vector<32x4xf32>
    %53 = vector.extract_strided_slice %0 {offsets = [0, 1, 1, 0], sizes = [4, 1, 8, 4], strides = [1, 1, 1, 1]} : vector<4x2x11x4xf32> to vector<4x1x8x4xf32>
    %54 = vector.shape_cast %53 : vector<4x1x8x4xf32> to vector<4x8x4xf32>
    %55 = vector.shape_cast %54 : vector<4x8x4xf32> to vector<32x4xf32>
    %56 = vector.extract_strided_slice %6 {offsets = [3, 0, 0], sizes = [1, 4, 4], strides = [1, 1, 1]} : vector<8x4x4xf32> to vector<1x4x4xf32>
    %57 = vector.shape_cast %56 : vector<1x4x4xf32> to vector<4x4xf32>
    %cst_24 = arith.constant dense<0.000000e+00> : vector<32x4xf32>
    %58 = tpu.matmul %55, %57, %cst_24 {dimension_numbers = #tpu.dot_dimension_numbers<[1], [0], [0], [1], [0, 0, 1, 1], [], []>} : vector<32x4xf32>, vector<4x4xf32>, vector<32x4xf32> -> vector<32x4xf32>
    %59 = arith.addf %52, %58 : vector<32x4xf32>
    %60 = vector.extract_strided_slice %0 {offsets = [0, 0, 2, 0], sizes = [4, 1, 8, 4], strides = [1, 1, 1, 1]} : vector<4x2x11x4xf32> to vector<4x1x8x4xf32>
    %61 = vector.shape_cast %60 : vector<4x1x8x4xf32> to vector<4x8x4xf32>
    %62 = vector.shape_cast %61 : vector<4x8x4xf32> to vector<32x4xf32>
    %63 = vector.extract_strided_slice %6 {offsets = [4, 0, 0], sizes = [1, 4, 4], strides = [1, 1, 1]} : vector<8x4x4xf32> to vector<1x4x4xf32>
    %64 = vector.shape_cast %63 : vector<1x4x4xf32> to vector<4x4xf32>
    %cst_25 = arith.constant dense<0.000000e+00> : vector<32x4xf32>
    %65 = tpu.matmul %62, %64, %cst_25 {dimension_numbers = #tpu.dot_dimension_numbers<[1], [0], [0], [1], [0, 0, 1, 1], [], []>} : vector<32x4xf32>, vector<4x4xf32>, vector<32x4xf32> -> vector<32x4xf32>
    %66 = arith.addf %59, %65 : vector<32x4xf32>
    %67 = vector.extract_strided_slice %0 {offsets = [0, 1, 2, 0], sizes = [4, 1, 8, 4], strides = [1, 1, 1, 1]} : vector<4x2x11x4xf32> to vector<4x1x8x4xf32>
    %68 = vector.shape_cast %67 : vector<4x1x8x4xf32> to vector<4x8x4xf32>
    %69 = vector.shape_cast %68 : vector<4x8x4xf32> to vector<32x4xf32>
    %70 = vector.extract_strided_slice %6 {offsets = [5, 0, 0], sizes = [1, 4, 4], strides = [1, 1, 1]} : vector<8x4x4xf32> to vector<1x4x4xf32>
    %71 = vector.shape_cast %70 : vector<1x4x4xf32> to vector<4x4xf32>
    %cst_26 = arith.constant dense<0.000000e+00> : vector<32x4xf32>
    %72 = tpu.matmul %69, %71, %cst_26 {dimension_numbers = #tpu.dot_dimension_numbers<[1], [0], [0], [1], [0, 0, 1, 1], [], []>} : vector<32x4xf32>, vector<4x4xf32>, vector<32x4xf32> -> vector<32x4xf32>
    %73 = arith.addf %66, %72 : vector<32x4xf32>
    %74 = vector.extract_strided_slice %0 {offsets = [0, 0, 3, 0], sizes = [4, 1, 8, 4], strides = [1, 1, 1, 1]} : vector<4x2x11x4xf32> to vector<4x1x8x4xf32>
    %75 = vector.shape_cast %74 : vector<4x1x8x4xf32> to vector<4x8x4xf32>
    %76 = vector.shape_cast %75 : vector<4x8x4xf32> to vector<32x4xf32>
    %77 = vector.extract_strided_slice %6 {offsets = [6, 0, 0], sizes = [1, 4, 4], strides = [1, 1, 1]} : vector<8x4x4xf32> to vector<1x4x4xf32>
    %78 = vector.shape_cast %77 : vector<1x4x4xf32> to vector<4x4xf32>
    %cst_27 = arith.constant dense<0.000000e+00> : vector<32x4xf32>
    %79 = tpu.matmul %76, %78, %cst_27 {dimension_numbers = #tpu.dot_dimension_numbers<[1], [0], [0], [1], [0, 0, 1, 1], [], []>} : vector<32x4xf32>, vector<4x4xf32>, vector<32x4xf32> -> vector<32x4xf32>
    %80 = arith.addf %73, %79 : vector<32x4xf32>
    %81 = vector.extract_strided_slice %0 {offsets = [0, 1, 3, 0], sizes = [4, 1, 8, 4], strides = [1, 1, 1, 1]} : vector<4x2x11x4xf32> to vector<4x1x8x4xf32>
    %82 = vector.shape_cast %81 : vector<4x1x8x4xf32> to vector<4x8x4xf32>
    %83 = vector.shape_cast %82 : vector<4x8x4xf32> to vector<32x4xf32>
    %84 = vector.extract_strided_slice %6 {offsets = [7, 0, 0], sizes = [1, 4, 4], strides = [1, 1, 1]} : vector<8x4x4xf32> to vector<1x4x4xf32>
    %85 = vector.shape_cast %84 : vector<1x4x4xf32> to vector<4x4xf32>
    %cst_28 = arith.constant dense<0.000000e+00> : vector<32x4xf32>
    %86 = tpu.matmul %83, %85, %cst_28 {dimension_numbers = #tpu.dot_dimension_numbers<[1], [0], [0], [1], [0, 0, 1, 1], [], []>} : vector<32x4xf32>, vector<4x4xf32>, vector<32x4xf32> -> vector<32x4xf32>
    %87 = arith.addf %80, %86 : vector<32x4xf32>
    %88 = vector.broadcast %8 : vector<1x4xf32> to vector<32x4xf32>
    %89 = arith.addf %87, %88 : vector<32x4xf32>
    %cst_29 = arith.constant 0.000000e+00 : f32
    %90 = vector.broadcast %cst_29 : f32 to vector<32x4xf32>
    %91 = arith.maximumf %89, %90 : vector<32x4xf32>
    %92 = vector.shape_cast %91 : vector<32x4xf32> to vector<4x8x4xf32>
    %93 = tpu.transpose %92, [0, 2, 1] : vector<4x8x4xf32> -> vector<4x4x8xf32>
    %94 = vector.shape_cast %93 : vector<4x4x8xf32> to vector<16x8xf32>
    %c0_30 = arith.constant 0 : index
    %c0_31 = arith.constant 0 : index
    %c0_32 = arith.constant 0 : index
    %c0_33 = arith.constant 0 : index
    %95 = vector.load %arg8[%c0_30, %c0_31, %c0_32, %c0_33] : memref<1x2x8x96xf32, #tpu.memory_space<vmem>>, vector<1x2x8x96xf32>
    %96 = vector.shape_cast %95 : vector<1x2x8x96xf32> to vector<2x8x96xf32>
    %97 = vector.extract_strided_slice %96 {offsets = [0, 0, 0], sizes = [1, 8, 96], strides = [1, 1, 1]} : vector<2x8x96xf32> to vector<1x8x96xf32>
    %98 = vector.shape_cast %97 : vector<1x8x96xf32> to vector<8x96xf32>
    %cst_34 = arith.constant dense<0.000000e+00> : vector<16x96xf32>
    %99 = tpu.matmul %30, %98, %cst_34 {dimension_numbers = #tpu.dot_dimension_numbers<[1], [0], [0], [1], [0, 0, 1, 1], [], []>} : vector<16x8xf32>, vector<8x96xf32>, vector<16x96xf32> -> vector<16x96xf32>
    %100 = vector.extract_strided_slice %96 {offsets = [1, 0, 0], sizes = [1, 8, 96], strides = [1, 1, 1]} : vector<2x8x96xf32> to vector<1x8x96xf32>
    %101 = vector.shape_cast %100 : vector<1x8x96xf32> to vector<8x96xf32>
    %cst_35 = arith.constant dense<0.000000e+00> : vector<16x96xf32>
    %102 = tpu.matmul %94, %101, %cst_35 {dimension_numbers = #tpu.dot_dimension_numbers<[1], [0], [0], [1], [0, 0, 1, 1], [], []>} : vector<16x8xf32>, vector<8x96xf32>, vector<16x96xf32> -> vector<16x96xf32>
    %103 = arith.addf %99, %102 : vector<16x96xf32>
    %104 = vector.shape_cast %103 : vector<16x96xf32> to vector<4x4x96xf32>
    %c0_36 = arith.constant 0 : index
    %c0_37 = arith.constant 0 : index
    %c0_38 = arith.constant 0 : index
    %105 = vector.load %arg9[%c0_36, %c0_37, %c0_38] : memref<1x4x1xf32, #tpu.memory_space<vmem>>, vector<1x4x1xf32>
    %106 = vector.shape_cast %105 : vector<1x4x1xf32> to vector<4x1xf32>
    %107 = vector.shape_cast %106 : vector<4x1xf32> to vector<1x4x1xf32>
    %108 = vector.broadcast %107 : vector<1x4x1xf32> to vector<4x4x96xf32>
    %109 = arith.mulf %104, %108 : vector<4x4x96xf32>
    %c0_39 = arith.constant 0 : index
    %c0_40 = arith.constant 0 : index
    %c0_41 = arith.constant 0 : index
    %110 = vector.load %arg10[%c0_39, %c0_40, %c0_41] : memref<1x4x96xf32, #tpu.memory_space<vmem>>, vector<1x4x96xf32>
    %111 = vector.shape_cast %110 : vector<1x4x96xf32> to vector<4x96xf32>
    %112 = vector.shape_cast %111 : vector<4x96xf32> to vector<1x4x96xf32>
    %113 = vector.broadcast %112 : vector<1x4x96xf32> to vector<4x4x96xf32>
    %114 = arith.addf %109, %113 : vector<4x4x96xf32>
    %c0_42 = arith.constant 0 : index
    %c0_43 = arith.constant 0 : index
    %c0_44 = arith.constant 0 : index
    %115 = vector.load %arg3[%c0_42, %c0_43, %c0_44] : memref<1x4x4xf32, #tpu.memory_space<vmem>>, vector<1x4x4xf32>
    %116 = vector.shape_cast %115 : vector<1x4x4xf32> to vector<4x4xf32>
    %117 = vector.shape_cast %116 : vector<4x4xf32> to vector<1x4x4xf32>
    %118 = vector.broadcast %117 : vector<1x4x4xf32> to vector<4x4x4xf32>
    %c0_45 = arith.constant 0 : index
    %c0_46 = arith.constant 0 : index
    %c0_47 = arith.constant 0 : index
    %119 = vector.load %arg2[%c0_45, %c0_46, %c0_47] : memref<4x4x4xf32, #tpu.memory_space<vmem>>, vector<4x4x4xf32>
    "tpu.trace_start"() <{level = 10 : i32, message = "grk,gkc->grc"}> : () -> ()
    %cst_48 = arith.constant dense<0.000000e+00> : vector<4x4x4xf32>
    %120 = tpu.matmul %118, %119, %cst_48 {dimension_numbers = #tpu.dot_dimension_numbers<[2], [1], [1], [2], [0, 0, 0, 1, 1, 2], [0], [0]>} : vector<4x4x4xf32>, vector<4x4x4xf32>, vector<4x4x4xf32> -> vector<4x4x4xf32>
    %cst_49 = arith.constant 0.000000e+00 : f32
    "tpu.trace_stop"() : () -> ()
    %121 = vector.broadcast %cst_49 : f32 to vector<4x4x4xf32>
    %122 = arith.cmpf ogt, %120, %121 : vector<4x4x4xf32>
    %cst_50 = arith.constant 0.000000e+00 : f32
    %123 = vector.broadcast %cst_50 : f32 to vector<4x4x4xf32>
    %124 = arith.select %122, %120, %123 : vector<4x4x4xi1>, vector<4x4x4xf32>
    %125 = tpu.iota {dimensions = array<i32: 0>} : vector<4x4xi32>
    %126 = tpu.iota {dimensions = array<i32: 1>} : vector<4x4xi32>
    %127 = arith.cmpi eq, %125, %126 : vector<4x4xi32>
    %128 = vector.shape_cast %127 : vector<4x4xi1> to vector<1x4x4xi1>
    %cst_51 = arith.constant dense<true> : vector<4x4x4xi1>
    %129 = arith.xori %122, %cst_51 : vector<4x4x4xi1>
    %130 = vector.broadcast %128 : vector<1x4x4xi1> to vector<4x4x4xi1>
    %131 = arith.andi %130, %129 : vector<4x4x4xi1>
    %cst_52 = arith.constant 1.000000e+00 : f32
    %132 = vector.broadcast %cst_52 : f32 to vector<4x4x4xf32>
    %133 = arith.select %131, %132, %124 : vector<4x4x4xi1>, vector<4x4x4xf32>
    %cst_53 = arith.constant dense<0.000000e+00> : vector<4x4xf32>
    %134 = vector.multi_reduction <add>, %133, %cst_53 [1] : vector<4x4x4xf32> to vector<4x4xf32>
    %cst_54 = arith.constant 0.000000e+00 : f32
    %135 = vector.broadcast %cst_54 : f32 to vector<4x4xf32>
    %136 = arith.cmpf ogt, %134, %135 : vector<4x4xf32>
    %cst_55 = arith.constant 0.000000e+00 : f32
    %137 = vector.broadcast %cst_55 : f32 to vector<4x4xf32>
    %138 = arith.cmpf ogt, %134, %137 : vector<4x4xf32>
    %cst_56 = arith.constant 1.000000e+00 : f32
    %139 = vector.broadcast %cst_56 : f32 to vector<4x4xf32>
    %140 = arith.select %138, %134, %139 : vector<4x4xi1>, vector<4x4xf32>
    %141 = math.rsqrt %140 : vector<4x4xf32>
    %cst_57 = arith.constant 0.000000e+00 : f32
    %142 = vector.broadcast %cst_57 : f32 to vector<4x4xf32>
    %143 = arith.select %136, %141, %142 : vector<4x4xi1>, vector<4x4xf32>
    %144 = vector.shape_cast %143 : vector<4x4xf32> to vector<4x4x1xf32>
    %145 = vector.broadcast %144 : vector<4x4x1xf32> to vector<4x4x4xf32>
    %146 = arith.mulf %133, %145 : vector<4x4x4xf32>
    %147 = vector.shape_cast %143 : vector<4x4xf32> to vector<4x1x4xf32>
    %148 = vector.broadcast %147 : vector<4x1x4xf32> to vector<4x4x4xf32>
    %149 = arith.mulf %146, %148 : vector<4x4x4xf32>
    %150 = tpu.transpose %149, [0, 2, 1] : vector<4x4x4xf32> -> vector<4x4x4xf32>
    "tpu.trace_start"() <{level = 10 : i32, message = "gcr,grk->gck"}> : () -> ()
    %cst_58 = arith.constant dense<0.000000e+00> : vector<4x4x96xf32>
    %151 = tpu.matmul %150, %114, %cst_58 {dimension_numbers = #tpu.dot_dimension_numbers<[2], [1], [1], [2], [0, 0, 0, 1, 1, 2], [0], [0]>} : vector<4x4x4xf32>, vector<4x4x96xf32>, vector<4x4x96xf32> -> vector<4x4x96xf32>
    "tpu.trace_stop"() : () -> ()
    %c0_59 = arith.constant 0 : index
    %c0_60 = arith.constant 0 : index
    %c0_61 = arith.constant 0 : index
    %152 = vector.load %arg13[%c0_59, %c0_60, %c0_61] : memref<1x1x96xf32, #tpu.memory_space<vmem>>, vector<1x1x96xf32>
    %153 = vector.shape_cast %152 : vector<1x1x96xf32> to vector<1x96xf32>
    %154 = vector.shape_cast %153 : vector<1x96xf32> to vector<1x1x96xf32>
    %155 = vector.broadcast %154 : vector<1x1x96xf32> to vector<4x4x96xf32>
    %156 = arith.addf %151, %155 : vector<4x4x96xf32>
    %157 = vector.shape_cast %156 : vector<4x4x96xf32> to vector<2x2x4x96xf32>
    %c0_62 = arith.constant 0 : index
    %c0_63 = arith.constant 0 : index
    %c0_64 = arith.constant 0 : index
    %158 = vector.load %arg14[%c0_62, %c0_63, %c0_64] : memref<1x1x2xf32, #tpu.memory_space<vmem>>, vector<1x1x2xf32>
    %159 = vector.shape_cast %158 : vector<1x1x2xf32> to vector<1x2xf32>
    %c0_65 = arith.constant 0 : index
    %c0_66 = arith.constant 0 : index
    %c0_67 = arith.constant 0 : index
    %160 = vector.load %arg11[%c0_65, %c0_66, %c0_67] : memref<1x32x64xf32, #tpu.memory_space<vmem>>, vector<1x32x64xf32>
    %161 = vector.shape_cast %160 : vector<1x32x64xf32> to vector<32x64xf32>
    %c0_68 = arith.constant 0 : index
    %c0_69 = arith.constant 0 : index
    %c0_70 = arith.constant 0 : index
    %162 = vector.load %arg12[%c0_68, %c0_69, %c0_70] : memref<1x32x32xf32, #tpu.memory_space<vmem>>, vector<1x32x32xf32>
    %163 = vector.shape_cast %162 : vector<1x32x32xf32> to vector<32x32xf32>
    %cst_71 = arith.constant 0.000000e+00 : f32
    %164 = vector.broadcast %cst_71 : f32 to vector<8x32xf32>
    %cst_72 = arith.constant 0.000000e+00 : f32
    %165 = vector.broadcast %cst_72 : f32 to vector<8x32xf32>
    %166 = vector.extract_strided_slice %157 {offsets = [0, 0, 0, 0], sizes = [2, 1, 4, 96], strides = [1, 1, 1, 1]} : vector<2x2x4x96xf32> to vector<2x1x4x96xf32>
    %167 = vector.shape_cast %166 : vector<2x1x4x96xf32> to vector<2x4x96xf32>
    %168 = vector.shape_cast %167 : vector<2x4x96xf32> to vector<8x96xf32>
    %cst_73 = arith.constant dense<0.000000e+00> : vector<8x64xf32>
    %169 = tpu.matmul %164, %161, %cst_73 {dimension_numbers = #tpu.dot_dimension_numbers<[1], [0], [0], [1], [0, 0, 1, 1], [], []>} : vector<8x32xf32>, vector<32x64xf32>, vector<8x64xf32> -> vector<8x64xf32>
    %170 = vector.extract_strided_slice %168 {offsets = [0, 0], sizes = [8, 32], strides = [1, 1]} : vector<8x96xf32> to vector<8x32xf32>
    %171 = vector.extract_strided_slice %169 {offsets = [0, 0], sizes = [8, 32], strides = [1, 1]} : vector<8x64xf32> to vector<8x32xf32>
    %172 = arith.addf %170, %171 : vector<8x32xf32>
    %173 = arith.negf %172 : vector<8x32xf32>
    %174 = math.exp %173 : vector<8x32xf32>
    %cst_74 = arith.constant 1.000000e+00 : f32
    %175 = vector.broadcast %cst_74 : f32 to vector<8x32xf32>
    %176 = arith.addf %175, %174 : vector<8x32xf32>
    %177 = arith.divf %175, %176 : vector<8x32xf32>
    %178 = vector.extract_strided_slice %168 {offsets = [0, 32], sizes = [8, 32], strides = [1, 1]} : vector<8x96xf32> to vector<8x32xf32>
    %179 = vector.extract_strided_slice %169 {offsets = [0, 32], sizes = [8, 32], strides = [1, 1]} : vector<8x64xf32> to vector<8x32xf32>
    %180 = arith.addf %178, %179 : vector<8x32xf32>
    %181 = arith.negf %180 : vector<8x32xf32>
    %182 = math.exp %181 : vector<8x32xf32>
    %cst_75 = arith.constant 1.000000e+00 : f32
    %183 = vector.broadcast %cst_75 : f32 to vector<8x32xf32>
    %184 = arith.addf %183, %182 : vector<8x32xf32>
    %185 = arith.divf %183, %184 : vector<8x32xf32>
    %186 = vector.extract_strided_slice %168 {offsets = [0, 64], sizes = [8, 32], strides = [1, 1]} : vector<8x96xf32> to vector<8x32xf32>
    %187 = arith.mulf %164, %185 : vector<8x32xf32>
    %cst_76 = arith.constant dense<0.000000e+00> : vector<8x32xf32>
    %188 = tpu.matmul %187, %163, %cst_76 {dimension_numbers = #tpu.dot_dimension_numbers<[1], [0], [0], [1], [0, 0, 1, 1], [], []>} : vector<8x32xf32>, vector<32x32xf32>, vector<8x32xf32> -> vector<8x32xf32>
    %189 = arith.addf %186, %188 : vector<8x32xf32>
    %190 = math.tanh %189 : vector<8x32xf32>
    %191 = arith.mulf %177, %164 : vector<8x32xf32>
    %cst_77 = arith.constant 1.000000e+00 : f32
    %192 = vector.broadcast %cst_77 : f32 to vector<8x32xf32>
    %193 = arith.subf %192, %177 : vector<8x32xf32>
    %194 = arith.mulf %193, %190 : vector<8x32xf32>
    %195 = arith.addf %191, %194 : vector<8x32xf32>
    %196 = vector.extract_strided_slice %159 {offsets = [0, 0], sizes = [1, 1], strides = [1, 1]} : vector<1x2xf32> to vector<1x1xf32>
    %197 = vector.broadcast %196 : vector<1x1xf32> to vector<8x32xf32>
    %198 = arith.mulf %197, %195 : vector<8x32xf32>
    %199 = arith.addf %165, %198 : vector<8x32xf32>
    %200 = vector.extract_strided_slice %157 {offsets = [0, 1, 0, 0], sizes = [2, 1, 4, 96], strides = [1, 1, 1, 1]} : vector<2x2x4x96xf32> to vector<2x1x4x96xf32>
    %201 = vector.shape_cast %200 : vector<2x1x4x96xf32> to vector<2x4x96xf32>
    %202 = vector.shape_cast %201 : vector<2x4x96xf32> to vector<8x96xf32>
    %cst_78 = arith.constant dense<0.000000e+00> : vector<8x64xf32>
    %203 = tpu.matmul %195, %161, %cst_78 {dimension_numbers = #tpu.dot_dimension_numbers<[1], [0], [0], [1], [0, 0, 1, 1], [], []>} : vector<8x32xf32>, vector<32x64xf32>, vector<8x64xf32> -> vector<8x64xf32>
    %204 = vector.extract_strided_slice %202 {offsets = [0, 0], sizes = [8, 32], strides = [1, 1]} : vector<8x96xf32> to vector<8x32xf32>
    %205 = vector.extract_strided_slice %203 {offsets = [0, 0], sizes = [8, 32], strides = [1, 1]} : vector<8x64xf32> to vector<8x32xf32>
    %206 = arith.addf %204, %205 : vector<8x32xf32>
    %207 = arith.negf %206 : vector<8x32xf32>
    %208 = math.exp %207 : vector<8x32xf32>
    %cst_79 = arith.constant 1.000000e+00 : f32
    %209 = vector.broadcast %cst_79 : f32 to vector<8x32xf32>
    %210 = arith.addf %209, %208 : vector<8x32xf32>
    %211 = arith.divf %209, %210 : vector<8x32xf32>
    %212 = vector.extract_strided_slice %202 {offsets = [0, 32], sizes = [8, 32], strides = [1, 1]} : vector<8x96xf32> to vector<8x32xf32>
    %213 = vector.extract_strided_slice %203 {offsets = [0, 32], sizes = [8, 32], strides = [1, 1]} : vector<8x64xf32> to vector<8x32xf32>
    %214 = arith.addf %212, %213 : vector<8x32xf32>
    %215 = arith.negf %214 : vector<8x32xf32>
    %216 = math.exp %215 : vector<8x32xf32>
    %cst_80 = arith.constant 1.000000e+00 : f32
    %217 = vector.broadcast %cst_80 : f32 to vector<8x32xf32>
    %218 = arith.addf %217, %216 : vector<8x32xf32>
    %219 = arith.divf %217, %218 : vector<8x32xf32>
    %220 = vector.extract_strided_slice %202 {offsets = [0, 64], sizes = [8, 32], strides = [1, 1]} : vector<8x96xf32> to vector<8x32xf32>
    %221 = arith.mulf %195, %219 : vector<8x32xf32>
    %cst_81 = arith.constant dense<0.000000e+00> : vector<8x32xf32>
    %222 = tpu.matmul %221, %163, %cst_81 {dimension_numbers = #tpu.dot_dimension_numbers<[1], [0], [0], [1], [0, 0, 1, 1], [], []>} : vector<8x32xf32>, vector<32x32xf32>, vector<8x32xf32> -> vector<8x32xf32>
    %223 = arith.addf %220, %222 : vector<8x32xf32>
    %224 = math.tanh %223 : vector<8x32xf32>
    %225 = arith.mulf %211, %195 : vector<8x32xf32>
    %cst_82 = arith.constant 1.000000e+00 : f32
    %226 = vector.broadcast %cst_82 : f32 to vector<8x32xf32>
    %227 = arith.subf %226, %211 : vector<8x32xf32>
    %228 = arith.mulf %227, %224 : vector<8x32xf32>
    %229 = arith.addf %225, %228 : vector<8x32xf32>
    %230 = vector.extract_strided_slice %159 {offsets = [0, 1], sizes = [1, 1], strides = [1, 1]} : vector<1x2xf32> to vector<1x1xf32>
    %231 = vector.broadcast %230 : vector<1x1xf32> to vector<8x32xf32>
    %232 = arith.mulf %231, %229 : vector<8x32xf32>
    %233 = arith.addf %199, %232 : vector<8x32xf32>
    %c0_i32 = arith.constant 0 : i32
    %234 = arith.cmpi eq, %arg0, %c0_i32 : i32
    %235 = arith.extui %234 : i1 to i32
    %c0_i32_83 = arith.constant 0 : i32
    %236 = arith.cmpi ne, %235, %c0_i32_83 : i32
    scf.if %236 {
      %c0_85 = arith.constant 0 : index
      %c0_86 = arith.constant 0 : index
      %240 = vector.load %arg18[%c0_85, %c0_86] : memref<8x32xf32, #tpu.memory_space<vmem>>, vector<8x32xf32>
      tpu.vector_store %arg18[%c0_85, %c0_86], %233 {strides = array<i32>} : memref<8x32xf32, #tpu.memory_space<vmem>>, vector<8x32xf32>,
    } else {
    }
    %c1_i32 = arith.constant 1 : i32
    %237 = arith.cmpi eq, %arg0, %c1_i32 : i32
    %238 = arith.extui %237 : i1 to i32
    %c0_i32_84 = arith.constant 0 : i32
    %239 = arith.cmpi ne, %238, %c0_i32_84 : i32
    scf.if %239 {
      %c0_85 = arith.constant 0 : index
      %c0_86 = arith.constant 0 : index
      %240 = vector.load %arg18[%c0_85, %c0_86] : memref<8x32xf32, #tpu.memory_space<vmem>>, vector<8x32xf32>
      %cst_87 = arith.constant 0.000000e+00 : f32
      %241 = vector.broadcast %cst_87 : f32 to vector<8x32xf32>
      %242 = arith.maximumf %240, %241 : vector<8x32xf32>
      %243 = vector.shape_cast %242 : vector<8x32xf32> to vector<2x4x32xf32>
      %cst_88 = arith.constant 0.000000e+00 : f32
      %244 = vector.broadcast %cst_88 : f32 to vector<8x32xf32>
      %245 = arith.maximumf %233, %244 : vector<8x32xf32>
      %246 = vector.shape_cast %245 : vector<8x32xf32> to vector<2x4x32xf32>
      %247 = vector.extract_strided_slice %243 {offsets = [0, 0, 0], sizes = [2, 1, 32], strides = [1, 1, 1]} : vector<2x4x32xf32> to vector<2x1x32xf32>
      %248 = vector.shape_cast %247 : vector<2x1x32xf32> to vector<2x32xf32>
      %249 = vector.extract_strided_slice %243 {offsets = [0, 1, 0], sizes = [2, 1, 32], strides = [1, 1, 1]} : vector<2x4x32xf32> to vector<2x1x32xf32>
      %250 = vector.shape_cast %249 : vector<2x1x32xf32> to vector<2x32xf32>
      %251 = vector.extract_strided_slice %243 {offsets = [0, 2, 0], sizes = [2, 1, 32], strides = [1, 1, 1]} : vector<2x4x32xf32> to vector<2x1x32xf32>
      %252 = vector.shape_cast %251 : vector<2x1x32xf32> to vector<2x32xf32>
      %253 = vector.extract_strided_slice %243 {offsets = [0, 3, 0], sizes = [2, 1, 32], strides = [1, 1, 1]} : vector<2x4x32xf32> to vector<2x1x32xf32>
      %254 = vector.shape_cast %253 : vector<2x1x32xf32> to vector<2x32xf32>
      %255 = vector.extract_strided_slice %246 {offsets = [0, 0, 0], sizes = [2, 1, 32], strides = [1, 1, 1]} : vector<2x4x32xf32> to vector<2x1x32xf32>
      %256 = vector.shape_cast %255 : vector<2x1x32xf32> to vector<2x32xf32>
      %257 = vector.extract_strided_slice %246 {offsets = [0, 1, 0], sizes = [2, 1, 32], strides = [1, 1, 1]} : vector<2x4x32xf32> to vector<2x1x32xf32>
      %258 = vector.shape_cast %257 : vector<2x1x32xf32> to vector<2x32xf32>
      %259 = vector.extract_strided_slice %246 {offsets = [0, 2, 0], sizes = [2, 1, 32], strides = [1, 1, 1]} : vector<2x4x32xf32> to vector<2x1x32xf32>
      %260 = vector.shape_cast %259 : vector<2x1x32xf32> to vector<2x32xf32>
      %261 = vector.extract_strided_slice %246 {offsets = [0, 3, 0], sizes = [2, 1, 32], strides = [1, 1, 1]} : vector<2x4x32xf32> to vector<2x1x32xf32>
      %262 = vector.shape_cast %261 : vector<2x1x32xf32> to vector<2x32xf32>
      %263 = tpu.concatenate %248, %250, %252, %254, %256, %258, %260, %262 in 1 : vector<2x32xf32>, vector<2x32xf32>, vector<2x32xf32>, vector<2x32xf32>, vector<2x32xf32>, vector<2x32xf32>, vector<2x32xf32>, vector<2x32xf32> -> vector<2x256xf32>
      %c0_89 = arith.constant 0 : index
      %c0_90 = arith.constant 0 : index
      %264 = vector.load %arg15[%c0_89, %c0_90] : memref<256x3xf32, #tpu.memory_space<vmem>>, vector<256x3xf32>
      %cst_91 = arith.constant dense<0.000000e+00> : vector<2x3xf32>
      %265 = tpu.matmul %263, %264, %cst_91 {dimension_numbers = #tpu.dot_dimension_numbers<[1], [0], [0], [1], [0, 0, 1, 1], [], []>} : vector<2x256xf32>, vector<256x3xf32>, vector<2x3xf32> -> vector<2x3xf32>
      %c0_92 = arith.constant 0 : index
      %c0_93 = arith.constant 0 : index
      %266 = vector.load %arg16[%c0_92, %c0_93] : memref<1x3xf32, #tpu.memory_space<vmem>>, vector<1x3xf32>
      %267 = vector.broadcast %266 : vector<1x3xf32> to vector<2x3xf32>
      %268 = arith.addf %265, %267 : vector<2x3xf32>
      %cst_94 = arith.constant dense<0xFF800000> : vector<2xf32>
      %269 = vector.multi_reduction <maximumf>, %268, %cst_94 [1] : vector<2x3xf32> to vector<2xf32>
      %270 = vector.shape_cast %269 : vector<2xf32> to vector<2x1xf32>
      %271 = vector.broadcast %270 : vector<2x1xf32> to vector<2x3xf32>
      %272 = arith.subf %268, %271 : vector<2x3xf32>
      %273 = math.exp %272 : vector<2x3xf32>
      %cst_95 = arith.constant dense<0.000000e+00> : vector<2xf32>
      %274 = vector.multi_reduction <add>, %273, %cst_95 [1] : vector<2x3xf32> to vector<2xf32>
      %275 = vector.shape_cast %274 : vector<2xf32> to vector<2x1xf32>
      %276 = math.log %275 : vector<2x1xf32>
      %277 = arith.addf %270, %276 : vector<2x1xf32>
      %278 = vector.broadcast %277 : vector<2x1xf32> to vector<2x3xf32>
      %279 = arith.subf %268, %278 : vector<2x3xf32>
      %c0_96 = arith.constant 0 : index
      %c0_97 = arith.constant 0 : index
      %280 = vector.load %arg17[%c0_96, %c0_97] : memref<2x3xf32, #tpu.memory_space<vmem>>, vector<2x3xf32>
      tpu.vector_store %arg17[%c0_96, %c0_97], %279 {strides = array<i32>} : memref<2x3xf32, #tpu.memory_space<vmem>>, vector<2x3xf32>,
    } else {
    }
    return
  }
  func.func @transform_0(%arg0: i32) -> (i32, i32, i32, i32) {
    %c0_i32 = arith.constant 0 : i32
    %c0_i32_0 = arith.constant 0 : i32
    %c0_i32_1 = arith.constant 0 : i32
    %c0_i32_2 = arith.constant 0 : i32
    %c0_i32_3 = arith.constant 0 : i32
    return %c0_i32, %c0_i32_0, %c0_i32_1, %c0_i32_2 : i32, i32, i32, i32
  }
  func.func @transform_1(%arg0: i32) -> (i32, i32, i32) {
    %c0_i32 = arith.constant 0 : i32
    %c0_i32_0 = arith.constant 0 : i32
    %c0_i32_1 = arith.constant 0 : i32
    %c0_i32_2 = arith.constant 0 : i32
    return %c0_i32, %c0_i32_0, %c0_i32_1 : i32, i32, i32
  }
  func.func @transform_2(%arg0: i32) -> (i32, i32, i32) {
    %c0_i32 = arith.constant 0 : i32
    %c0_i32_0 = arith.constant 0 : i32
    %c0_i32_1 = arith.constant 0 : i32
    return %arg0, %c0_i32, %c0_i32_0 : i32, i32, i32
  }
  func.func @transform_3(%arg0: i32) -> (i32, i32, i32, i32) {
    %c0_i32 = arith.constant 0 : i32
    %c0_i32_0 = arith.constant 0 : i32
    %c0_i32_1 = arith.constant 0 : i32
    %c0_i32_2 = arith.constant 0 : i32
    return %arg0, %c0_i32, %c0_i32_0, %c0_i32_1 : i32, i32, i32, i32
  }
  func.func @transform_4(%arg0: i32) -> (i32, i32, i32) {
    %c0_i32 = arith.constant 0 : i32
    %c0_i32_0 = arith.constant 0 : i32
    %c0_i32_1 = arith.constant 0 : i32
    return %arg0, %c0_i32, %c0_i32_0 : i32, i32, i32
  }
  func.func @transform_5(%arg0: i32) -> (i32, i32, i32, i32) {
    %c0_i32 = arith.constant 0 : i32
    %c0_i32_0 = arith.constant 0 : i32
    %c0_i32_1 = arith.constant 0 : i32
    %c0_i32_2 = arith.constant 0 : i32
    return %arg0, %c0_i32, %c0_i32_0, %c0_i32_1 : i32, i32, i32, i32
  }
  func.func @transform_6(%arg0: i32) -> (i32, i32, i32) {
    %c0_i32 = arith.constant 0 : i32
    %c0_i32_0 = arith.constant 0 : i32
    %c0_i32_1 = arith.constant 0 : i32
    return %arg0, %c0_i32, %c0_i32_0 : i32, i32, i32
  }
  func.func @transform_7(%arg0: i32) -> (i32, i32, i32, i32) {
    %c0_i32 = arith.constant 0 : i32
    %c0_i32_0 = arith.constant 0 : i32
    %c0_i32_1 = arith.constant 0 : i32
    %c0_i32_2 = arith.constant 0 : i32
    return %arg0, %c0_i32, %c0_i32_0, %c0_i32_1 : i32, i32, i32, i32
  }
  func.func @transform_8(%arg0: i32) -> (i32, i32, i32) {
    %c0_i32 = arith.constant 0 : i32
    %c0_i32_0 = arith.constant 0 : i32
    %c0_i32_1 = arith.constant 0 : i32
    return %arg0, %c0_i32, %c0_i32_0 : i32, i32, i32
  }
  func.func @transform_9(%arg0: i32) -> (i32, i32, i32) {
    %c0_i32 = arith.constant 0 : i32
    %c0_i32_0 = arith.constant 0 : i32
    %c0_i32_1 = arith.constant 0 : i32
    return %arg0, %c0_i32, %c0_i32_0 : i32, i32, i32
  }
  func.func @transform_10(%arg0: i32) -> (i32, i32, i32) {
    %c0_i32 = arith.constant 0 : i32
    %c0_i32_0 = arith.constant 0 : i32
    %c0_i32_1 = arith.constant 0 : i32
    return %arg0, %c0_i32, %c0_i32_0 : i32, i32, i32
  }
  func.func @transform_11(%arg0: i32) -> (i32, i32, i32) {
    %c0_i32 = arith.constant 0 : i32
    %c0_i32_0 = arith.constant 0 : i32
    %c0_i32_1 = arith.constant 0 : i32
    return %arg0, %c0_i32, %c0_i32_0 : i32, i32, i32
  }
  func.func @transform_12(%arg0: i32) -> (i32, i32, i32) {
    %c0_i32 = arith.constant 0 : i32
    %c0_i32_0 = arith.constant 0 : i32
    %c0_i32_1 = arith.constant 0 : i32
    return %arg0, %c0_i32, %c0_i32_0 : i32, i32, i32
  }
  func.func @transform_13(%arg0: i32) -> (i32, i32, i32) {
    %c0_i32 = arith.constant 0 : i32
    %c0_i32_0 = arith.constant 0 : i32
    %c0_i32_1 = arith.constant 0 : i32
    return %arg0, %c0_i32, %c0_i32_0 : i32, i32, i32
  }
  func.func @transform_14(%arg0: i32) -> (i32, i32) {
    %c0_i32 = arith.constant 0 : i32
    %c0_i32_0 = arith.constant 0 : i32
    %c0_i32_1 = arith.constant 0 : i32
    return %c0_i32, %c0_i32_0 : i32, i32
  }
  func.func @transform_15(%arg0: i32) -> (i32, i32) {
    %c0_i32 = arith.constant 0 : i32
    %c0_i32_0 = arith.constant 0 : i32
    %c0_i32_1 = arith.constant 0 : i32
    return %c0_i32, %c0_i32_0 : i32, i32
  }
  func.func @transform_16(%arg0: i32) -> (i32, i32) {
    %c0_i32 = arith.constant 0 : i32
    %c0_i32_0 = arith.constant 0 : i32
    %c0_i32_1 = arith.constant 0 : i32
    return %c0_i32, %c0_i32_0 : i32, i32
  }
}

</mosaic_0001>

<llo_original>
// kernel: eeg_model_apply.1
$region0: #{eeg_model_apply.1}
  #allocation0 [shape = 'u32[]', space=smem, size = 0x4, offset = 0x4, fixed_abs, tag = 'smem constant byte address 0x4 - core index']
  #allocation1 [shape = 'u32[72,128]{1,0:T(1,128)}', space=vmem, size = 0x9000, scoped, tag = 'internal scratch']
  #allocation2 [shape = 'f32[8,32]{1,0:T(8,128)}', space=vmem, size = 0x1000, scoped, tag = 'scratch operand']
  %s0 = inlined_call_operand.vmem [shape: f32[4,2,11,4], index: 0, kind: input, shape index: {}]
  %s1 = inlined_call_operand.vmem [shape: f32[4,4,4], index: 1, kind: input, shape index: {}]
  %s2 = inlined_call_operand.vmem [shape: f32[2,4,4], index: 2, kind: input, shape index: {}]
  %s3 = inlined_call_operand.vmem [shape: f32[2,2,4,4], index: 3, kind: input, shape index: {}]
  %s4 = inlined_call_operand.vmem [shape: f32[2,1,4], index: 4, kind: input, shape index: {}]
  %s5 = inlined_call_operand.vmem [shape: f32[2,8,4,4], index: 5, kind: input, shape index: {}]
  %s6 = inlined_call_operand.vmem [shape: f32[2,1,4], index: 6, kind: input, shape index: {}]
  %s7 = inlined_call_operand.vmem [shape: f32[2,2,8,96], index: 7, kind: input, shape index: {}]
  %s8 = inlined_call_operand.vmem [shape: f32[2,4,1], index: 8, kind: input, shape index: {}]
  %s9 = inlined_call_operand.vmem [shape: f32[2,4,96], index: 9, kind: input, shape index: {}]
  %s10 = inlined_call_operand.vmem [shape: f32[2,32,64], index: 10, kind: input, shape index: {}]
  %s11 = inlined_call_operand.vmem [shape: f32[2,32,32], index: 11, kind: input, shape index: {}]
  %s12 = inlined_call_operand.vmem [shape: f32[2,1,96], index: 12, kind: input, shape index: {}]
  %s13 = inlined_call_operand.vmem [shape: f32[2,1,2], index: 13, kind: input, shape index: {}]
  %s14 = inlined_call_operand.vmem [shape: f32[256,3], index: 14, kind: input, shape index: {}]
  %s15 = inlined_call_operand.vmem [shape: f32[1,3], index: 15, kind: input, shape index: {}]
  %s16 = inlined_call_operand.hbm [shape: f32[2,3], index: 16, kind: output, shape index: {}]
  %s17 = sld [smem:[#allocation0]]
  $region105: #{eeg_model_apply.1} parent=0
    _
  %s19 = ssub.s32 1, %s17
  %s20 = scalar_select 0, %s19, %s17
  $region1: #{eeg_model_apply.1} parent=0
    #allocation3 [shape = 'u8[1024]{0}', space=vmem, size = 0x400, scoped, tag = 'output window, operand 0, single buffered']
    #allocation4 [shape = 's32[2]{0}', space=sflag, size = 0x8, scoped, tag = 'scoped memory for eeg_model_apply.1']
    %21 = vsyncpa [#allocation4], 0
    loop: start=0, step=1, limit=4
    $region2: #{eeg_model_apply.1} parent=1 // loop_pre_header
      _
    $region3: #{eeg_model_apply.1} parent=1 // loop_header
      %s23 = sphi 0, %s27
      %p24 = scmp.ge.s32.totalorder %s23, 4
      %s31 = sphi 0, %s31
      %s33 = sphi 0, %s31
      %s34 = sphi 0, %s33
      %s48 = sphi 0, %s34
      %s52 = sphi 0, %s52
      %s54 = sphi 0, %s52
      %s55 = sphi 0, %s54
      %s69 = sphi 0, %s55
      %s75 = sphi 0, %s77
      %s78 = sphi 0, %s75
      %s79 = sphi 0, %s78
      %s95 = sphi 0, %s79
      %s101 = sphi 0, %s103
      %s104 = sphi 0, %s101
      %s105 = sphi 0, %s104
      %s121 = sphi 0, %s105
      %s127 = sphi 0, %s129
      %s130 = sphi 0, %s127
      %s131 = sphi 0, %s130
      %s147 = sphi 0, %s131
      %s153 = sphi 0, %s155
      %s156 = sphi 0, %s153
      %s157 = sphi 0, %s156
      %s173 = sphi 0, %s157
      %s179 = sphi 0, %s181
      %s182 = sphi 0, %s179
      %s183 = sphi 0, %s182
      %s199 = sphi 0, %s183
      %s205 = sphi 0, %s207
      %s208 = sphi 0, %s205
      %s209 = sphi 0, %s208
      %s225 = sphi 0, %s209
      %s231 = sphi 0, %s233
      %s234 = sphi 0, %s231
      %s235 = sphi 0, %s234
      %s251 = sphi 0, %s235
      %s257 = sphi 0, %s259
      %s260 = sphi 0, %s257
      %s261 = sphi 0, %s260
      %s277 = sphi 0, %s261
      %s283 = sphi 0, %s285
      %s286 = sphi 0, %s283
      %s287 = sphi 0, %s286
      %s303 = sphi 0, %s287
      %s309 = sphi 0, %s311
      %s312 = sphi 0, %s309
      %s313 = sphi 0, %s312
      %s329 = sphi 0, %s313
      %s335 = sphi 0, %s337
      %s338 = sphi 0, %s335
      %s339 = sphi 0, %s338
      %s355 = sphi 0, %s339
      %s361 = sphi 0, %s363
      %s364 = sphi 0, %s361
      %s365 = sphi 0, %s364
      %s381 = sphi 0, %s365
      %s385 = sphi 0, %s385
      %s387 = sphi 0, %s385
      %s388 = sphi 0, %s387
      %s402 = sphi 0, %s388
      %s406 = sphi 0, %s406
      %s408 = sphi 0, %s406
      %s409 = sphi 0, %s408
      %s423 = sphi 0, %s409
      %s427 = sphi 0, %s427
      %s429 = sphi 0, %s427
      %s430 = sphi 0, %s429
      %s444 = sphi 0, %s430
    $region4: #{eeg_model_apply.1} parent=1 // loop_header_branch
      %26 = sbr.rel (%p24) target = $region8
    $region5: #{eeg_model_apply.1} parent=1 // loop_body
      %s28 = ssub.s32 %s23, 1
      %s29 = ssub.s32 %s23, 2
      %s30 = sadd.s32 %s23, 1
      %s32 = sadd.s32 %s31, 1
      %p35 = scmp.eq.s32.totalorder %s23, 1
      %p36 = scmp.ne.s32.totalorder %s31, %s33
      %p37 = scmp.eq.s32.totalorder %s23, 0
      %p38 = por %p36, %p37
      %p39 = scmp.ne.s32.totalorder %s31, %s33
      %p40 = scmp.eq.s32.totalorder %s28, 1
      %p41 = por %p39, %p40
      %p42 = scmp.ne.s32.totalorder %s33, %s34
      %p43 = scmp.eq.s32.totalorder %s28, 0
      %p44 = por %p42, %p43
      %p45 = scmp.ne.s32.totalorder %s33, %s34
      %p46 = scmp.eq.s32.totalorder %s29, 1
      %p47 = por %p45, %p46
      %p49 = scmp.ne.s32.totalorder %s34, %s48
      %p50 = scmp.eq.s32.totalorder %s29, 0
      %p51 = por %p49, %p50
      %s53 = sadd.s32 %s52, 1
      %p56 = scmp.eq.s32.totalorder %s23, 1
      %p57 = scmp.ne.s32.totalorder %s52, %s54
      %p58 = scmp.eq.s32.totalorder %s23, 0
      %p59 = por %p57, %p58
      %p60 = scmp.ne.s32.totalorder %s52, %s54
      %p61 = scmp.eq.s32.totalorder %s28, 1
      %p62 = por %p60, %p61
      %p63 = scmp.ne.s32.totalorder %s54, %s55
      %p64 = scmp.eq.s32.totalorder %s28, 0
      %p65 = por %p63, %p64
      %p66 = scmp.ne.s32.totalorder %s54, %s55
      %p67 = scmp.eq.s32.totalorder %s29, 1
      %p68 = por %p66, %p67
      %p70 = scmp.ne.s32.totalorder %s55, %s69
      %p71 = scmp.eq.s32.totalorder %s29, 0
      %p72 = por %p70, %p71
      %s73 = ssub.s32 %s23, %s30
      %p74 = scmp.eq.s32.totalorder %s73, 0
      %s76 = sadd.s32 %s75, 1
      %s77 = scalar_select %p74, %s75, %s76
      %p80 = pneg %p74
      %p81 = scmp.eq.s32.totalorder %s23, 1
      %p82 = por %p80, %p81
      %p83 = scmp.ne.s32.totalorder %s75, %s78
      %p84 = scmp.eq.s32.totalorder %s23, 0
      %p85 = por %p83, %p84
      %p86 = scmp.ne.s32.totalorder %s75, %s78
      %p87 = scmp.eq.s32.totalorder %s28, 1
      %p88 = por %p86, %p87
      %p89 = scmp.ne.s32.totalorder %s78, %s79
      %p90 = scmp.eq.s32.totalorder %s28, 0
      %p91 = por %p89, %p90
      %p92 = scmp.ne.s32.totalorder %s78, %s79
      %p93 = scmp.eq.s32.totalorder %s29, 1
      %p94 = por %p92, %p93
      %p96 = scmp.ne.s32.totalorder %s79, %s95
      %p97 = scmp.eq.s32.totalorder %s29, 0
      %p98 = por %p96, %p97
      %s99 = ssub.s32 %s23, %s30
      %p100 = scmp.eq.s32.totalorder %s99, 0
      %s102 = sadd.s32 %s101, 1
      %s103 = scalar_select %p100, %s101, %s102
      %p106 = pneg %p100
      %p107 = scmp.eq.s32.totalorder %s23, 1
      %p108 = por %p106, %p107
      %p109 = scmp.ne.s32.totalorder %s101, %s104
      %p110 = scmp.eq.s32.totalorder %s23, 0
      %p111 = por %p109, %p110
      %p112 = scmp.ne.s32.totalorder %s101, %s104
      %p113 = scmp.eq.s32.totalorder %s28, 1
      %p114 = por %p112, %p113
      %p115 = scmp.ne.s32.totalorder %s104, %s105
      %p116 = scmp.eq.s32.totalorder %s28, 0
      %p117 = por %p115, %p116
      %p118 = scmp.ne.s32.totalorder %s104, %s105
      %p119 = scmp.eq.s32.totalorder %s29, 1
      %p120 = por %p118, %p119
      %p122 = scmp.ne.s32.totalorder %s105, %s121
      %p123 = scmp.eq.s32.totalorder %s29, 0
      %p124 = por %p122, %p123
      %s125 = ssub.s32 %s23, %s30
      %p126 = scmp.eq.s32.totalorder %s125, 0
      %s128 = sadd.s32 %s127, 1
      %s129 = scalar_select %p126, %s127, %s128
      %p132 = pneg %p126
      %p133 = scmp.eq.s32.totalorder %s23, 1
      %p134 = por %p132, %p133
      %p135 = scmp.ne.s32.totalorder %s127, %s130
      %p136 = scmp.eq.s32.totalorder %s23, 0
      %p137 = por %p135, %p136
      %p138 = scmp.ne.s32.totalorder %s127, %s130
      %p139 = scmp.eq.s32.totalorder %s28, 1
      %p140 = por %p138, %p139
      %p141 = scmp.ne.s32.totalorder %s130, %s131
      %p142 = scmp.eq.s32.totalorder %s28, 0
      %p143 = por %p141, %p142
      %p144 = scmp.ne.s32.totalorder %s130, %s131
      %p145 = scmp.eq.s32.totalorder %s29, 1
      %p146 = por %p144, %p145
      %p148 = scmp.ne.s32.totalorder %s131, %s147
      %p149 = scmp.eq.s32.totalorder %s29, 0
      %p150 = por %p148, %p149
      %s151 = ssub.s32 %s23, %s30
      %p152 = scmp.eq.s32.totalorder %s151, 0
      %s154 = sadd.s32 %s153, 1
      %s155 = scalar_select %p152, %s153, %s154
      %p158 = pneg %p152
      %p159 = scmp.eq.s32.totalorder %s23, 1
      %p160 = por %p158, %p159
      %p161 = scmp.ne.s32.totalorder %s153, %s156
      %p162 = scmp.eq.s32.totalorder %s23, 0
      %p163 = por %p161, %p162
      %p164 = scmp.ne.s32.totalorder %s153, %s156
      %p165 = scmp.eq.s32.totalorder %s28, 1
      %p166 = por %p164, %p165
      %p167 = scmp.ne.s32.totalorder %s156, %s157
      %p168 = scmp.eq.s32.totalorder %s28, 0
      %p169 = por %p167, %p168
      %p170 = scmp.ne.s32.totalorder %s156, %s157
      %p171 = scmp.eq.s32.totalorder %s29, 1
      %p172 = por %p170, %p171
      %p174 = scmp.ne.s32.totalorder %s157, %s173
      %p175 = scmp.eq.s32.totalorder %s29, 0
      %p176 = por %p174, %p175
      %s177 = ssub.s32 %s23, %s30
      %p178 = scmp.eq.s32.totalorder %s177, 0
      %s180 = sadd.s32 %s179, 1
      %s181 = scalar_select %p178, %s179, %s180
      %p184 = pneg %p178
      %p185 = scmp.eq.s32.totalorder %s23, 1
      %p186 = por %p184, %p185
      %p187 = scmp.ne.s32.totalorder %s179, %s182
      %p188 = scmp.eq.s32.totalorder %s23, 0
      %p189 = por %p187, %p188
      %p190 = scmp.ne.s32.totalorder %s179, %s182
      %p191 = scmp.eq.s32.totalorder %s28, 1
      %p192 = por %p190, %p191
      %p193 = scmp.ne.s32.totalorder %s182, %s183
      %p194 = scmp.eq.s32.totalorder %s28, 0
      %p195 = por %p193, %p194
      %p196 = scmp.ne.s32.totalorder %s182, %s183
      %p197 = scmp.eq.s32.totalorder %s29, 1
      %p198 = por %p196, %p197
      %p200 = scmp.ne.s32.totalorder %s183, %s199
      %p201 = scmp.eq.s32.totalorder %s29, 0
      %p202 = por %p200, %p201
      %s203 = ssub.s32 %s23, %s30
      %p204 = scmp.eq.s32.totalorder %s203, 0
      %s206 = sadd.s32 %s205, 1
      %s207 = scalar_select %p204, %s205, %s206
      %p210 = pneg %p204
      %p211 = scmp.eq.s32.totalorder %s23, 1
      %p212 = por %p210, %p211
      %p213 = scmp.ne.s32.totalorder %s205, %s208
      %p214 = scmp.eq.s32.totalorder %s23, 0
      %p215 = por %p213, %p214
      %p216 = scmp.ne.s32.totalorder %s205, %s208
      %p217 = scmp.eq.s32.totalorder %s28, 1
      %p218 = por %p216, %p217
      %p219 = scmp.ne.s32.totalorder %s208, %s209
      %p220 = scmp.eq.s32.totalorder %s28, 0
      %p221 = por %p219, %p220
      %p222 = scmp.ne.s32.totalorder %s208, %s209
      %p223 = scmp.eq.s32.totalorder %s29, 1
      %p224 = por %p222, %p223
      %p226 = scmp.ne.s32.totalorder %s209, %s225
      %p227 = scmp.eq.s32.totalorder %s29, 0
      %p228 = por %p226, %p227
      %s229 = ssub.s32 %s23, %s30
      %p230 = scmp.eq.s32.totalorder %s229, 0
      %s232 = sadd.s32 %s231, 1
      %s233 = scalar_select %p230, %s231, %s232
      %p236 = pneg %p230
      %p237 = scmp.eq.s32.totalorder %s23, 1
      %p238 = por %p236, %p237
      %p239 = scmp.ne.s32.totalorder %s231, %s234
      %p240 = scmp.eq.s32.totalorder %s23, 0
      %p241 = por %p239, %p240
      %p242 = scmp.ne.s32.totalorder %s231, %s234
      %p243 = scmp.eq.s32.totalorder %s28, 1
      %p244 = por %p242, %p243
      %p245 = scmp.ne.s32.totalorder %s234, %s235
      %p246 = scmp.eq.s32.totalorder %s28, 0
      %p247 = por %p245, %p246
      %p248 = scmp.ne.s32.totalorder %s234, %s235
      %p249 = scmp.eq.s32.totalorder %s29, 1
      %p250 = por %p248, %p249
      %p252 = scmp.ne.s32.totalorder %s235, %s251
      %p253 = scmp.eq.s32.totalorder %s29, 0
      %p254 = por %p252, %p253
      %s255 = ssub.s32 %s23, %s30
      %p256 = scmp.eq.s32.totalorder %s255, 0
      %s258 = sadd.s32 %s257, 1
      %s259 = scalar_select %p256, %s257, %s258
      %p262 = pneg %p256
      %p263 = scmp.eq.s32.totalorder %s23, 1
      %p264 = por %p262, %p263
      %p265 = scmp.ne.s32.totalorder %s257, %s260
      %p266 = scmp.eq.s32.totalorder %s23, 0
      %p267 = por %p265, %p266
      %p268 = scmp.ne.s32.totalorder %s257, %s260
      %p269 = scmp.eq.s32.totalorder %s28, 1
      %p270 = por %p268, %p269
      %p271 = scmp.ne.s32.totalorder %s260, %s261
      %p272 = scmp.eq.s32.totalorder %s28, 0
      %p273 = por %p271, %p272
      %p274 = scmp.ne.s32.totalorder %s260, %s261
      %p275 = scmp.eq.s32.totalorder %s29, 1
      %p276 = por %p274, %p275
      %p278 = scmp.ne.s32.totalorder %s261, %s277
      %p279 = scmp.eq.s32.totalorder %s29, 0
      %p280 = por %p278, %p279
      %s281 = ssub.s32 %s23, %s30
      %p282 = scmp.eq.s32.totalorder %s281, 0
      %s284 = sadd.s32 %s283, 1
      %s285 = scalar_select %p282, %s283, %s284
      %p288 = pneg %p282
      %p289 = scmp.eq.s32.totalorder %s23, 1
      %p290 = por %p288, %p289
      %p291 = scmp.ne.s32.totalorder %s283, %s286
      %p292 = scmp.eq.s32.totalorder %s23, 0
      %p293 = por %p291, %p292
      %p294 = scmp.ne.s32.totalorder %s283, %s286
      %p295 = scmp.eq.s32.totalorder %s28, 1
      %p296 = por %p294, %p295
      %p297 = scmp.ne.s32.totalorder %s286, %s287
      %p298 = scmp.eq.s32.totalorder %s28, 0
      %p299 = por %p297, %p298
      %p300 = scmp.ne.s32.totalorder %s286, %s287
      %p301 = scmp.eq.s32.totalorder %s29, 1
      %p302 = por %p300, %p301
      %p304 = scmp.ne.s32.totalorder %s287, %s303
      %p305 = scmp.eq.s32.totalorder %s29, 0
      %p306 = por %p304, %p305
      %s307 = ssub.s32 %s23, %s30
      %p308 = scmp.eq.s32.totalorder %s307, 0
      %s310 = sadd.s32 %s309, 1
      %s311 = scalar_select %p308, %s309, %s310
      %p314 = pneg %p308
      %p315 = scmp.eq.s32.totalorder %s23, 1
      %p316 = por %p314, %p315
      %p317 = scmp.ne.s32.totalorder %s309, %s312
      %p318 = scmp.eq.s32.totalorder %s23, 0
      %p319 = por %p317, %p318
      %p320 = scmp.ne.s32.totalorder %s309, %s312
      %p321 = scmp.eq.s32.totalorder %s28, 1
      %p322 = por %p320, %p321
      %p323 = scmp.ne.s32.totalorder %s312, %s313
      %p324 = scmp.eq.s32.totalorder %s28, 0
      %p325 = por %p323, %p324
      %p326 = scmp.ne.s32.totalorder %s312, %s313
      %p327 = scmp.eq.s32.totalorder %s29, 1
      %p328 = por %p326, %p327
      %p330 = scmp.ne.s32.totalorder %s313, %s329
      %p331 = scmp.eq.s32.totalorder %s29, 0
      %p332 = por %p330, %p331
      %s333 = ssub.s32 %s23, %s30
      %p334 = scmp.eq.s32.totalorder %s333, 0
      %s336 = sadd.s32 %s335, 1
      %s337 = scalar_select %p334, %s335, %s336
      %p340 = pneg %p334
      %p341 = scmp.eq.s32.totalorder %s23, 1
      %p342 = por %p340, %p341
      %p343 = scmp.ne.s32.totalorder %s335, %s338
      %p344 = scmp.eq.s32.totalorder %s23, 0
      %p345 = por %p343, %p344
      %p346 = scmp.ne.s32.totalorder %s335, %s338
      %p347 = scmp.eq.s32.totalorder %s28, 1
      %p348 = por %p346, %p347
      %p349 = scmp.ne.s32.totalorder %s338, %s339
      %p350 = scmp.eq.s32.totalorder %s28, 0
      %p351 = por %p349, %p350
      %p352 = scmp.ne.s32.totalorder %s338, %s339
      %p353 = scmp.eq.s32.totalorder %s29, 1
      %p354 = por %p352, %p353
      %p356 = scmp.ne.s32.totalorder %s339, %s355
      %p357 = scmp.eq.s32.totalorder %s29, 0
      %p358 = por %p356, %p357
      %s359 = ssub.s32 %s23, %s30
      %p360 = scmp.eq.s32.totalorder %s359, 0
      %s362 = sadd.s32 %s361, 1
      %s363 = scalar_select %p360, %s361, %s362
      %p366 = pneg %p360
      %p367 = scmp.eq.s32.totalorder %s23, 1
      %p368 = por %p366, %p367
      %p369 = scmp.ne.s32.totalorder %s361, %s364
      %p370 = scmp.eq.s32.totalorder %s23, 0
      %p371 = por %p369, %p370
      %p372 = scmp.ne.s32.totalorder %s361, %s364
      %p373 = scmp.eq.s32.totalorder %s28, 1
      %p374 = por %p372, %p373
      %p375 = scmp.ne.s32.totalorder %s364, %s365
      %p376 = scmp.eq.s32.totalorder %s28, 0
      %p377 = por %p375, %p376
      %p378 = scmp.ne.s32.totalorder %s364, %s365
      %p379 = scmp.eq.s32.totalorder %s29, 1
      %p380 = por %p378, %p379
      %p382 = scmp.ne.s32.totalorder %s365, %s381
      %p383 = scmp.eq.s32.totalorder %s29, 0
      %p384 = por %p382, %p383
      %s386 = sadd.s32 %s385, 1
      %p389 = scmp.eq.s32.totalorder %s23, 1
      %p390 = scmp.ne.s32.totalorder %s385, %s387
      %p391 = scmp.eq.s32.totalorder %s23, 0
      %p392 = por %p390, %p391
      %p393 = scmp.ne.s32.totalorder %s385, %s387
      %p394 = scmp.eq.s32.totalorder %s28, 1
      %p395 = por %p393, %p394
      %p396 = scmp.ne.s32.totalorder %s387, %s388
      %p397 = scmp.eq.s32.totalorder %s28, 0
      %p398 = por %p396, %p397
      %p399 = scmp.ne.s32.totalorder %s387, %s388
      %p400 = scmp.eq.s32.totalorder %s29, 1
      %p401 = por %p399, %p400
      %p403 = scmp.ne.s32.totalorder %s388, %s402
      %p404 = scmp.eq.s32.totalorder %s29, 0
      %p405 = por %p403, %p404
      %s407 = sadd.s32 %s406, 1
      %p410 = scmp.eq.s32.totalorder %s23, 1
      %p411 = scmp.ne.s32.totalorder %s406, %s408
      %p412 = scmp.eq.s32.totalorder %s23, 0
      %p413 = por %p411, %p412
      %p414 = scmp.ne.s32.totalorder %s406, %s408
      %p415 = scmp.eq.s32.totalorder %s28, 1
      %p416 = por %p414, %p415
      %p417 = scmp.ne.s32.totalorder %s408, %s409
      %p418 = scmp.eq.s32.totalorder %s28, 0
      %p419 = por %p417, %p418
      %p420 = scmp.ne.s32.totalorder %s408, %s409
      %p421 = scmp.eq.s32.totalorder %s29, 1
      %p422 = por %p420, %p421
      %p424 = scmp.ne.s32.totalorder %s409, %s423
      %p425 = scmp.eq.s32.totalorder %s29, 0
      %p426 = por %p424, %p425
      %s428 = sadd.s32 %s427, 1
      %p431 = scmp.eq.s32.totalorder %s23, 1
      %p432 = scmp.ne.s32.totalorder %s427, %s429
      %p433 = scmp.eq.s32.totalorder %s23, 0
      %p434 = por %p432, %p433
      %p435 = scmp.ne.s32.totalorder %s427, %s429
      %p436 = scmp.eq.s32.totalorder %s28, 1
      %p437 = por %p435, %p436
      %p438 = scmp.ne.s32.totalorder %s429, %s430
      %p439 = scmp.eq.s32.totalorder %s28, 0
      %p440 = por %p438, %p439
      %p441 = scmp.ne.s32.totalorder %s429, %s430
      %p442 = scmp.eq.s32.totalorder %s29, 1
      %p443 = por %p441, %p442
      %p445 = scmp.ne.s32.totalorder %s430, %s444
      %p446 = scmp.eq.s32.totalorder %s29, 0
      %p447 = por %p445, %p446
      %p448 = scmp.le.s32.totalorder 1, %s23
      %p449 = scmp.lt.s32.totalorder %s23, 3
      %p450 = pnand %p448, %p449
      %p451 = pneg %p450
      // Predicated region
      $region9: #{eeg_model_apply.1} parent=5 // pred_check
        _
      $region10: #{eeg_model_apply.1} parent=5 // pred_check_branch
        %453 = sbr.rel (%p450) target = $region12
      $region11: #{eeg_model_apply.1} parent=5 // pred_region
        %s454 = ssub.s32 %s23, 1
        // Predicated region
        $region13: #{eeg_model_apply.1} parent=11 // pred_check
          %p455 = pneg %p44
        $region14: #{eeg_model_apply.1} parent=11 // pred_check_branch
          %457 = sbr.rel (%p455) target = $region16
        $region15: #{eeg_model_apply.1} parent=11 // pred_region
          _
        $region16: #{eeg_model_apply.1} parent=11 // pred_fallthru
          _
        // Predicated region
        $region17: #{eeg_model_apply.1} parent=11 // pred_check
          %p458 = pneg %p65
        $region18: #{eeg_model_apply.1} parent=11 // pred_check_branch
          %460 = sbr.rel (%p458) target = $region20
        $region19: #{eeg_model_apply.1} parent=11 // pred_region
          _
        $region20: #{eeg_model_apply.1} parent=11 // pred_fallthru
          _
        // Predicated region
        $region21: #{eeg_model_apply.1} parent=11 // pred_check
          %p461 = pneg %p398
        $region22: #{eeg_model_apply.1} parent=11 // pred_check_branch
          %463 = sbr.rel (%p461) target = $region24
        $region23: #{eeg_model_apply.1} parent=11 // pred_region
          _
        $region24: #{eeg_model_apply.1} parent=11 // pred_fallthru
          _
        // Predicated region
        $region25: #{eeg_model_apply.1} parent=11 // pred_check
          %p464 = pneg %p419
        $region26: #{eeg_model_apply.1} parent=11 // pred_check_branch
          %466 = sbr.rel (%p464) target = $region28
        $region27: #{eeg_model_apply.1} parent=11 // pred_region
          _
        $region28: #{eeg_model_apply.1} parent=11 // pred_fallthru
          _
      $region12: #{eeg_model_apply.1} parent=5 // pred_fallthru
        _
      %p467 = scmp.lt.s32.totalorder %s23, 2
      // Predicated region
      $region29: #{eeg_model_apply.1} parent=5 // pred_check
        %p468 = pneg %p467
      $region30: #{eeg_model_apply.1} parent=5 // pred_check_branch
        %470 = sbr.rel (%p468) target = $region32
      $region31: #{eeg_model_apply.1} parent=5 // pred_region
        // Predicated region
        $region33: #{eeg_model_apply.1} parent=31 // pred_check
          %p471 = pneg %p85
        $region34: #{eeg_model_apply.1} parent=31 // pred_check_branch
          %473 = sbr.rel (%p471) target = $region36
        $region35: #{eeg_model_apply.1} parent=31 // pred_region
          %p474 = scmp.lt.s32.totalorder %s23, 1
          %s475 = scalar_select %p474, %s23, 1
          %s476 = smul.addr %s475, 4
          %s477 = scalar_lea.vmem %s2, %s476
        $region36: #{eeg_model_apply.1} parent=31 // pred_fallthru
          _
        // Predicated region
        $region37: #{eeg_model_apply.1} parent=31 // pred_check
          %p478 = pneg %p111
        $region38: #{eeg_model_apply.1} parent=31 // pred_check_branch
          %480 = sbr.rel (%p478) target = $region40
        $region39: #{eeg_model_apply.1} parent=31 // pred_region
          %p481 = scmp.lt.s32.totalorder %s23, 1
          %s482 = scalar_select %p481, %s23, 1
          %s483 = smul.addr %s482, 2
          %s484 = smul.addr %s483, 4
          %s485 = scalar_lea.vmem %s3, %s484
        $region40: #{eeg_model_apply.1} parent=31 // pred_fallthru
          _
        // Predicated region
        $region41: #{eeg_model_apply.1} parent=31 // pred_check
          %p486 = pneg %p137
        $region42: #{eeg_model_apply.1} parent=31 // pred_check_branch
          %488 = sbr.rel (%p486) target = $region44
        $region43: #{eeg_model_apply.1} parent=31 // pred_region
          %p489 = scmp.lt.s32.totalorder %s23, 1
          %s490 = scalar_select %p489, %s23, 1
          %s491 = scalar_lea.vmem %s4, %s490
        $region44: #{eeg_model_apply.1} parent=31 // pred_fallthru
          _
        // Predicated region
        $region45: #{eeg_model_apply.1} parent=31 // pred_check
          %p492 = pneg %p163
        $region46: #{eeg_model_apply.1} parent=31 // pred_check_branch
          %494 = sbr.rel (%p492) target = $region48
        $region47: #{eeg_model_apply.1} parent=31 // pred_region
          %p495 = scmp.lt.s32.totalorder %s23, 1
          %s496 = scalar_select %p495, %s23, 1
          %s497 = smul.addr %s496, 8
          %s498 = smul.addr %s497, 4
          %s499 = scalar_lea.vmem %s5, %s498
        $region48: #{eeg_model_apply.1} parent=31 // pred_fallthru
          _
        // Predicated region
        $region49: #{eeg_model_apply.1} parent=31 // pred_check
          %p500 = pneg %p189
        $region50: #{eeg_model_apply.1} parent=31 // pred_check_branch
          %502 = sbr.rel (%p500) target = $region52
        $region51: #{eeg_model_apply.1} parent=31 // pred_region
          %p503 = scmp.lt.s32.totalorder %s23, 1
          %s504 = scalar_select %p503, %s23, 1
          %s505 = scalar_lea.vmem %s6, %s504
        $region52: #{eeg_model_apply.1} parent=31 // pred_fallthru
          _
        // Predicated region
        $region53: #{eeg_model_apply.1} parent=31 // pred_check
          %p506 = pneg %p215
        $region54: #{eeg_model_apply.1} parent=31 // pred_check_branch
          %508 = sbr.rel (%p506) target = $region56
        $region55: #{eeg_model_apply.1} parent=31 // pred_region
          %p509 = scmp.lt.s32.totalorder %s23, 1
          %s510 = scalar_select %p509, %s23, 1
          %s511 = smul.addr %s510, 2
          %s512 = smul.addr %s511, 8
          %s513 = scalar_lea.vmem %s7, %s512
        $region56: #{eeg_model_apply.1} parent=31 // pred_fallthru
          _
        // Predicated region
        $region57: #{eeg_model_apply.1} parent=31 // pred_check
          %p514 = pneg %p241
        $region58: #{eeg_model_apply.1} parent=31 // pred_check_branch
          %516 = sbr.rel (%p514) target = $region60
        $region59: #{eeg_model_apply.1} parent=31 // pred_region
          %p517 = scmp.lt.s32.totalorder %s23, 1
          %s518 = scalar_select %p517, %s23, 1
          %s519 = smul.addr %s518, 4
          %s520 = scalar_lea.vmem %s8, %s519
        $region60: #{eeg_model_apply.1} parent=31 // pred_fallthru
          _
        // Predicated region
        $region61: #{eeg_model_apply.1} parent=31 // pred_check
          %p521 = pneg %p267
        $region62: #{eeg_model_apply.1} parent=31 // pred_check_branch
          %523 = sbr.rel (%p521) target = $region64
        $region63: #{eeg_model_apply.1} parent=31 // pred_region
          %p524 = scmp.lt.s32.totalorder %s23, 1
          %s525 = scalar_select %p524, %s23, 1
          %s526 = smul.addr %s525, 4
          %s527 = scalar_lea.vmem %s9, %s526
        $region64: #{eeg_model_apply.1} parent=31 // pred_fallthru
          _
        // Predicated region
        $region65: #{eeg_model_apply.1} parent=31 // pred_check
          %p528 = pneg %p293
        $region66: #{eeg_model_apply.1} parent=31 // pred_check_branch
          %530 = sbr.rel (%p528) target = $region68
        $region67: #{eeg_model_apply.1} parent=31 // pred_region
          %p531 = scmp.lt.s32.totalorder %s23, 1
          %s532 = scalar_select %p531, %s23, 1
          %s533 = smul.addr %s532, 4
          %s534 = smul.addr %s533, 8
          %s535 = scalar_lea.vmem %s10, %s534
        $region68: #{eeg_model_apply.1} parent=31 // pred_fallthru
          _
        // Predicated region
        $region69: #{eeg_model_apply.1} parent=31 // pred_check
          %p536 = pneg %p319
        $region70: #{eeg_model_apply.1} parent=31 // pred_check_branch
          %538 = sbr.rel (%p536) target = $region72
        $region71: #{eeg_model_apply.1} parent=31 // pred_region
          %p539 = scmp.lt.s32.totalorder %s23, 1
          %s540 = scalar_select %p539, %s23, 1
          %s541 = smul.addr %s540, 4
          %s542 = smul.addr %s541, 8
          %s543 = scalar_lea.vmem %s11, %s542
        $region72: #{eeg_model_apply.1} parent=31 // pred_fallthru
          _
        // Predicated region
        $region73: #{eeg_model_apply.1} parent=31 // pred_check
          %p544 = pneg %p345
        $region74: #{eeg_model_apply.1} parent=31 // pred_check_branch
          %546 = sbr.rel (%p544) target = $region76
        $region75: #{eeg_model_apply.1} parent=31 // pred_region
          %p547 = scmp.lt.s32.totalorder %s23, 1
          %s548 = scalar_select %p547, %s23, 1
          %s549 = scalar_lea.vmem %s12, %s548
        $region76: #{eeg_model_apply.1} parent=31 // pred_fallthru
          _
        // Predicated region
        $region77: #{eeg_model_apply.1} parent=31 // pred_check
          %p550 = pneg %p371
        $region78: #{eeg_model_apply.1} parent=31 // pred_check_branch
          %552 = sbr.rel (%p550) target = $region80
        $region79: #{eeg_model_apply.1} parent=31 // pred_region
          %p553 = scmp.lt.s32.totalorder %s23, 1
          %s554 = scalar_select %p553, %s23, 1
          %s555 = scalar_lea.vmem %s13, %s554
        $region80: #{eeg_model_apply.1} parent=31 // pred_fallthru
          _
      $region32: #{eeg_model_apply.1} parent=5 // pred_fallthru
        _
      %p556 = scmp.le.s32.totalorder 1, %s23
      %p557 = scmp.lt.s32.totalorder %s23, 3
      %p558 = pnand %p556, %p557
      %p559 = pneg %p558
      // Predicated region
      $region81: #{eeg_model_apply.1} parent=5 // pred_check
        _
      $region82: #{eeg_model_apply.1} parent=5 // pred_check_branch
        %561 = sbr.rel (%p558) target = $region84
      $region83: #{eeg_model_apply.1} parent=5 // pred_region
        %s562 = ssub.s32 %s23, 1
        %p563 = pneg %p44
        %p564 = pneg %p41
        %p565 = pneg %p65
        %p566 = pneg %p62
        %p567 = scmp.lt.s32.totalorder %s28, 1
        %s568 = scalar_select %p567, %s28, 1
        %s569 = smul.addr %s568, 4
        %s570 = scalar_lea.vmem %s2, %s569
        %p571 = pneg %p91
        %p572 = pneg %p88
        %p573 = scmp.lt.s32.totalorder %s28, 1
        %s574 = scalar_select %p573, %s28, 1
        %s575 = smul.addr %s574, 2
        %s576 = smul.addr %s575, 4
        %s577 = scalar_lea.vmem %s3, %s576
        %p578 = pneg %p117
        %p579 = pneg %p114
        %p580 = scmp.lt.s32.totalorder %s28, 1
        %s581 = scalar_select %p580, %s28, 1
        %s582 = scalar_lea.vmem %s4, %s581
        %p583 = pneg %p143
        %p584 = pneg %p140
        %p585 = scmp.lt.s32.totalorder %s28, 1
        %s586 = scalar_select %p585, %s28, 1
        %s587 = smul.addr %s586, 8
        %s588 = smul.addr %s587, 4
        %s589 = scalar_lea.vmem %s5, %s588
        %p590 = pneg %p169
        %p591 = pneg %p166
        %p592 = scmp.lt.s32.totalorder %s28, 1
        %s593 = scalar_select %p592, %s28, 1
        %s594 = scalar_lea.vmem %s6, %s593
        %p595 = pneg %p195
        %p596 = pneg %p192
        %p597 = scmp.lt.s32.totalorder %s28, 1
        %s598 = scalar_select %p597, %s28, 1
        %s599 = smul.addr %s598, 2
        %s600 = smul.addr %s599, 8
        %s601 = scalar_lea.vmem %s7, %s600
        %p602 = pneg %p221
        %p603 = pneg %p218
        %p604 = scmp.lt.s32.totalorder %s28, 1
        %s605 = scalar_select %p604, %s28, 1
        %s606 = smul.addr %s605, 4
        %s607 = scalar_lea.vmem %s8, %s606
        %p608 = pneg %p247
        %p609 = pneg %p244
        %p610 = scmp.lt.s32.totalorder %s28, 1
        %s611 = scalar_select %p610, %s28, 1
        %s612 = smul.addr %s611, 4
        %s613 = scalar_lea.vmem %s9, %s612
        %p614 = pneg %p273
        %p615 = pneg %p270
        %p616 = scmp.lt.s32.totalorder %s28, 1
        %s617 = scalar_select %p616, %s28, 1
        %s618 = smul.addr %s617, 4
        %s619 = smul.addr %s618, 8
        %s620 = scalar_lea.vmem %s10, %s619
        %p621 = pneg %p299
        %p622 = pneg %p296
        %p623 = scmp.lt.s32.totalorder %s28, 1
        %s624 = scalar_select %p623, %s28, 1
        %s625 = smul.addr %s624, 4
        %s626 = smul.addr %s625, 8
        %s627 = scalar_lea.vmem %s11, %s626
        %p628 = pneg %p325
        %p629 = pneg %p322
        %p630 = scmp.lt.s32.totalorder %s28, 1
        %s631 = scalar_select %p630, %s28, 1
        %s632 = scalar_lea.vmem %s12, %s631
        %p633 = pneg %p351
        %p634 = pneg %p348
        %p635 = scmp.lt.s32.totalorder %s28, 1
        %s636 = scalar_select %p635, %s28, 1
        %s637 = scalar_lea.vmem %s13, %s636
        %p638 = pneg %p377
        %p639 = pneg %p374
        %p640 = pneg %p398
        %p641 = pneg %p395
        %p642 = pneg %p419
        %p643 = pneg %p416
        %p644 = pneg %p440
        %p645 = pneg %p437
        %p646 = scmp.lt.s32.totalorder %s28, 1
        %s647 = scalar_select %p646, %s28, 1
        %s648 = smul.addr %s647, 4
        %s649 = scalar_lea.vmem %s2, %s648
        %p650 = scmp.lt.s32.totalorder %s28, 1
        %s651 = scalar_select %p650, %s28, 1
        %s652 = smul.addr %s651, 2
        %s653 = smul.addr %s652, 4
        %s654 = scalar_lea.vmem %s3, %s653
        %p655 = scmp.lt.s32.totalorder %s28, 1
        %s656 = scalar_select %p655, %s28, 1
        %s657 = scalar_lea.vmem %s4, %s656
        %p658 = scmp.lt.s32.totalorder %s28, 1
        %s659 = scalar_select %p658, %s28, 1
        %s660 = smul.addr %s659, 8
        %s661 = smul.addr %s660, 4
        %s662 = scalar_lea.vmem %s5, %s661
        %p663 = scmp.lt.s32.totalorder %s28, 1
        %s664 = scalar_select %p663, %s28, 1
        %s665 = scalar_lea.vmem %s6, %s664
        %p666 = scmp.lt.s32.totalorder %s28, 1
        %s667 = scalar_select %p666, %s28, 1
        %s668 = smul.addr %s667, 2
        %s669 = smul.addr %s668, 8
        %s670 = scalar_lea.vmem %s7, %s669
        %p671 = scmp.lt.s32.totalorder %s28, 1
        %s672 = scalar_select %p671, %s28, 1
        %s673 = smul.addr %s672, 4
        %s674 = scalar_lea.vmem %s8, %s673
        %p675 = scmp.lt.s32.totalorder %s28, 1
        %s676 = scalar_select %p675, %s28, 1
        %s677 = smul.addr %s676, 4
        %s678 = scalar_lea.vmem %s9, %s677
        %p679 = scmp.lt.s32.totalorder %s28, 1
        %s680 = scalar_select %p679, %s28, 1
        %s681 = smul.addr %s680, 4
        %s682 = smul.addr %s681, 8
        %s683 = scalar_lea.vmem %s10, %s682
        %p684 = scmp.lt.s32.totalorder %s28, 1
        %s685 = scalar_select %p684, %s28, 1
        %s686 = smul.addr %s685, 4
        %s687 = smul.addr %s686, 8
        %s688 = scalar_lea.vmem %s11, %s687
        %p689 = scmp.lt.s32.totalorder %s28, 1
        %s690 = scalar_select %p689, %s28, 1
        %s691 = scalar_lea.vmem %s12, %s690
        %p692 = scmp.lt.s32.totalorder %s28, 1
        %s693 = scalar_select %p692, %s28, 1
        %s694 = scalar_lea.vmem %s13, %s693
        %v695 = vld [vmem:[%s0] sm:$0xff]
        %v696 = vld [vmem:[%s0 + $0x8] sm:$0x7]
        %v697 = vld [vmem:[%s0 + $0x10] sm:$0xff]
        %v698 = vld [vmem:[%s0 + $0x18] sm:$0x7]
        %v699 = vld [vmem:[%s0 + $0x20] sm:$0xff]
        %v700 = vld [vmem:[%s0 + $0x28] sm:$0x7]
        %v701 = vld [vmem:[%s0 + $0x30] sm:$0xff]
        %v702 = vld [vmem:[%s0 + $0x38] sm:$0x7]
        %v703 = vld [vmem:[%s0 + $0x40] sm:$0xff]
        %v704 = vld [vmem:[%s0 + $0x48] sm:$0x7]
        %v705 = vld [vmem:[%s0 + $0x50] sm:$0xff]
        %v706 = vld [vmem:[%s0 + $0x58] sm:$0x7]
        %v707 = vld [vmem:[%s0 + $0x60] sm:$0xff]
        %v708 = vld [vmem:[%s0 + $0x68] sm:$0x7]
        %v709 = vld [vmem:[%s0 + $0x70] sm:$0xff]
        %v710 = vld [vmem:[%s0 + $0x78] sm:$0x7]
        %v711 = vld [vmem:[%s654] sm:$0xf]
        %v712 = vld [vmem:[%s654 + $0x4] sm:$0xf]
        %v713 = vld [vmem:[%s657] sm:$0x1]
        %v714 = vld [vmem:[%s662] sm:$0xf]
        %v715 = vld [vmem:[%s662 + $0x4] sm:$0xf]
        %v716 = vld [vmem:[%s662 + $0x8] sm:$0xf]
        %v717 = vld [vmem:[%s662 + $0xc] sm:$0xf]
        %v718 = vld [vmem:[%s662 + $0x10] sm:$0xf]
        %v719 = vld [vmem:[%s662 + $0x14] sm:$0xf]
        %v720 = vld [vmem:[%s662 + $0x18] sm:$0xf]
        %v721 = vld [vmem:[%s662 + $0x1c] sm:$0xf]
        %v722 = vld [vmem:[%s665] sm:$0x1]
        %vm731 = vcmask 1046528
        %v732 = vrot.slane %v697, 1
        %v733 = vrot.slane %v698, 1
        %v734 = vsel %vm731, %v732, %v733
        %v735 = vrot.slane %v701, 1
        %v736 = vrot.slane %v702, 1
        %v737 = vsel %vm731, %v735, %v736
        %v738 = vrot.slane %v705, 1
        %v739 = vrot.slane %v706, 1
        %v740 = vsel %vm731, %v738, %v739
        %v741 = vrot.slane %v709, 1
        %v742 = vrot.slane %v710, 1
        %v743 = vsel %vm731, %v741, %v742
        %vm752 = vcmask 1045504
        %v753 = vrot.slane %v695, 2
        %v754 = vrot.slane %v696, 2
        %v755 = vsel %vm752, %v753, %v754
        %v756 = vrot.slane %v699, 2
        %v757 = vrot.slane %v700, 2
        %v758 = vsel %vm752, %v756, %v757
        %v759 = vrot.slane %v703, 2
        %v760 = vrot.slane %v704, 2
        %v761 = vsel %vm752, %v759, %v760
        %v762 = vrot.slane %v707, 2
        %v763 = vrot.slane %v708, 2
        %v764 = vsel %vm752, %v762, %v763
        %vm765 = vcmask 31744
        %v766 = vsel %vm765, %v755, 0
        %v768 = vsel %vm765, %v758, 0
        %v770 = vsel %vm765, %v761, 0
        %v772 = vsel %vm765, %v764, 0
        %vm774 = vcmask 1043456
        %v776 = vsel %vm774, %v712, 0
        %778 = vmatpush.msra.mxu0 0.0
        %779 = vmatpush.msra.mxu0 0.0
        %780 = vmatpush.msra.mxu0 0.0
        %781 = vmatpush.msra.mxu0 0.0
        %782 = vmatpush.msra.mxu0 0.0
        %783 = vmatpush.msra.mxu0 0.0
        %784 = vmatpush.msra.mxu0 0.0
        %785 = vmatpush.msra.mxu0 0.0
        %786 = vmatpush.msra.mxu0 0.0
        %787 = vmatpush.msra.mxu0 0.0
        %788 = vmatpush.msra.mxu0 0.0
        %789 = vmatpush.msra.mxu0 0.0
        %790 = vmatpush.msra.mxu0 0.0
        %791 = vmatpush.msra.mxu0 0.0
        %792 = vmatpush.msra.mxu0 0.0
        %793 = vmatpush.msra.mxu0 %v776
        %794 = vmatmul.f32.gmra.mxu0 %v766
        %v795 = vpop.f32.mrf.mxu0
        %v796 = vadd.f32 0.0, %v795
        %797 = vmatmul.f32.gmra.mxu0 %v768
        %v798 = vpop.f32.mrf.mxu0
        %v799 = vadd.f32 0.0, %v798
        %800 = vmatmul.f32.gmra.mxu0 %v770
        %v801 = vpop.f32.mrf.mxu0
        %v802 = vadd.f32 0.0, %v801
        %803 = vmatmul.f32.gmra.mxu0 %v772
        %v804 = vpop.f32.mrf.mxu0
        %v805 = vadd.f32 0.0, %v804
        %806 = vdwg.mxu0
        %v807 = vsel %vm765, %v734, 0
        %v809 = vsel %vm765, %v737, 0
        %v811 = vsel %vm765, %v740, 0
        %v813 = vsel %vm765, %v743, 0
        %v816 = vsel %vm774, %v711, 0
        %818 = vmatpush.msra.mxu0 0.0
        %819 = vmatpush.msra.mxu0 0.0
        %820 = vmatpush.msra.mxu0 0.0
        %821 = vmatpush.msra.mxu0 0.0
        %822 = vmatpush.msra.mxu0 0.0
        %823 = vmatpush.msra.mxu0 0.0
        %824 = vmatpush.msra.mxu0 0.0
        %825 = vmatpush.msra.mxu0 0.0
        %826 = vmatpush.msra.mxu0 0.0
        %827 = vmatpush.msra.mxu0 0.0
        %828 = vmatpush.msra.mxu0 0.0
        %829 = vmatpush.msra.mxu0 0.0
        %830 = vmatpush.msra.mxu0 0.0
        %831 = vmatpush.msra.mxu0 0.0
        %832 = vmatpush.msra.mxu0 0.0
        %833 = vmatpush.msra.mxu0 %v816
        %834 = vmatmul.f32.gmra.mxu0 %v807
        %v835 = vpop.f32.mrf.mxu0
        %v836 = vadd.f32 %v796, %v835
        %837 = vmatmul.f32.gmra.mxu0 %v809
        %v838 = vpop.f32.mrf.mxu0
        %v839 = vadd.f32 %v799, %v838
        %840 = vmatmul.f32.gmra.mxu0 %v811
        %v841 = vpop.f32.mrf.mxu0
        %v842 = vadd.f32 %v802, %v841
        %843 = vmatmul.f32.gmra.mxu0 %v813
        %v844 = vpop.f32.mrf.mxu0
        %v845 = vadd.f32 %v805, %v844
        %846 = vdwg.mxu0
        %v848 = vperm.slane %v713, 0
        %v850 = vadd.f32 %v836, %v848
        %v851 = vadd.f32 %v839, %v848
        %v852 = vadd.f32 %v842, %v848
        %v853 = vadd.f32 %v845, %v848
        %v854 = vmax.f32 %v850, 0.0
        %v855 = vmax.f32 %v851, 0.0
        %v856 = vmax.f32 %v852, 0.0
        %v857 = vmax.f32 %v853, 0.0
        %858 = vxpose.xlu0.b32.start [1/16] %v854, 128
        %859 = vxpose.xlu0.b32.cont [2/16] 0.0, 128
        %860 = vxpose.xlu0.b32.cont [3/16] 0.0, 128
        %861 = vxpose.xlu0.b32.cont [4/16] 0.0, 128
        %862 = vxpose.xlu0.b32.cont [5/16] 0.0, 128
        %863 = vxpose.xlu0.b32.cont [6/16] 0.0, 128
        %864 = vxpose.xlu0.b32.cont [7/16] 0.0, 128
        %865 = vxpose.xlu0.b32.cont [8/16] 0.0, 128
        %866 = vxpose.xlu0.b32.cont [9/16] 0.0, 128
        %867 = vxpose.xlu0.b32.cont [10/16] 0.0, 128
        %868 = vxpose.xlu0.b32.cont [11/16] 0.0, 128
        %869 = vxpose.xlu0.b32.cont [12/16] 0.0, 128
        %870 = vxpose.xlu0.b32.cont [13/16] 0.0, 128
        %871 = vxpose.xlu0.b32.cont [14/16] 0.0, 128
        %872 = vxpose.xlu0.b32.cont [15/16] 0.0, 128
        %873 = vxpose.xlu0.b32.end [16/16] 0.0, 128
        %v874 = vpop.trf.xlu0
        %v875 = vpop.trf.xlu0
        %v876 = vpop.trf.xlu0
        %v877 = vpop.trf.xlu0
        %v878 = vpop.trf.xlu0
        %v879 = vpop.trf.xlu0
        %v880 = vpop.trf.xlu0
        %v881 = vpop.trf.xlu0
        %v882 = vpop.trf.xlu0
        %v883 = vpop.trf.xlu0
        %v884 = vpop.trf.xlu0
        %v885 = vpop.trf.xlu0
        %v886 = vpop.trf.xlu0
        %v887 = vpop.trf.xlu0
        %v888 = vpop.trf.xlu0
        %v889 = vpop.trf.xlu0
        %890 = vxpose.xlu0.b32.start [1/16] %v855, 128
        %891 = vxpose.xlu0.b32.cont [2/16] 0.0, 128
        %892 = vxpose.xlu0.b32.cont [3/16] 0.0, 128
        %893 = vxpose.xlu0.b32.cont [4/16] 0.0, 128
        %894 = vxpose.xlu0.b32.cont [5/16] 0.0, 128
        %895 = vxpose.xlu0.b32.cont [6/16] 0.0, 128
        %896 = vxpose.xlu0.b32.cont [7/16] 0.0, 128
        %897 = vxpose.xlu0.b32.cont [8/16] 0.0, 128
        %898 = vxpose.xlu0.b32.cont [9/16] 0.0, 128
        %899 = vxpose.xlu0.b32.cont [10/16] 0.0, 128
        %900 = vxpose.xlu0.b32.cont [11/16] 0.0, 128
        %901 = vxpose.xlu0.b32.cont [12/16] 0.0, 128
        %902 = vxpose.xlu0.b32.cont [13/16] 0.0, 128
        %903 = vxpose.xlu0.b32.cont [14/16] 0.0, 128
        %904 = vxpose.xlu0.b32.cont [15/16] 0.0, 128
        %905 = vxpose.xlu0.b32.end [16/16] 0.0, 128
        %v906 = vpop.trf.xlu0
        %v907 = vpop.trf.xlu0
        %v908 = vpop.trf.xlu0
        %v909 = vpop.trf.xlu0
        %v910 = vpop.trf.xlu0
        %v911 = vpop.trf.xlu0
        %v912 = vpop.trf.xlu0
        %v913 = vpop.trf.xlu0
        %v914 = vpop.trf.xlu0
        %v915 = vpop.trf.xlu0
        %v916 = vpop.trf.xlu0
        %v917 = vpop.trf.xlu0
        %v918 = vpop.trf.xlu0
        %v919 = vpop.trf.xlu0
        %v920 = vpop.trf.xlu0
        %v921 = vpop.trf.xlu0
        %922 = vxpose.xlu0.b32.start [1/16] %v856, 128
        %923 = vxpose.xlu0.b32.cont [2/16] 0.0, 128
        %924 = vxpose.xlu0.b32.cont [3/16] 0.0, 128
        %925 = vxpose.xlu0.b32.cont [4/16] 0.0, 128
        %926 = vxpose.xlu0.b32.cont [5/16] 0.0, 128
        %927 = vxpose.xlu0.b32.cont [6/16] 0.0, 128
        %928 = vxpose.xlu0.b32.cont [7/16] 0.0, 128
        %929 = vxpose.xlu0.b32.cont [8/16] 0.0, 128
        %930 = vxpose.xlu0.b32.cont [9/16] 0.0, 128
        %931 = vxpose.xlu0.b32.cont [10/16] 0.0, 128
        %932 = vxpose.xlu0.b32.cont [11/16] 0.0, 128
        %933 = vxpose.xlu0.b32.cont [12/16] 0.0, 128
        %934 = vxpose.xlu0.b32.cont [13/16] 0.0, 128
        %935 = vxpose.xlu0.b32.cont [14/16] 0.0, 128
        %936 = vxpose.xlu0.b32.cont [15/16] 0.0, 128
        %937 = vxpose.xlu0.b32.end [16/16] 0.0, 128
        %v938 = vpop.trf.xlu0
        %v939 = vpop.trf.xlu0
        %v940 = vpop.trf.xlu0
        %v941 = vpop.trf.xlu0
        %v942 = vpop.trf.xlu0
        %v943 = vpop.trf.xlu0
        %v944 = vpop.trf.xlu0
        %v945 = vpop.trf.xlu0
        %v946 = vpop.trf.xlu0
        %v947 = vpop.trf.xlu0
        %v948 = vpop.trf.xlu0
        %v949 = vpop.trf.xlu0
        %v950 = vpop.trf.xlu0
        %v951 = vpop.trf.xlu0
        %v952 = vpop.trf.xlu0
        %v953 = vpop.trf.xlu0
        %954 = vxpose.xlu0.b32.start [1/16] %v857, 128
        %955 = vxpose.xlu0.b32.cont [2/16] 0.0, 128
        %956 = vxpose.xlu0.b32.cont [3/16] 0.0, 128
        %957 = vxpose.xlu0.b32.cont [4/16] 0.0, 128
        %958 = vxpose.xlu0.b32.cont [5/16] 0.0, 128
        %959 = vxpose.xlu0.b32.cont [6/16] 0.0, 128
        %960 = vxpose.xlu0.b32.cont [7/16] 0.0, 128
        %961 = vxpose.xlu0.b32.cont [8/16] 0.0, 128
        %962 = vxpose.xlu0.b32.cont [9/16] 0.0, 128
        %963 = vxpose.xlu0.b32.cont [10/16] 0.0, 128
        %964 = vxpose.xlu0.b32.cont [11/16] 0.0, 128
        %965 = vxpose.xlu0.b32.cont [12/16] 0.0, 128
        %966 = vxpose.xlu0.b32.cont [13/16] 0.0, 128
        %967 = vxpose.xlu0.b32.cont [14/16] 0.0, 128
        %968 = vxpose.xlu0.b32.cont [15/16] 0.0, 128
        %969 = vxpose.xlu0.b32.end [16/16] 0.0, 128
        %v970 = vpop.trf.xlu0
        %v971 = vpop.trf.xlu0
        %v972 = vpop.trf.xlu0
        %v973 = vpop.trf.xlu0
        %v974 = vpop.trf.xlu0
        %v975 = vpop.trf.xlu0
        %v976 = vpop.trf.xlu0
        %v977 = vpop.trf.xlu0
        %v978 = vpop.trf.xlu0
        %v979 = vpop.trf.xlu0
        %v980 = vpop.trf.xlu0
        %v981 = vpop.trf.xlu0
        %v982 = vpop.trf.xlu0
        %v983 = vpop.trf.xlu0
        %v984 = vpop.trf.xlu0
        %v985 = vpop.trf.xlu0
        %v986 = vsel %vm765, %v697, 0
        %v988 = vsel %vm765, %v701, 0
        %v990 = vsel %vm765, %v705, 0
        %v992 = vsel %vm765, %v709, 0
        %v995 = vsel %vm774, %v715, 0
        %997 = vmatpush.msra.mxu0 0.0
        %998 = vmatpush.msra.mxu0 0.0
        %999 = vmatpush.msra.mxu0 0.0
        %1000 = vmatpush.msra.mxu0 0.0
        %1001 = vmatpush.msra.mxu0 0.0
        %1002 = vmatpush.msra.mxu0 0.0
        %1003 = vmatpush.msra.mxu0 0.0
        %1004 = vmatpush.msra.mxu0 0.0
        %1005 = vmatpush.msra.mxu0 0.0
        %1006 = vmatpush.msra.mxu0 0.0
        %1007 = vmatpush.msra.mxu0 0.0
        %1008 = vmatpush.msra.mxu0 0.0
        %1009 = vmatpush.msra.mxu0 0.0
        %1010 = vmatpush.msra.mxu0 0.0
        %1011 = vmatpush.msra.mxu0 0.0
        %1012 = vmatpush.msra.mxu0 %v995
        %1013 = vmatmul.f32.gmra.mxu0 %v986
        %v1014 = vpop.f32.mrf.mxu0
        %v1015 = vadd.f32 0.0, %v1014
        %1016 = vmatmul.f32.gmra.mxu0 %v988
        %v1017 = vpop.f32.mrf.mxu0
        %v1018 = vadd.f32 0.0, %v1017
        %1019 = vmatmul.f32.gmra.mxu0 %v990
        %v1020 = vpop.f32.mrf.mxu0
        %v1021 = vadd.f32 0.0, %v1020
        %1022 = vmatmul.f32.gmra.mxu0 %v992
        %v1023 = vpop.f32.mrf.mxu0
        %v1024 = vadd.f32 0.0, %v1023
        %1025 = vdwg.mxu0
        %v1026 = vsel %vm765, %v695, 0
        %v1028 = vsel %vm765, %v699, 0
        %v1030 = vsel %vm765, %v703, 0
        %v1032 = vsel %vm765, %v707, 0
        %v1035 = vsel %vm774, %v714, 0
        %1037 = vmatpush.msra.mxu0 0.0
        %1038 = vmatpush.msra.mxu0 0.0
        %1039 = vmatpush.msra.mxu0 0.0
        %1040 = vmatpush.msra.mxu0 0.0
        %1041 = vmatpush.msra.mxu0 0.0
        %1042 = vmatpush.msra.mxu0 0.0
        %1043 = vmatpush.msra.mxu0 0.0
        %1044 = vmatpush.msra.mxu0 0.0
        %1045 = vmatpush.msra.mxu0 0.0
        %1046 = vmatpush.msra.mxu0 0.0
        %1047 = vmatpush.msra.mxu0 0.0
        %1048 = vmatpush.msra.mxu0 0.0
        %1049 = vmatpush.msra.mxu0 0.0
        %1050 = vmatpush.msra.mxu0 0.0
        %1051 = vmatpush.msra.mxu0 0.0
        %1052 = vmatpush.msra.mxu0 %v1035
        %1053 = vmatmul.f32.gmra.mxu0 %v1026
        %v1054 = vpop.f32.mrf.mxu0
        %v1055 = vadd.f32 %v1015, %v1054
        %1056 = vmatmul.f32.gmra.mxu0 %v1028
        %v1057 = vpop.f32.mrf.mxu0
        %v1058 = vadd.f32 %v1018, %v1057
        %1059 = vmatmul.f32.gmra.mxu0 %v1030
        %v1060 = vpop.f32.mrf.mxu0
        %v1061 = vadd.f32 %v1021, %v1060
        %1062 = vmatmul.f32.gmra.mxu0 %v1032
        %v1063 = vpop.f32.mrf.mxu0
        %v1064 = vadd.f32 %v1024, %v1063
        %1065 = vdwg.mxu0
        %v1066 = vrot.slane %v695, 1
        %v1067 = vrot.slane %v696, 1
        %v1068 = vsel %vm731, %v1066, %v1067
        %v1069 = vrot.slane %v699, 1
        %v1070 = vrot.slane %v700, 1
        %v1071 = vsel %vm731, %v1069, %v1070
        %v1072 = vrot.slane %v703, 1
        %v1073 = vrot.slane %v704, 1
        %v1074 = vsel %vm731, %v1072, %v1073
        %v1075 = vrot.slane %v707, 1
        %v1076 = vrot.slane %v708, 1
        %v1077 = vsel %vm731, %v1075, %v1076
        %v1078 = vsel %vm765, %v1068, 0
        %v1080 = vsel %vm765, %v1071, 0
        %v1082 = vsel %vm765, %v1074, 0
        %v1084 = vsel %vm765, %v1077, 0
        %v1087 = vsel %vm774, %v716, 0
        %1089 = vmatpush.msra.mxu0 0.0
        %1090 = vmatpush.msra.mxu0 0.0
        %1091 = vmatpush.msra.mxu0 0.0
        %1092 = vmatpush.msra.mxu0 0.0
        %1093 = vmatpush.msra.mxu0 0.0
        %1094 = vmatpush.msra.mxu0 0.0
        %1095 = vmatpush.msra.mxu0 0.0
        %1096 = vmatpush.msra.mxu0 0.0
        %1097 = vmatpush.msra.mxu0 0.0
        %1098 = vmatpush.msra.mxu0 0.0
        %1099 = vmatpush.msra.mxu0 0.0
        %1100 = vmatpush.msra.mxu0 0.0
        %1101 = vmatpush.msra.mxu0 0.0
        %1102 = vmatpush.msra.mxu0 0.0
        %1103 = vmatpush.msra.mxu0 0.0
        %1104 = vmatpush.msra.mxu0 %v1087
        %1105 = vmatmul.f32.gmra.mxu0 %v1078
        %v1106 = vpop.f32.mrf.mxu0
        %v1107 = vadd.f32 0.0, %v1106
        %1108 = vmatmul.f32.gmra.mxu0 %v1080
        %v1109 = vpop.f32.mrf.mxu0
        %v1110 = vadd.f32 0.0, %v1109
        %1111 = vmatmul.f32.gmra.mxu0 %v1082
        %v1112 = vpop.f32.mrf.mxu0
        %v1113 = vadd.f32 0.0, %v1112
        %1114 = vmatmul.f32.gmra.mxu0 %v1084
        %v1115 = vpop.f32.mrf.mxu0
        %v1116 = vadd.f32 0.0, %v1115
        %1117 = vdwg.mxu0
        %v1118 = vadd.f32 %v1055, %v1107
        %v1119 = vadd.f32 %v1058, %v1110
        %v1120 = vadd.f32 %v1061, %v1113
        %v1121 = vadd.f32 %v1064, %v1116
        %v1123 = vsel %vm774, %v717, 0
        %1125 = vmatpush.msra.mxu0 0.0
        %1126 = vmatpush.msra.mxu0 0.0
        %1127 = vmatpush.msra.mxu0 0.0
        %1128 = vmatpush.msra.mxu0 0.0
        %1129 = vmatpush.msra.mxu0 0.0
        %1130 = vmatpush.msra.mxu0 0.0
        %1131 = vmatpush.msra.mxu0 0.0
        %1132 = vmatpush.msra.mxu0 0.0
        %1133 = vmatpush.msra.mxu0 0.0
        %1134 = vmatpush.msra.mxu0 0.0
        %1135 = vmatpush.msra.mxu0 0.0
        %1136 = vmatpush.msra.mxu0 0.0
        %1137 = vmatpush.msra.mxu0 0.0
        %1138 = vmatpush.msra.mxu0 0.0
        %1139 = vmatpush.msra.mxu0 0.0
        %1140 = vmatpush.msra.mxu0 %v1123
        %1141 = vmatmul.f32.gmra.mxu0 %v807
        %v1142 = vpop.f32.mrf.mxu0
        %v1143 = vadd.f32 0.0, %v1142
        %1144 = vmatmul.f32.gmra.mxu0 %v809
        %v1145 = vpop.f32.mrf.mxu0
        %v1146 = vadd.f32 0.0, %v1145
        %1147 = vmatmul.f32.gmra.mxu0 %v811
        %v1148 = vpop.f32.mrf.mxu0
        %v1149 = vadd.f32 0.0, %v1148
        %1150 = vmatmul.f32.gmra.mxu0 %v813
        %v1151 = vpop.f32.mrf.mxu0
        %v1152 = vadd.f32 0.0, %v1151
        %1153 = vdwg.mxu0
        %v1154 = vadd.f32 %v1118, %v1143
        %v1155 = vadd.f32 %v1119, %v1146
        %v1156 = vadd.f32 %v1120, %v1149
        %v1157 = vadd.f32 %v1121, %v1152
        %v1159 = vsel %vm774, %v718, 0
        %1161 = vmatpush.msra.mxu0 0.0
        %1162 = vmatpush.msra.mxu0 0.0
        %1163 = vmatpush.msra.mxu0 0.0
        %1164 = vmatpush.msra.mxu0 0.0
        %1165 = vmatpush.msra.mxu0 0.0
        %1166 = vmatpush.msra.mxu0 0.0
        %1167 = vmatpush.msra.mxu0 0.0
        %1168 = vmatpush.msra.mxu0 0.0
        %1169 = vmatpush.msra.mxu0 0.0
        %1170 = vmatpush.msra.mxu0 0.0
        %1171 = vmatpush.msra.mxu0 0.0
        %1172 = vmatpush.msra.mxu0 0.0
        %1173 = vmatpush.msra.mxu0 0.0
        %1174 = vmatpush.msra.mxu0 0.0
        %1175 = vmatpush.msra.mxu0 0.0
        %1176 = vmatpush.msra.mxu0 %v1159
        %1177 = vmatmul.f32.gmra.mxu0 %v766
        %v1178 = vpop.f32.mrf.mxu0
        %v1179 = vadd.f32 0.0, %v1178
        %1180 = vmatmul.f32.gmra.mxu0 %v768
        %v1181 = vpop.f32.mrf.mxu0
        %v1182 = vadd.f32 0.0, %v1181
        %1183 = vmatmul.f32.gmra.mxu0 %v770
        %v1184 = vpop.f32.mrf.mxu0
        %v1185 = vadd.f32 0.0, %v1184
        %1186 = vmatmul.f32.gmra.mxu0 %v772
        %v1187 = vpop.f32.mrf.mxu0
        %v1188 = vadd.f32 0.0, %v1187
        %1189 = vdwg.mxu0
        %v1190 = vadd.f32 %v1154, %v1179
        %v1191 = vadd.f32 %v1155, %v1182
        %v1192 = vadd.f32 %v1156, %v1185
        %v1193 = vadd.f32 %v1157, %v1188
        %v1194 = vrot.slane %v697, 2
        %v1195 = vrot.slane %v698, 2
        %v1196 = vsel %vm752, %v1194, %v1195
        %v1197 = vrot.slane %v701, 2
        %v1198 = vrot.slane %v702, 2
        %v1199 = vsel %vm752, %v1197, %v1198
        %v1200 = vrot.slane %v705, 2
        %v1201 = vrot.slane %v706, 2
        %v1202 = vsel %vm752, %v1200, %v1201
        %v1203 = vrot.slane %v709, 2
        %v1204 = vrot.slane %v710, 2
        %v1205 = vsel %vm752, %v1203, %v1204
        %v1206 = vsel %vm765, %v1196, 0
        %v1208 = vsel %vm765, %v1199, 0
        %v1210 = vsel %vm765, %v1202, 0
        %v1212 = vsel %vm765, %v1205, 0
        %v1215 = vsel %vm774, %v719, 0
        %1217 = vmatpush.msra.mxu0 0.0
        %1218 = vmatpush.msra.mxu0 0.0
        %1219 = vmatpush.msra.mxu0 0.0
        %1220 = vmatpush.msra.mxu0 0.0
        %1221 = vmatpush.msra.mxu0 0.0
        %1222 = vmatpush.msra.mxu0 0.0
        %1223 = vmatpush.msra.mxu0 0.0
        %1224 = vmatpush.msra.mxu0 0.0
        %1225 = vmatpush.msra.mxu0 0.0
        %1226 = vmatpush.msra.mxu0 0.0
        %1227 = vmatpush.msra.mxu0 0.0
        %1228 = vmatpush.msra.mxu0 0.0
        %1229 = vmatpush.msra.mxu0 0.0
        %1230 = vmatpush.msra.mxu0 0.0
        %1231 = vmatpush.msra.mxu0 0.0
        %1232 = vmatpush.msra.mxu0 %v1215
        %1233 = vmatmul.f32.gmra.mxu0 %v1206
        %v1234 = vpop.f32.mrf.mxu0
        %v1235 = vadd.f32 0.0, %v1234
        %1236 = vmatmul.f32.gmra.mxu0 %v1208
        %v1237 = vpop.f32.mrf.mxu0
        %v1238 = vadd.f32 0.0, %v1237
        %1239 = vmatmul.f32.gmra.mxu0 %v1210
        %v1240 = vpop.f32.mrf.mxu0
        %v1241 = vadd.f32 0.0, %v1240
        %1242 = vmatmul.f32.gmra.mxu0 %v1212
        %v1243 = vpop.f32.mrf.mxu0
        %v1244 = vadd.f32 0.0, %v1243
        %1245 = vdwg.mxu0
        %v1246 = vadd.f32 %v1190, %v1235
        %v1247 = vadd.f32 %v1191, %v1238
        %v1248 = vadd.f32 %v1192, %v1241
        %v1249 = vadd.f32 %v1193, %v1244
        %vm1250 = vcmask 1044480
        %v1251 = vrot.slane %v695, 3
        %v1252 = vrot.slane %v696, 3
        %v1253 = vsel %vm1250, %v1251, %v1252
        %v1254 = vrot.slane %v699, 3
        %v1255 = vrot.slane %v700, 3
        %v1256 = vsel %vm1250, %v1254, %v1255
        %v1257 = vrot.slane %v703, 3
        %v1258 = vrot.slane %v704, 3
        %v1259 = vsel %vm1250, %v1257, %v1258
        %v1260 = vrot.slane %v707, 3
        %v1261 = vrot.slane %v708, 3
        %v1262 = vsel %vm1250, %v1260, %v1261
        %v1263 = vsel %vm765, %v1253, 0
        %v1265 = vsel %vm765, %v1256, 0
        %v1267 = vsel %vm765, %v1259, 0
        %v1269 = vsel %vm765, %v1262, 0
        %v1272 = vsel %vm774, %v720, 0
        %1274 = vmatpush.msra.mxu0 0.0
        %1275 = vmatpush.msra.mxu0 0.0
        %1276 = vmatpush.msra.mxu0 0.0
        %1277 = vmatpush.msra.mxu0 0.0
        %1278 = vmatpush.msra.mxu0 0.0
        %1279 = vmatpush.msra.mxu0 0.0
        %1280 = vmatpush.msra.mxu0 0.0
        %1281 = vmatpush.msra.mxu0 0.0
        %1282 = vmatpush.msra.mxu0 0.0
        %1283 = vmatpush.msra.mxu0 0.0
        %1284 = vmatpush.msra.mxu0 0.0
        %1285 = vmatpush.msra.mxu0 0.0
        %1286 = vmatpush.msra.mxu0 0.0
        %1287 = vmatpush.msra.mxu0 0.0
        %1288 = vmatpush.msra.mxu0 0.0
        %1289 = vmatpush.msra.mxu0 %v1272
        %1290 = vmatmul.f32.gmra.mxu0 %v1263
        %v1291 = vpop.f32.mrf.mxu0
        %v1292 = vadd.f32 0.0, %v1291
        %1293 = vmatmul.f32.gmra.mxu0 %v1265
        %v1294 = vpop.f32.mrf.mxu0
        %v1295 = vadd.f32 0.0, %v1294
        %1296 = vmatmul.f32.gmra.mxu0 %v1267
        %v1297 = vpop.f32.mrf.mxu0
        %v1298 = vadd.f32 0.0, %v1297
        %1299 = vmatmul.f32.gmra.mxu0 %v1269
        %v1300 = vpop.f32.mrf.mxu0
        %v1301 = vadd.f32 0.0, %v1300
        %1302 = vdwg.mxu0
        %v1303 = vadd.f32 %v1246, %v1292
        %v1304 = vadd.f32 %v1247, %v1295
        %v1305 = vadd.f32 %v1248, %v1298
        %v1306 = vadd.f32 %v1249, %v1301
        %v1307 = vrot.slane %v697, 3
        %v1308 = vrot.slane %v698, 3
        %v1309 = vsel %vm1250, %v1307, %v1308
        %v1310 = vrot.slane %v701, 3
        %v1311 = vrot.slane %v702, 3
        %v1312 = vsel %vm1250, %v1310, %v1311
        %v1313 = vrot.slane %v705, 3
        %v1314 = vrot.slane %v706, 3
        %v1315 = vsel %vm1250, %v1313, %v1314
        %v1316 = vrot.slane %v709, 3
        %v1317 = vrot.slane %v710, 3
        %v1318 = vsel %vm1250, %v1316, %v1317
        %v1319 = vsel %vm765, %v1309, 0
        %v1321 = vsel %vm765, %v1312, 0
        %v1323 = vsel %vm765, %v1315, 0
        %v1325 = vsel %vm765, %v1318, 0
        %v1328 = vsel %vm774, %v721, 0
        %1330 = vmatpush.msra.mxu0 0.0
        %1331 = vmatpush.msra.mxu0 0.0
        %1332 = vmatpush.msra.mxu0 0.0
        %1333 = vmatpush.msra.mxu0 0.0
        %1334 = vmatpush.msra.mxu0 0.0
        %1335 = vmatpush.msra.mxu0 0.0
        %1336 = vmatpush.msra.mxu0 0.0
        %1337 = vmatpush.msra.mxu0 0.0
        %1338 = vmatpush.msra.mxu0 0.0
        %1339 = vmatpush.msra.mxu0 0.0
        %1340 = vmatpush.msra.mxu0 0.0
        %1341 = vmatpush.msra.mxu0 0.0
        %1342 = vmatpush.msra.mxu0 0.0
        %1343 = vmatpush.msra.mxu0 0.0
        %1344 = vmatpush.msra.mxu0 0.0
        %1345 = vmatpush.msra.mxu0 %v1328
        %1346 = vmatmul.f32.gmra.mxu0 %v1319
        %v1347 = vpop.f32.mrf.mxu0
        %v1348 = vadd.f32 0.0, %v1347
        %1349 = vmatmul.f32.gmra.mxu0 %v1321
        %v1350 = vpop.f32.mrf.mxu0
        %v1351 = vadd.f32 0.0, %v1350
        %1352 = vmatmul.f32.gmra.mxu0 %v1323
        %v1353 = vpop.f32.mrf.mxu0
        %v1354 = vadd.f32 0.0, %v1353
        %1355 = vmatmul.f32.gmra.mxu0 %v1325
        %v1356 = vpop.f32.mrf.mxu0
        %v1357 = vadd.f32 0.0, %v1356
        %1358 = vdwg.mxu0
        %v1359 = vadd.f32 %v1303, %v1348
        %v1360 = vadd.f32 %v1304, %v1351
        %v1361 = vadd.f32 %v1305, %v1354
        %v1362 = vadd.f32 %v1306, %v1357
        %v1364 = vperm.slane %v722, 0
        %v1366 = vadd.f32 %v1359, %v1364
        %v1367 = vadd.f32 %v1360, %v1364
        %v1368 = vadd.f32 %v1361, %v1364
        %v1369 = vadd.f32 %v1362, %v1364
        %v1370 = vmax.f32 %v1366, 0.0
        %v1371 = vmax.f32 %v1367, 0.0
        %v1372 = vmax.f32 %v1368, 0.0
        %v1373 = vmax.f32 %v1369, 0.0
        %1374 = vxpose.xlu0.b32.start [1/16] %v1370, 128
        %1375 = vxpose.xlu0.b32.cont [2/16] 0.0, 128
        %1376 = vxpose.xlu0.b32.cont [3/16] 0.0, 128
        %1377 = vxpose.xlu0.b32.cont [4/16] 0.0, 128
        %1378 = vxpose.xlu0.b32.cont [5/16] 0.0, 128
        %1379 = vxpose.xlu0.b32.cont [6/16] 0.0, 128
        %1380 = vxpose.xlu0.b32.cont [7/16] 0.0, 128
        %1381 = vxpose.xlu0.b32.cont [8/16] 0.0, 128
        %1382 = vxpose.xlu0.b32.cont [9/16] 0.0, 128
        %1383 = vxpose.xlu0.b32.cont [10/16] 0.0, 128
        %1384 = vxpose.xlu0.b32.cont [11/16] 0.0, 128
        %1385 = vxpose.xlu0.b32.cont [12/16] 0.0, 128
        %1386 = vxpose.xlu0.b32.cont [13/16] 0.0, 128
        %1387 = vxpose.xlu0.b32.cont [14/16] 0.0, 128
        %1388 = vxpose.xlu0.b32.cont [15/16] 0.0, 128
        %1389 = vxpose.xlu0.b32.end [16/16] 0.0, 128
        %v1390 = vpop.trf.xlu0
        %v1391 = vpop.trf.xlu0
        %v1392 = vpop.trf.xlu0
        %v1393 = vpop.trf.xlu0
        %v1394 = vpop.trf.xlu0
        %v1395 = vpop.trf.xlu0
        %v1396 = vpop.trf.xlu0
        %v1397 = vpop.trf.xlu0
        %v1398 = vpop.trf.xlu0
        %v1399 = vpop.trf.xlu0
        %v1400 = vpop.trf.xlu0
        %v1401 = vpop.trf.xlu0
        %v1402 = vpop.trf.xlu0
        %v1403 = vpop.trf.xlu0
        %v1404 = vpop.trf.xlu0
        %v1405 = vpop.trf.xlu0
        %1406 = vxpose.xlu0.b32.start [1/16] %v1371, 128
        %1407 = vxpose.xlu0.b32.cont [2/16] 0.0, 128
        %1408 = vxpose.xlu0.b32.cont [3/16] 0.0, 128
        %1409 = vxpose.xlu0.b32.cont [4/16] 0.0, 128
        %1410 = vxpose.xlu0.b32.cont [5/16] 0.0, 128
        %1411 = vxpose.xlu0.b32.cont [6/16] 0.0, 128
        %1412 = vxpose.xlu0.b32.cont [7/16] 0.0, 128
        %1413 = vxpose.xlu0.b32.cont [8/16] 0.0, 128
        %1414 = vxpose.xlu0.b32.cont [9/16] 0.0, 128
        %1415 = vxpose.xlu0.b32.cont [10/16] 0.0, 128
        %1416 = vxpose.xlu0.b32.cont [11/16] 0.0, 128
        %1417 = vxpose.xlu0.b32.cont [12/16] 0.0, 128
        %1418 = vxpose.xlu0.b32.cont [13/16] 0.0, 128
        %1419 = vxpose.xlu0.b32.cont [14/16] 0.0, 128
        %1420 = vxpose.xlu0.b32.cont [15/16] 0.0, 128
        %1421 = vxpose.xlu0.b32.end [16/16] 0.0, 128
        %v1422 = vpop.trf.xlu0
        %v1423 = vpop.trf.xlu0
        %v1424 = vpop.trf.xlu0
        %v1425 = vpop.trf.xlu0
        %v1426 = vpop.trf.xlu0
        %v1427 = vpop.trf.xlu0
        %v1428 = vpop.trf.xlu0
        %v1429 = vpop.trf.xlu0
        %v1430 = vpop.trf.xlu0
        %v1431 = vpop.trf.xlu0
        %v1432 = vpop.trf.xlu0
        %v1433 = vpop.trf.xlu0
        %v1434 = vpop.trf.xlu0
        %v1435 = vpop.trf.xlu0
        %v1436 = vpop.trf.xlu0
        %v1437 = vpop.trf.xlu0
        %1438 = vxpose.xlu0.b32.start [1/16] %v1372, 128
        %1439 = vxpose.xlu0.b32.cont [2/16] 0.0, 128
        %1440 = vxpose.xlu0.b32.cont [3/16] 0.0, 128
        %1441 = vxpose.xlu0.b32.cont [4/16] 0.0, 128
        %1442 = vxpose.xlu0.b32.cont [5/16] 0.0, 128
        %1443 = vxpose.xlu0.b32.cont [6/16] 0.0, 128
        %1444 = vxpose.xlu0.b32.cont [7/16] 0.0, 128
        %1445 = vxpose.xlu0.b32.cont [8/16] 0.0, 128
        %1446 = vxpose.xlu0.b32.cont [9/16] 0.0, 128
        %1447 = vxpose.xlu0.b32.cont [10/16] 0.0, 128
        %1448 = vxpose.xlu0.b32.cont [11/16] 0.0, 128
        %1449 = vxpose.xlu0.b32.cont [12/16] 0.0, 128
        %1450 = vxpose.xlu0.b32.cont [13/16] 0.0, 128
        %1451 = vxpose.xlu0.b32.cont [14/16] 0.0, 128
        %1452 = vxpose.xlu0.b32.cont [15/16] 0.0, 128
        %1453 = vxpose.xlu0.b32.end [16/16] 0.0, 128
        %v1454 = vpop.trf.xlu0
        %v1455 = vpop.trf.xlu0
        %v1456 = vpop.trf.xlu0
        %v1457 = vpop.trf.xlu0
        %v1458 = vpop.trf.xlu0
        %v1459 = vpop.trf.xlu0
        %v1460 = vpop.trf.xlu0
        %v1461 = vpop.trf.xlu0
        %v1462 = vpop.trf.xlu0
        %v1463 = vpop.trf.xlu0
        %v1464 = vpop.trf.xlu0
        %v1465 = vpop.trf.xlu0
        %v1466 = vpop.trf.xlu0
        %v1467 = vpop.trf.xlu0
        %v1468 = vpop.trf.xlu0
        %v1469 = vpop.trf.xlu0
        %1470 = vxpose.xlu0.b32.start [1/16] %v1373, 128
        %1471 = vxpose.xlu0.b32.cont [2/16] 0.0, 128
        %1472 = vxpose.xlu0.b32.cont [3/16] 0.0, 128
        %1473 = vxpose.xlu0.b32.cont [4/16] 0.0, 128
        %1474 = vxpose.xlu0.b32.cont [5/16] 0.0, 128
        %1475 = vxpose.xlu0.b32.cont [6/16] 0.0, 128
        %1476 = vxpose.xlu0.b32.cont [7/16] 0.0, 128
        %1477 = vxpose.xlu0.b32.cont [8/16] 0.0, 128
        %1478 = vxpose.xlu0.b32.cont [9/16] 0.0, 128
        %1479 = vxpose.xlu0.b32.cont [10/16] 0.0, 128
        %1480 = vxpose.xlu0.b32.cont [11/16] 0.0, 128
        %1481 = vxpose.xlu0.b32.cont [12/16] 0.0, 128
        %1482 = vxpose.xlu0.b32.cont [13/16] 0.0, 128
        %1483 = vxpose.xlu0.b32.cont [14/16] 0.0, 128
        %1484 = vxpose.xlu0.b32.cont [15/16] 0.0, 128
        %1485 = vxpose.xlu0.b32.end [16/16] 0.0, 128
        %v1486 = vpop.trf.xlu0
        %v1487 = vpop.trf.xlu0
        %v1488 = vpop.trf.xlu0
        %v1489 = vpop.trf.xlu0
        %v1490 = vpop.trf.xlu0
        %v1491 = vpop.trf.xlu0
        %v1492 = vpop.trf.xlu0
        %v1493 = vpop.trf.xlu0
        %v1494 = vpop.trf.xlu0
        %v1495 = vpop.trf.xlu0
        %v1496 = vpop.trf.xlu0
        %v1497 = vpop.trf.xlu0
        %v1498 = vpop.trf.xlu0
        %v1499 = vpop.trf.xlu0
        %v1500 = vpop.trf.xlu0
        %v1501 = vpop.trf.xlu0
        %v1502 = vld [vmem:[%s670] sm:$0xff]
        %v1503 = vld [vmem:[%s670 + $0x8] sm:$0xff]
        %1508 = vst [vmem:[#allocation1] ss:$2 sm:$0xff] %v1390
        %s1509 = scalar_lea.vmem [#allocation1], 1
        %1510 = vst [vmem:[%s1509] ss:$2 sm:$0xff] %v1422
        %s1511 = scalar_lea.vmem [#allocation1], 16
        %1512 = vst [vmem:[%s1511] ss:$2 sm:$0xff] %v1454
        %s1513 = scalar_lea.vmem [#allocation1], 17
        %1514 = vst [vmem:[%s1513] ss:$2 sm:$0xff] %v1486
        %v1515 = vld.sshfl [vmem:[#allocation1] sm:$0xff pattern:$0x75316420]
        %v1516 = vld.sshfl [vmem:[#allocation1 + $0x10] sm:$0xff pattern:$0x75316420]
        %vm1517 = vcmask 64512
        %v1518 = vsel %vm1517, %v1515, 0
        %v1520 = vsel %vm1517, %v1516, 0
        %1522 = vmatpush.msra.mxu0 0.0
        %1523 = vmatpush.msra.mxu0 0.0
        %1524 = vmatpush.msra.mxu0 0.0
        %1525 = vmatpush.msra.mxu0 0.0
        %1526 = vmatpush.msra.mxu0 0.0
        %1527 = vmatpush.msra.mxu0 0.0
        %1528 = vmatpush.msra.mxu0 0.0
        %1529 = vmatpush.msra.mxu0 0.0
        %1530 = vmatpush.msra.mxu0 0.0
        %1531 = vmatpush.msra.mxu0 0.0
        %1532 = vmatpush.msra.mxu0 0.0
        %1533 = vmatpush.msra.mxu0 0.0
        %1534 = vmatpush.msra.mxu0 0.0
        %1535 = vmatpush.msra.mxu0 0.0
        %1536 = vmatpush.msra.mxu0 0.0
        %1537 = vmatpush.msra.mxu0 %v1503
        %1538 = vmatmul.f32.gmra.mxu0 %v1518
        %v1539 = vpop.f32.mrf.mxu0
        %v1540 = vadd.f32 0.0, %v1539
        %1541 = vmatmul.f32.gmra.mxu0 %v1520
        %v1542 = vpop.f32.mrf.mxu0
        %v1543 = vadd.f32 0.0, %v1542
        %1544 = vdwg.mxu0
        %1549 = vst [vmem:[#allocation1] ss:$2 sm:$0xff] %v874
        %s1550 = scalar_lea.vmem [#allocation1], 1
        %1551 = vst [vmem:[%s1550] ss:$2 sm:$0xff] %v906
        %s1552 = scalar_lea.vmem [#allocation1], 16
        %1553 = vst [vmem:[%s1552] ss:$2 sm:$0xff] %v938
        %s1554 = scalar_lea.vmem [#allocation1], 17
        %1555 = vst [vmem:[%s1554] ss:$2 sm:$0xff] %v970
        %v1556 = vld.sshfl [vmem:[#allocation1] sm:$0xff pattern:$0x75316420]
        %v1557 = vld.sshfl [vmem:[#allocation1 + $0x10] sm:$0xff pattern:$0x75316420]
        %v1558 = vsel %vm1517, %v1556, 0
        %v1560 = vsel %vm1517, %v1557, 0
        %1562 = vmatpush.msra.mxu0 0.0
        %1563 = vmatpush.msra.mxu0 0.0
        %1564 = vmatpush.msra.mxu0 0.0
        %1565 = vmatpush.msra.mxu0 0.0
        %1566 = vmatpush.msra.mxu0 0.0
        %1567 = vmatpush.msra.mxu0 0.0
        %1568 = vmatpush.msra.mxu0 0.0
        %1569 = vmatpush.msra.mxu0 0.0
        %1570 = vmatpush.msra.mxu0 0.0
        %1571 = vmatpush.msra.mxu0 0.0
        %1572 = vmatpush.msra.mxu0 0.0
        %1573 = vmatpush.msra.mxu0 0.0
        %1574 = vmatpush.msra.mxu0 0.0
        %1575 = vmatpush.msra.mxu0 0.0
        %1576 = vmatpush.msra.mxu0 0.0
        %1577 = vmatpush.msra.mxu0 %v1502
        %1578 = vmatmul.f32.gmra.mxu0 %v1558
        %v1579 = vpop.f32.mrf.mxu0
        %v1580 = vadd.f32 %v1540, %v1579
        %1581 = vmatmul.f32.gmra.mxu0 %v1560
        %v1582 = vpop.f32.mrf.mxu0
        %v1583 = vadd.f32 %v1543, %v1582
        %1584 = vdwg.mxu0
        %v1587 = vrot.slane %v1580, 4
        %v1588 = vrot.slane %v1583, 4
        %v1591 = vld [vmem:[%s674] sm:$0xf]
        %1593 = vset.pattern.permute.xlu0 0
        %1594 = vperm.xlu0 %1593, %v1591
        %v1595 = vpop.permute.xlu0 %1594
        %v1597 = vmul.f32 %v1580, %v1595
        %v1598 = vmul.f32 %v1587, %v1595
        %v1599 = vmul.f32 %v1583, %v1595
        %v1600 = vmul.f32 %v1588, %v1595
        %v1601 = vld [vmem:[%s678] sm:$0xf]
        %v1602 = vadd.f32 %v1597, %v1601
        %v1603 = vadd.f32 %v1598, %v1601
        %v1604 = vadd.f32 %v1599, %v1601
        %v1605 = vadd.f32 %v1600, %v1601
        %v1606 = vld [vmem:[%s649] sm:$0xf]
        %v1607 = vld [vmem:[%s1] sm:$0xf]
        %v1608 = vld [vmem:[%s1 + $0x4] sm:$0xf]
        %v1609 = vld [vmem:[%s1 + $0x8] sm:$0xf]
        %v1610 = vld [vmem:[%s1 + $0xc] sm:$0xf]
        %v1612 = vsel %vm765, %v1606, 0
        %v1615 = vsel %vm774, %v1607, 0
        %1617 = vmatpush.msra.mxu0 0.0
        %1618 = vmatpush.msra.mxu0 0.0
        %1619 = vmatpush.msra.mxu0 0.0
        %1620 = vmatpush.msra.mxu0 0.0
        %1621 = vmatpush.msra.mxu0 0.0
        %1622 = vmatpush.msra.mxu0 0.0
        %1623 = vmatpush.msra.mxu0 0.0
        %1624 = vmatpush.msra.mxu0 0.0
        %1625 = vmatpush.msra.mxu0 0.0
        %1626 = vmatpush.msra.mxu0 0.0
        %1627 = vmatpush.msra.mxu0 0.0
        %1628 = vmatpush.msra.mxu0 0.0
        %1629 = vmatpush.msra.mxu0 0.0
        %1630 = vmatpush.msra.mxu0 0.0
        %1631 = vmatpush.msra.mxu0 0.0
        %1632 = vmatpush.msra.mxu0 %v1615
        %1633 = vmatmul.f32.gmra.mxu0 %v1612
        %v1634 = vpop.f32.mrf.mxu0
        %v1635 = vadd.f32 0.0, %v1634
        %1636 = vdwg.mxu0
        %v1638 = vsel %vm774, %v1608, 0
        %1640 = vmatpush.msra.mxu0 0.0
        %1641 = vmatpush.msra.mxu0 0.0
        %1642 = vmatpush.msra.mxu0 0.0
        %1643 = vmatpush.msra.mxu0 0.0
        %1644 = vmatpush.msra.mxu0 0.0
        %1645 = vmatpush.msra.mxu0 0.0
        %1646 = vmatpush.msra.mxu0 0.0
        %1647 = vmatpush.msra.mxu0 0.0
        %1648 = vmatpush.msra.mxu0 0.0
        %1649 = vmatpush.msra.mxu0 0.0
        %1650 = vmatpush.msra.mxu0 0.0
        %1651 = vmatpush.msra.mxu0 0.0
        %1652 = vmatpush.msra.mxu0 0.0
        %1653 = vmatpush.msra.mxu0 0.0
        %1654 = vmatpush.msra.mxu0 0.0
        %1655 = vmatpush.msra.mxu0 %v1638
        %1656 = vmatmul.f32.gmra.mxu0 %v1612
        %v1657 = vpop.f32.mrf.mxu0
        %v1658 = vadd.f32 0.0, %v1657
        %1659 = vdwg.mxu0
        %v1661 = vsel %vm774, %v1609, 0
        %1663 = vmatpush.msra.mxu0 0.0
        %1664 = vmatpush.msra.mxu0 0.0
        %1665 = vmatpush.msra.mxu0 0.0
        %1666 = vmatpush.msra.mxu0 0.0
        %1667 = vmatpush.msra.mxu0 0.0
        %1668 = vmatpush.msra.mxu0 0.0
        %1669 = vmatpush.msra.mxu0 0.0
        %1670 = vmatpush.msra.mxu0 0.0
        %1671 = vmatpush.msra.mxu0 0.0
        %1672 = vmatpush.msra.mxu0 0.0
        %1673 = vmatpush.msra.mxu0 0.0
        %1674 = vmatpush.msra.mxu0 0.0
        %1675 = vmatpush.msra.mxu0 0.0
        %1676 = vmatpush.msra.mxu0 0.0
        %1677 = vmatpush.msra.mxu0 0.0
        %1678 = vmatpush.msra.mxu0 %v1661
        %1679 = vmatmul.f32.gmra.mxu0 %v1612
        %v1680 = vpop.f32.mrf.mxu0
        %v1681 = vadd.f32 0.0, %v1680
        %1682 = vdwg.mxu0
        %v1684 = vsel %vm774, %v1610, 0
        %1686 = vmatpush.msra.mxu0 0.0
        %1687 = vmatpush.msra.mxu0 0.0
        %1688 = vmatpush.msra.mxu0 0.0
        %1689 = vmatpush.msra.mxu0 0.0
        %1690 = vmatpush.msra.mxu0 0.0
        %1691 = vmatpush.msra.mxu0 0.0
        %1692 = vmatpush.msra.mxu0 0.0
        %1693 = vmatpush.msra.mxu0 0.0
        %1694 = vmatpush.msra.mxu0 0.0
        %1695 = vmatpush.msra.mxu0 0.0
        %1696 = vmatpush.msra.mxu0 0.0
        %1697 = vmatpush.msra.mxu0 0.0
        %1698 = vmatpush.msra.mxu0 0.0
        %1699 = vmatpush.msra.mxu0 0.0
        %1700 = vmatpush.msra.mxu0 0.0
        %1701 = vmatpush.msra.mxu0 %v1684
        %1702 = vmatmul.f32.gmra.mxu0 %v1612
        %v1703 = vpop.f32.mrf.mxu0
        %v1704 = vadd.f32 0.0, %v1703
        %1705 = vdwg.mxu0
        %vm1706 = vcmp.gt.f32.partialorder %v1635, 0.0
        %vm1707 = vcmp.gt.f32.partialorder %v1658, 0.0
        %vm1708 = vcmp.gt.f32.partialorder %v1681, 0.0
        %vm1709 = vcmp.gt.f32.partialorder %v1704, 0.0
        %v1710 = vsel %vm1706, %v1635, 0.0
        %v1711 = vsel %vm1707, %v1658, 0.0
        %v1712 = vsel %vm1708, %v1681, 0.0
        %v1713 = vsel %vm1709, %v1704, 0.0
        %v1714 = vlaneseq
        %v1715 = vshrl.u32 %v1714, 7
        %v1716 = vlaneseq
        %v1717 = vand.u32 %v1716, 127
        %vm1718 = vcmp.eq.s32.totalorder %v1715, %v1717
        %vm1719 = vmxor %vm1706, 1
        %vm1720 = vmxor %vm1707, 1
        %vm1721 = vmxor %vm1708, 1
        %vm1722 = vmxor %vm1709, 1
        %v1723 = vsel %vm1718, 1, 0
        %vm1724 = vcmp.eq.s32.totalorder %v1723, 1
        %vm1725 = vmand %vm1724, %vm1719
        %vm1726 = vmand %vm1724, %vm1720
        %vm1727 = vmand %vm1724, %vm1721
        %vm1728 = vmand %vm1724, %vm1722
        %v1729 = vsel %vm1725, 1.0, %v1710
        %v1730 = vsel %vm1726, 1.0, %v1711
        %v1731 = vsel %vm1727, 1.0, %v1712
        %v1732 = vsel %vm1728, 1.0, %v1713
        %vm1733 = vcmask 27648
        %v1734 = vsel %vm1733, %v1729, 0.0
        %v1735 = vrot.slane %v1734, 4
        %v1736 = vadd.f32 %v1734, %v1735
        %v1737 = vrot.slane %v1736, 2
        %v1738 = vadd.f32 %v1736, %v1737
        %v1739 = vrot.slane %v1738, 1
        %v1740 = vadd.f32 %v1738, %v1739
        %v1741 = vsel %vm1733, %v1730, 0.0
        %v1742 = vrot.slane %v1741, 4
        %v1743 = vadd.f32 %v1741, %v1742
        %v1744 = vrot.slane %v1743, 2
        %v1745 = vadd.f32 %v1743, %v1744
        %v1746 = vrot.slane %v1745, 1
        %v1747 = vadd.f32 %v1745, %v1746
        %v1748 = vsel %vm1733, %v1731, 0.0
        %v1749 = vrot.slane %v1748, 4
        %v1750 = vadd.f32 %v1748, %v1749
        %v1751 = vrot.slane %v1750, 2
        %v1752 = vadd.f32 %v1750, %v1751
        %v1753 = vrot.slane %v1752, 1
        %v1754 = vadd.f32 %v1752, %v1753
        %v1755 = vsel %vm1733, %v1732, 0.0
        %v1756 = vrot.slane %v1755, 4
        %v1757 = vadd.f32 %v1755, %v1756
        %v1758 = vrot.slane %v1757, 2
        %v1759 = vadd.f32 %v1757, %v1758
        %v1760 = vrot.slane %v1759, 1
        %v1761 = vadd.f32 %v1759, %v1760
        %vm1762 = vcmp.gt.f32.partialorder %v1740, 0.0
        %vm1763 = vcmp.gt.f32.partialorder %v1747, 0.0
        %vm1764 = vcmp.gt.f32.partialorder %v1754, 0.0
        %vm1765 = vcmp.gt.f32.partialorder %v1761, 0.0
        %v1766 = vsel %vm1762, %v1740, 1.0
        %v1767 = vsel %vm1763, %v1747, 1.0
        %v1768 = vsel %vm1764, %v1754, 1.0
        %v1769 = vsel %vm1765, %v1761, 1.0
        %v1770 = vrsqrt.pop %v1766
        %v1771 = vmul.f32 %v1770, %v1766
        %v1772 = vmul.f32 %v1771, %v1770
        %v1773 = vmul.f32 0.5, %v1772
        %v1774 = vsub.f32 1.5, %v1773
        %v1775 = vmul.f32 %v1770, %v1774
        %vm1776 = vweird.f32 %v1766
        %vm1777 = vweird.f32 %v1770
        %vm1778 = vmor %vm1776, %vm1777
        %v1779 = vsel %vm1778, %v1770, %v1775
        %v1780 = vrsqrt.pop %v1767
        %v1781 = vmul.f32 %v1780, %v1767
        %v1782 = vmul.f32 %v1781, %v1780
        %v1783 = vmul.f32 0.5, %v1782
        %v1784 = vsub.f32 1.5, %v1783
        %v1785 = vmul.f32 %v1780, %v1784
        %vm1786 = vweird.f32 %v1767
        %vm1787 = vweird.f32 %v1780
        %vm1788 = vmor %vm1786, %vm1787
        %v1789 = vsel %vm1788, %v1780, %v1785
        %v1790 = vrsqrt.pop %v1768
        %v1791 = vmul.f32 %v1790, %v1768
        %v1792 = vmul.f32 %v1791, %v1790
        %v1793 = vmul.f32 0.5, %v1792
        %v1794 = vsub.f32 1.5, %v1793
        %v1795 = vmul.f32 %v1790, %v1794
        %vm1796 = vweird.f32 %v1768
        %vm1797 = vweird.f32 %v1790
        %vm1798 = vmor %vm1796, %vm1797
        %v1799 = vsel %vm1798, %v1790, %v1795
        %v1800 = vrsqrt.pop %v1769
        %v1801 = vmul.f32 %v1800, %v1769
        %v1802 = vmul.f32 %v1801, %v1800
        %v1803 = vmul.f32 0.5, %v1802
        %v1804 = vsub.f32 1.5, %v1803
        %v1805 = vmul.f32 %v1800, %v1804
        %vm1806 = vweird.f32 %v1769
        %vm1807 = vweird.f32 %v1800
        %vm1808 = vmor %vm1806, %vm1807
        %v1809 = vsel %vm1808, %v1800, %v1805
        %v1810 = vsel %vm1762, %v1779, 0.0
        %v1811 = vsel %vm1763, %v1789, 0.0
        %v1812 = vsel %vm1764, %v1799, 0.0
        %v1813 = vsel %vm1765, %v1809, 0.0
        %v1814 = vlaneseq
        %v1815 = vshrl.u32 %v1814, 7
        %1817 = vset.pattern.permute.xlu0 %v1815
        %1818 = vperm.xlu0 %1817, %v1810
        %v1819 = vpop.permute.xlu0 %1818
        %v1820 = vlaneseq
        %v1821 = vshrl.u32 %v1820, 7
        %1823 = vset.pattern.permute.xlu0 %v1821
        %1824 = vperm.xlu0 %1823, %v1811
        %v1825 = vpop.permute.xlu0 %1824
        %v1826 = vlaneseq
        %v1827 = vshrl.u32 %v1826, 7
        %1829 = vset.pattern.permute.xlu0 %v1827
        %1830 = vperm.xlu0 %1829, %v1812
        %v1831 = vpop.permute.xlu0 %1830
        %v1832 = vlaneseq
        %v1833 = vshrl.u32 %v1832, 7
        %1835 = vset.pattern.permute.xlu0 %v1833
        %1836 = vperm.xlu0 %1835, %v1813
        %v1837 = vpop.permute.xlu0 %1836
        %v1838 = vmul.f32 %v1729, %v1819
        %v1839 = vmul.f32 %v1730, %v1825
        %v1840 = vmul.f32 %v1731, %v1831
        %v1841 = vmul.f32 %v1732, %v1837
        %v1842 = vmul.f32 %v1838, %v1810
        %v1843 = vmul.f32 %v1839, %v1811
        %v1844 = vmul.f32 %v1840, %v1812
        %v1845 = vmul.f32 %v1841, %v1813
        %1846 = vxpose.xlu0.b32.start [1/16] %v1842, 128
        %1847 = vxpose.xlu0.b32.cont [2/16] 0.0, 128
        %1848 = vxpose.xlu0.b32.cont [3/16] 0.0, 128
        %1849 = vxpose.xlu0.b32.cont [4/16] 0.0, 128
        %1850 = vxpose.xlu0.b32.cont [5/16] 0.0, 128
        %1851 = vxpose.xlu0.b32.cont [6/16] 0.0, 128
        %1852 = vxpose.xlu0.b32.cont [7/16] 0.0, 128
        %1853 = vxpose.xlu0.b32.cont [8/16] 0.0, 128
        %1854 = vxpose.xlu0.b32.cont [9/16] 0.0, 128
        %1855 = vxpose.xlu0.b32.cont [10/16] 0.0, 128
        %1856 = vxpose.xlu0.b32.cont [11/16] 0.0, 128
        %1857 = vxpose.xlu0.b32.cont [12/16] 0.0, 128
        %1858 = vxpose.xlu0.b32.cont [13/16] 0.0, 128
        %1859 = vxpose.xlu0.b32.cont [14/16] 0.0, 128
        %1860 = vxpose.xlu0.b32.cont [15/16] 0.0, 128
        %1861 = vxpose.xlu0.b32.end [16/16] 0.0, 128
        %v1862 = vpop.trf.xlu0
        %v1863 = vpop.trf.xlu0
        %v1864 = vpop.trf.xlu0
        %v1865 = vpop.trf.xlu0
        %v1866 = vpop.trf.xlu0
        %v1867 = vpop.trf.xlu0
        %v1868 = vpop.trf.xlu0
        %v1869 = vpop.trf.xlu0
        %v1870 = vpop.trf.xlu0
        %v1871 = vpop.trf.xlu0
        %v1872 = vpop.trf.xlu0
        %v1873 = vpop.trf.xlu0
        %v1874 = vpop.trf.xlu0
        %v1875 = vpop.trf.xlu0
        %v1876 = vpop.trf.xlu0
        %v1877 = vpop.trf.xlu0
        %1878 = vxpose.xlu0.b32.start [1/16] %v1843, 128
        %1879 = vxpose.xlu0.b32.cont [2/16] 0.0, 128
        %1880 = vxpose.xlu0.b32.cont [3/16] 0.0, 128
        %1881 = vxpose.xlu0.b32.cont [4/16] 0.0, 128
        %1882 = vxpose.xlu0.b32.cont [5/16] 0.0, 128
        %1883 = vxpose.xlu0.b32.cont [6/16] 0.0, 128
        %1884 = vxpose.xlu0.b32.cont [7/16] 0.0, 128
        %1885 = vxpose.xlu0.b32.cont [8/16] 0.0, 128
        %1886 = vxpose.xlu0.b32.cont [9/16] 0.0, 128
        %1887 = vxpose.xlu0.b32.cont [10/16] 0.0, 128
        %1888 = vxpose.xlu0.b32.cont [11/16] 0.0, 128
        %1889 = vxpose.xlu0.b32.cont [12/16] 0.0, 128
        %1890 = vxpose.xlu0.b32.cont [13/16] 0.0, 128
        %1891 = vxpose.xlu0.b32.cont [14/16] 0.0, 128
        %1892 = vxpose.xlu0.b32.cont [15/16] 0.0, 128
        %1893 = vxpose.xlu0.b32.end [16/16] 0.0, 128
        %v1894 = vpop.trf.xlu0
        %v1895 = vpop.trf.xlu0
        %v1896 = vpop.trf.xlu0
        %v1897 = vpop.trf.xlu0
        %v1898 = vpop.trf.xlu0
        %v1899 = vpop.trf.xlu0
        %v1900 = vpop.trf.xlu0
        %v1901 = vpop.trf.xlu0
        %v1902 = vpop.trf.xlu0
        %v1903 = vpop.trf.xlu0
        %v1904 = vpop.trf.xlu0
        %v1905 = vpop.trf.xlu0
        %v1906 = vpop.trf.xlu0
        %v1907 = vpop.trf.xlu0
        %v1908 = vpop.trf.xlu0
        %v1909 = vpop.trf.xlu0
        %1910 = vxpose.xlu0.b32.start [1/16] %v1844, 128
        %1911 = vxpose.xlu0.b32.cont [2/16] 0.0, 128
        %1912 = vxpose.xlu0.b32.cont [3/16] 0.0, 128
        %1913 = vxpose.xlu0.b32.cont [4/16] 0.0, 128
        %1914 = vxpose.xlu0.b32.cont [5/16] 0.0, 128
        %1915 = vxpose.xlu0.b32.cont [6/16] 0.0, 128
        %1916 = vxpose.xlu0.b32.cont [7/16] 0.0, 128
        %1917 = vxpose.xlu0.b32.cont [8/16] 0.0, 128
        %1918 = vxpose.xlu0.b32.cont [9/16] 0.0, 128
        %1919 = vxpose.xlu0.b32.cont [10/16] 0.0, 128
        %1920 = vxpose.xlu0.b32.cont [11/16] 0.0, 128
        %1921 = vxpose.xlu0.b32.cont [12/16] 0.0, 128
        %1922 = vxpose.xlu0.b32.cont [13/16] 0.0, 128
        %1923 = vxpose.xlu0.b32.cont [14/16] 0.0, 128
        %1924 = vxpose.xlu0.b32.cont [15/16] 0.0, 128
        %1925 = vxpose.xlu0.b32.end [16/16] 0.0, 128
        %v1926 = vpop.trf.xlu0
        %v1927 = vpop.trf.xlu0
        %v1928 = vpop.trf.xlu0
        %v1929 = vpop.trf.xlu0
        %v1930 = vpop.trf.xlu0
        %v1931 = vpop.trf.xlu0
        %v1932 = vpop.trf.xlu0
        %v1933 = vpop.trf.xlu0
        %v1934 = vpop.trf.xlu0
        %v1935 = vpop.trf.xlu0
        %v1936 = vpop.trf.xlu0
        %v1937 = vpop.trf.xlu0
        %v1938 = vpop.trf.xlu0
        %v1939 = vpop.trf.xlu0
        %v1940 = vpop.trf.xlu0
        %v1941 = vpop.trf.xlu0
        %1942 = vxpose.xlu0.b32.start [1/16] %v1845, 128
        %1943 = vxpose.xlu0.b32.cont [2/16] 0.0, 128
        %1944 = vxpose.xlu0.b32.cont [3/16] 0.0, 128
        %1945 = vxpose.xlu0.b32.cont [4/16] 0.0, 128
        %1946 = vxpose.xlu0.b32.cont [5/16] 0.0, 128
        %1947 = vxpose.xlu0.b32.cont [6/16] 0.0, 128
        %1948 = vxpose.xlu0.b32.cont [7/16] 0.0, 128
        %1949 = vxpose.xlu0.b32.cont [8/16] 0.0, 128
        %1950 = vxpose.xlu0.b32.cont [9/16] 0.0, 128
        %1951 = vxpose.xlu0.b32.cont [10/16] 0.0, 128
        %1952 = vxpose.xlu0.b32.cont [11/16] 0.0, 128
        %1953 = vxpose.xlu0.b32.cont [12/16] 0.0, 128
        %1954 = vxpose.xlu0.b32.cont [13/16] 0.0, 128
        %1955 = vxpose.xlu0.b32.cont [14/16] 0.0, 128
        %1956 = vxpose.xlu0.b32.cont [15/16] 0.0, 128
        %1957 = vxpose.xlu0.b32.end [16/16] 0.0, 128
        %v1958 = vpop.trf.xlu0
        %v1959 = vpop.trf.xlu0
        %v1960 = vpop.trf.xlu0
        %v1961 = vpop.trf.xlu0
        %v1962 = vpop.trf.xlu0
        %v1963 = vpop.trf.xlu0
        %v1964 = vpop.trf.xlu0
        %v1965 = vpop.trf.xlu0
        %v1966 = vpop.trf.xlu0
        %v1967 = vpop.trf.xlu0
        %v1968 = vpop.trf.xlu0
        %v1969 = vpop.trf.xlu0
        %v1970 = vpop.trf.xlu0
        %v1971 = vpop.trf.xlu0
        %v1972 = vpop.trf.xlu0
        %v1973 = vpop.trf.xlu0
        %v1974 = vld [vmem:[%s691] sm:$0x1]
        %v1976 = vperm.slane %v1974, 0
        %v1979 = vsel %vm765, %v1862, 0
        %v1982 = vsel %vm774, %v1602, 0
        %1984 = vmatpush.msra.mxu0 0.0
        %1985 = vmatpush.msra.mxu0 0.0
        %1986 = vmatpush.msra.mxu0 0.0
        %1987 = vmatpush.msra.mxu0 0.0
        %1988 = vmatpush.msra.mxu0 0.0
        %1989 = vmatpush.msra.mxu0 0.0
        %1990 = vmatpush.msra.mxu0 0.0
        %1991 = vmatpush.msra.mxu0 0.0
        %1992 = vmatpush.msra.mxu0 0.0
        %1993 = vmatpush.msra.mxu0 0.0
        %1994 = vmatpush.msra.mxu0 0.0
        %1995 = vmatpush.msra.mxu0 0.0
        %1996 = vmatpush.msra.mxu0 0.0
        %1997 = vmatpush.msra.mxu0 0.0
        %1998 = vmatpush.msra.mxu0 0.0
        %1999 = vmatpush.msra.mxu0 %v1982
        %2000 = vmatmul.f32.gmra.mxu0 %v1979
        %v2001 = vpop.f32.mrf.mxu0
        %v2002 = vadd.f32 %v1976, %v2001
        %2003 = vdwg.mxu0
        %v2005 = vsel %vm765, %v1894, 0
        %v2008 = vsel %vm774, %v1603, 0
        %2010 = vmatpush.msra.mxu0 0.0
        %2011 = vmatpush.msra.mxu0 0.0
        %2012 = vmatpush.msra.mxu0 0.0
        %2013 = vmatpush.msra.mxu0 0.0
        %2014 = vmatpush.msra.mxu0 0.0
        %2015 = vmatpush.msra.mxu0 0.0
        %2016 = vmatpush.msra.mxu0 0.0
        %2017 = vmatpush.msra.mxu0 0.0
        %2018 = vmatpush.msra.mxu0 0.0
        %2019 = vmatpush.msra.mxu0 0.0
        %2020 = vmatpush.msra.mxu0 0.0
        %2021 = vmatpush.msra.mxu0 0.0
        %2022 = vmatpush.msra.mxu0 0.0
        %2023 = vmatpush.msra.mxu0 0.0
        %2024 = vmatpush.msra.mxu0 0.0
        %2025 = vmatpush.msra.mxu0 %v2008
        %2026 = vmatmul.f32.gmra.mxu0 %v2005
        %v2027 = vpop.f32.mrf.mxu0
        %v2028 = vadd.f32 %v1976, %v2027
        %2029 = vdwg.mxu0
        %v2031 = vsel %vm765, %v1926, 0
        %v2034 = vsel %vm774, %v1604, 0
        %2036 = vmatpush.msra.mxu0 0.0
        %2037 = vmatpush.msra.mxu0 0.0
        %2038 = vmatpush.msra.mxu0 0.0
        %2039 = vmatpush.msra.mxu0 0.0
        %2040 = vmatpush.msra.mxu0 0.0
        %2041 = vmatpush.msra.mxu0 0.0
        %2042 = vmatpush.msra.mxu0 0.0
        %2043 = vmatpush.msra.mxu0 0.0
        %2044 = vmatpush.msra.mxu0 0.0
        %2045 = vmatpush.msra.mxu0 0.0
        %2046 = vmatpush.msra.mxu0 0.0
        %2047 = vmatpush.msra.mxu0 0.0
        %2048 = vmatpush.msra.mxu0 0.0
        %2049 = vmatpush.msra.mxu0 0.0
        %2050 = vmatpush.msra.mxu0 0.0
        %2051 = vmatpush.msra.mxu0 %v2034
        %2052 = vmatmul.f32.gmra.mxu0 %v2031
        %v2053 = vpop.f32.mrf.mxu0
        %v2054 = vadd.f32 %v1976, %v2053
        %2055 = vdwg.mxu0
        %v2057 = vsel %vm765, %v1958, 0
        %v2060 = vsel %vm774, %v1605, 0
        %2062 = vmatpush.msra.mxu0 0.0
        %2063 = vmatpush.msra.mxu0 0.0
        %2064 = vmatpush.msra.mxu0 0.0
        %2065 = vmatpush.msra.mxu0 0.0
        %2066 = vmatpush.msra.mxu0 0.0
        %2067 = vmatpush.msra.mxu0 0.0
        %2068 = vmatpush.msra.mxu0 0.0
        %2069 = vmatpush.msra.mxu0 0.0
        %2070 = vmatpush.msra.mxu0 0.0
        %2071 = vmatpush.msra.mxu0 0.0
        %2072 = vmatpush.msra.mxu0 0.0
        %2073 = vmatpush.msra.mxu0 0.0
        %2074 = vmatpush.msra.mxu0 0.0
        %2075 = vmatpush.msra.mxu0 0.0
        %2076 = vmatpush.msra.mxu0 0.0
        %2077 = vmatpush.msra.mxu0 %v2060
        %2078 = vmatmul.f32.gmra.mxu0 %v2057
        %v2079 = vpop.f32.mrf.mxu0
        %v2080 = vadd.f32 %v1976, %v2079
        %2081 = vdwg.mxu0
        %v2082 = vld [vmem:[%s694] sm:$0x1]
        %v2083 = vld [vmem:[%s683] sm:$0xff]
        %v2084 = vld [vmem:[%s683 + $0x8] sm:$0xff]
        %v2085 = vld [vmem:[%s683 + $0x10] sm:$0xff]
        %v2086 = vld [vmem:[%s683 + $0x18] sm:$0xff]
        %v2087 = vld [vmem:[%s688] sm:$0xff]
        %v2088 = vld [vmem:[%s688 + $0x8] sm:$0xff]
        %v2089 = vld [vmem:[%s688 + $0x10] sm:$0xff]
        %v2090 = vld [vmem:[%s688 + $0x18] sm:$0xff]
        %vm2091 = vcmask 261120
        %v2093 = vsel %vm2091, 0.0, 0
        %2095 = vmatpush.msra.mxu0 0.0
        %2096 = vmatpush.msra.mxu0 0.0
        %2097 = vmatpush.msra.mxu0 0.0
        %2098 = vmatpush.msra.mxu0 0.0
        %2099 = vmatpush.msra.mxu0 0.0
        %2100 = vmatpush.msra.mxu0 0.0
        %2101 = vmatpush.msra.mxu0 0.0
        %2102 = vmatpush.msra.mxu0 0.0
        %2103 = vmatpush.msra.mxu0 0.0
        %2104 = vmatpush.msra.mxu0 0.0
        %2105 = vmatpush.msra.mxu0 0.0
        %2106 = vmatpush.msra.mxu0 0.0
        %2107 = vmatpush.msra.mxu0 %v2086
        %2108 = vmatpush.msra.mxu0 %v2085
        %2109 = vmatpush.msra.mxu0 %v2084
        %2110 = vmatpush.msra.mxu0 %v2083
        %2111 = vmatmul.f32.gmra.mxu0 %v2093
        %v2112 = vpop.f32.mrf.mxu0
        %v2113 = vadd.f32 0.0, %v2112
        %2114 = vdwg.mxu0
        %v2116 = vrot.slane %v2113, 4
        %v2118 = vadd.f32 %v2002, %v2113
        %v2119 = vadd.f32 %v2054, %v2116
        %v2120 = vxor.u32 %v2118, 2147483648
        %v2121 = vxor.u32 %v2119, 2147483648
        %v2122 = vmul.f32 %v2120, 1.442695
        %v2123 = vpow.pop %v2122
        %v2124 = vmul.f32 %v2121, 1.442695
        %v2125 = vpow.pop %v2124
        %v2126 = vadd.f32 %v2123, 1.0
        %v2127 = vadd.f32 %v2125, 1.0
        %v2128 = vrcp.pop %v2126
        %v2129 = vmul.f32 %v2126, %v2128
        %v2130 = vsub.f32 1.0, %v2129
        %v2131 = vmul.f32 %v2128, %v2130
        %v2132 = vadd.f32 %v2128, %v2131
        %vm2133 = vweird.f32 %v2126
        %vm2134 = vweird.f32 %v2128
        %vm2135 = vmor %vm2133, %vm2134
        %v2136 = vsel %vm2135, %v2128, %v2132
        %v2137 = vand.u32 2147483647, %v2126
        %vm2138 = vcmp.eq.f32.partialorder %v2137, 8.507059e+37
        %v2139 = vand.u32 %v2126, 2147483648
        %v2140 = vor.u32 1.1754944e-38, %v2139
        %v2141 = vsel %vm2138, %v2140, %v2136
        %v2142 = vmul.f32 1.0, %v2141
        %v2143 = vrcp.pop %v2127
        %v2144 = vmul.f32 %v2127, %v2143
        %v2145 = vsub.f32 1.0, %v2144
        %v2146 = vmul.f32 %v2143, %v2145
        %v2147 = vadd.f32 %v2143, %v2146
        %vm2148 = vweird.f32 %v2127
        %vm2149 = vweird.f32 %v2143
        %vm2150 = vmor %vm2148, %vm2149
        %v2151 = vsel %vm2150, %v2143, %v2147
        %v2152 = vand.u32 2147483647, %v2127
        %vm2153 = vcmp.eq.f32.partialorder %v2152, 8.507059e+37
        %v2154 = vand.u32 %v2127, 2147483648
        %v2155 = vor.u32 1.1754944e-38, %v2154
        %v2156 = vsel %vm2153, %v2155, %v2151
        %v2157 = vmul.f32 1.0, %v2156
        %v2158 = vmul.f32 %v2142, 0.0
        %v2159 = vmul.f32 %v2157, 0.0
        %2162 = vst [vmem:[#allocation1] ss:$2 sm:$0xff] %v2158
        %s2163 = scalar_lea.vmem [#allocation1], 1
        %2164 = vst [vmem:[%s2163] ss:$2 sm:$0xff] %v2159
        %v2165 = vld.sshfl [vmem:[#allocation1] sm:$0xff pattern:$0x75316420]
        %2166 = vrot.lane.b32.xlu0 %v2165, 96
        %v2167 = vpop.permute.xlu0 %2166
        %v2168 = vsel %vm2091, %v2167, 0
        %2170 = vmatpush.msra.mxu0 0.0
        %2171 = vmatpush.msra.mxu0 0.0
        %2172 = vmatpush.msra.mxu0 0.0
        %2173 = vmatpush.msra.mxu0 0.0
        %2174 = vmatpush.msra.mxu0 0.0
        %2175 = vmatpush.msra.mxu0 0.0
        %2176 = vmatpush.msra.mxu0 0.0
        %2177 = vmatpush.msra.mxu0 0.0
        %2178 = vmatpush.msra.mxu0 0.0
        %2179 = vmatpush.msra.mxu0 0.0
        %2180 = vmatpush.msra.mxu0 0.0
        %2181 = vmatpush.msra.mxu0 0.0
        %2182 = vmatpush.msra.mxu0 %v2090
        %2183 = vmatpush.msra.mxu0 %v2089
        %2184 = vmatpush.msra.mxu0 %v2088
        %2185 = vmatpush.msra.mxu0 %v2087
        %2186 = vmatmul.f32.gmra.mxu0 %v2168
        %v2187 = vpop.f32.mrf.mxu0
        %v2188 = vadd.f32 0.0, %v2187
        %2189 = vdwg.mxu0
        %v2191 = vrot.slane %v2188, 4
        %2192 = vrot.lane.b32.xlu0 %v2188, 64
        %v2193 = vpop.permute.xlu0 %2192
        %2194 = vrot.lane.b32.xlu0 %v2191, 64
        %v2195 = vpop.permute.xlu0 %2194
        %v2198 = vadd.f32 %v2002, %v2193
        %v2199 = vadd.f32 %v2054, %v2195
        %v2200 = vtanh.pop %v2198
        %v2201 = vtanh.pop %v2199
        %v2202 = vsub.f32 1.0, %v2142
        %v2203 = vsub.f32 1.0, %v2157
        %2206 = vrot.lane.b32.xlu0 %v2200, 64
        %v2207 = vpop.permute.xlu0 %2206
        %2208 = vrot.lane.b32.xlu0 %v2201, 64
        %v2209 = vpop.permute.xlu0 %2208
        %v2212 = vmul.f32 %v2202, %v2207
        %v2213 = vmul.f32 %v2203, %v2209
        %v2214 = vadd.f32 %v2158, %v2212
        %v2215 = vadd.f32 %v2159, %v2213
        %v2217 = vperm.slane %v2082, 0
        %2218 = vset.pattern.permute.xlu0 0
        %2219 = vperm.xlu0 %2218, %v2217
        %v2220 = vpop.permute.xlu0 %2219
        %v2222 = vmul.f32 %v2220, %v2214
        %v2223 = vmul.f32 %v2220, %v2215
        %v2224 = vadd.f32 %v2222, 0.0
        %v2225 = vadd.f32 %v2223, 0.0
        %2228 = vst [vmem:[#allocation1] ss:$2 sm:$0xff] %v2214
        %s2229 = scalar_lea.vmem [#allocation1], 1
        %2230 = vst [vmem:[%s2229] ss:$2 sm:$0xff] %v2215
        %v2231 = vld.sshfl [vmem:[#allocation1] sm:$0xff pattern:$0x75316420]
        %v2232 = vsel %vm2091, %v2231, 0
        %2234 = vmatpush.msra.mxu0 0.0
        %2235 = vmatpush.msra.mxu0 0.0
        %2236 = vmatpush.msra.mxu0 0.0
        %2237 = vmatpush.msra.mxu0 0.0
        %2238 = vmatpush.msra.mxu0 0.0
        %2239 = vmatpush.msra.mxu0 0.0
        %2240 = vmatpush.msra.mxu0 0.0
        %2241 = vmatpush.msra.mxu0 0.0
        %2242 = vmatpush.msra.mxu0 0.0
        %2243 = vmatpush.msra.mxu0 0.0
        %2244 = vmatpush.msra.mxu0 0.0
        %2245 = vmatpush.msra.mxu0 0.0
        %2246 = vmatpush.msra.mxu0 %v2086
        %2247 = vmatpush.msra.mxu0 %v2085
        %2248 = vmatpush.msra.mxu0 %v2084
        %2249 = vmatpush.msra.mxu0 %v2083
        %2250 = vmatmul.f32.gmra.mxu0 %v2232
        %v2251 = vpop.f32.mrf.mxu0
        %v2252 = vadd.f32 0.0, %v2251
        %2253 = vdwg.mxu0
        %v2255 = vrot.slane %v2252, 4
        %v2257 = vadd.f32 %v2028, %v2252
        %v2258 = vadd.f32 %v2080, %v2255
        %v2259 = vxor.u32 %v2257, 2147483648
        %v2260 = vxor.u32 %v2258, 2147483648
        %v2261 = vmul.f32 %v2259, 1.442695
        %v2262 = vpow.pop %v2261
        %v2263 = vmul.f32 %v2260, 1.442695
        %v2264 = vpow.pop %v2263
        %v2265 = vadd.f32 %v2262, 1.0
        %v2266 = vadd.f32 %v2264, 1.0
        %v2267 = vrcp.pop %v2265
        %v2268 = vmul.f32 %v2265, %v2267
        %v2269 = vsub.f32 1.0, %v2268
        %v2270 = vmul.f32 %v2267, %v2269
        %v2271 = vadd.f32 %v2267, %v2270
        %vm2272 = vweird.f32 %v2265
        %vm2273 = vweird.f32 %v2267
        %vm2274 = vmor %vm2272, %vm2273
        %v2275 = vsel %vm2274, %v2267, %v2271
        %v2276 = vand.u32 2147483647, %v2265
        %vm2277 = vcmp.eq.f32.partialorder %v2276, 8.507059e+37
        %v2278 = vand.u32 %v2265, 2147483648
        %v2279 = vor.u32 1.1754944e-38, %v2278
        %v2280 = vsel %vm2277, %v2279, %v2275
        %v2281 = vmul.f32 1.0, %v2280
        %v2282 = vrcp.pop %v2266
        %v2283 = vmul.f32 %v2266, %v2282
        %v2284 = vsub.f32 1.0, %v2283
        %v2285 = vmul.f32 %v2282, %v2284
        %v2286 = vadd.f32 %v2282, %v2285
        %vm2287 = vweird.f32 %v2266
        %vm2288 = vweird.f32 %v2282
        %vm2289 = vmor %vm2287, %vm2288
        %v2290 = vsel %vm2289, %v2282, %v2286
        %v2291 = vand.u32 2147483647, %v2266
        %vm2292 = vcmp.eq.f32.partialorder %v2291, 8.507059e+37
        %v2293 = vand.u32 %v2266, 2147483648
        %v2294 = vor.u32 1.1754944e-38, %v2293
        %v2295 = vsel %vm2292, %v2294, %v2290
        %v2296 = vmul.f32 1.0, %v2295
        %2299 = vrot.lane.b32.xlu0 %v2281, 96
        %v2300 = vpop.permute.xlu0 %2299
        %2301 = vrot.lane.b32.xlu0 %v2296, 96
        %v2302 = vpop.permute.xlu0 %2301
        %v2305 = vmul.f32 %v2214, %v2300
        %v2306 = vmul.f32 %v2215, %v2302
        %2309 = vst [vmem:[#allocation1] ss:$2 sm:$0xff] %v2305
        %s2310 = scalar_lea.vmem [#allocation1], 1
        %2311 = vst [vmem:[%s2310] ss:$2 sm:$0xff] %v2306
        %v2312 = vld.sshfl [vmem:[#allocation1] sm:$0xff pattern:$0x75316420]
        %v2313 = vsel %vm2091, %v2312, 0
        %2315 = vmatpush.msra.mxu0 0.0
        %2316 = vmatpush.msra.mxu0 0.0
        %2317 = vmatpush.msra.mxu0 0.0
        %2318 = vmatpush.msra.mxu0 0.0
        %2319 = vmatpush.msra.mxu0 0.0
        %2320 = vmatpush.msra.mxu0 0.0
        %2321 = vmatpush.msra.mxu0 0.0
        %2322 = vmatpush.msra.mxu0 0.0
        %2323 = vmatpush.msra.mxu0 0.0
        %2324 = vmatpush.msra.mxu0 0.0
        %2325 = vmatpush.msra.mxu0 0.0
        %2326 = vmatpush.msra.mxu0 0.0
        %2327 = vmatpush.msra.mxu0 %v2090
        %2328 = vmatpush.msra.mxu0 %v2089
        %2329 = vmatpush.msra.mxu0 %v2088
        %2330 = vmatpush.msra.mxu0 %v2087
        %2331 = vmatmul.f32.gmra.mxu0 %v2313
        %v2332 = vpop.f32.mrf.mxu0
        %v2333 = vadd.f32 0.0, %v2332
        %2334 = vdwg.mxu0
        %v2336 = vrot.slane %v2333, 4
        %2337 = vrot.lane.b32.xlu0 %v2333, 64
        %v2338 = vpop.permute.xlu0 %2337
        %2339 = vrot.lane.b32.xlu0 %v2336, 64
        %v2340 = vpop.permute.xlu0 %2339
        %v2343 = vadd.f32 %v2028, %v2338
        %v2344 = vadd.f32 %v2080, %v2340
        %v2345 = vtanh.pop %v2343
        %v2346 = vtanh.pop %v2344
        %v2347 = vmul.f32 %v2281, %v2214
        %v2348 = vmul.f32 %v2296, %v2215
        %v2349 = vsub.f32 1.0, %v2281
        %v2350 = vsub.f32 1.0, %v2296
        %2353 = vrot.lane.b32.xlu0 %v2345, 64
        %v2354 = vpop.permute.xlu0 %2353
        %2355 = vrot.lane.b32.xlu0 %v2346, 64
        %v2356 = vpop.permute.xlu0 %2355
        %v2359 = vmul.f32 %v2349, %v2354
        %v2360 = vmul.f32 %v2350, %v2356
        %v2361 = vadd.f32 %v2347, %v2359
        %v2362 = vadd.f32 %v2348, %v2360
        %2363 = vset.pattern.permute.xlu0 1
        %2364 = vperm.xlu0 %2363, %v2217
        %v2365 = vpop.permute.xlu0 %2364
        %v2367 = vmul.f32 %v2365, %v2361
        %v2368 = vmul.f32 %v2365, %v2362
        %v2369 = vadd.f32 %v2224, %v2367
        %v2370 = vadd.f32 %v2225, %v2368
        %p2371 = scmp.eq.s32.totalorder %s28, 0
        // Predicated region
        $region85: #{eeg_model_apply.1} parent=83 // pred_check
          %p2372 = pneg %p2371
        $region86: #{eeg_model_apply.1} parent=83 // pred_check_branch
          %2374 = sbr.rel (%p2372) target = $region88
        $region87: #{eeg_model_apply.1} parent=83 // pred_region
          %2377 = vst [vmem:[#allocation1] ss:$2 sm:$0xff] %v2369
          %s2378 = scalar_lea.vmem [#allocation1], 1
          %2379 = vst [vmem:[%s2378] ss:$2 sm:$0xff] %v2370
          %v2380 = vld.sshfl [vmem:[#allocation1] sm:$0xff pattern:$0x75316420]
          %2382 = vst.msk [vmem:[#allocation2] sm:$0xff] %vm2091, %v2380
        $region88: #{eeg_model_apply.1} parent=83 // pred_fallthru
          _
        %p2383 = scmp.eq.s32.totalorder %s28, 1
        // Predicated region
        $region89: #{eeg_model_apply.1} parent=83 // pred_check
          %p2384 = pneg %p2383
        $region90: #{eeg_model_apply.1} parent=83 // pred_check_branch
          %2386 = sbr.rel (%p2384) target = $region92
        $region91: #{eeg_model_apply.1} parent=83 // pred_region
          %v2387 = vld [vmem:[#allocation2] sm:$0xff]
          %v2388 = vmax.f32 %v2387, 0.0
          %v2390 = vrot.slane %v2388, 4
          %v2391 = vmax.f32 %v2369, 0.0
          %v2392 = vmax.f32 %v2370, 0.0
          %v2393 = vperm.slane %v2388, 0
          %v2394 = vperm.slane %v2390, 0
          %vm2395 = vcmask 1041409
          %v2396 = vsel %vm2395, %v2394, %v2393
          %v2398 = vperm.slane %v2388, 1
          %v2399 = vperm.slane %v2390, 1
          %v2400 = vsel %vm2395, %v2399, %v2398
          %2401 = vrot.lane.b32.xlu0 %v2400, 32
          %v2402 = vpop.permute.xlu0 %2401
          %v2404 = vperm.slane %v2388, 2
          %v2405 = vperm.slane %v2390, 2
          %v2406 = vsel %vm2395, %v2405, %v2404
          %2407 = vrot.lane.b32.xlu0 %v2406, 64
          %v2408 = vpop.permute.xlu0 %2407
          %v2410 = vperm.slane %v2388, 3
          %v2411 = vperm.slane %v2390, 3
          %v2412 = vsel %vm2395, %v2411, %v2410
          %2413 = vrot.lane.b32.xlu0 %v2412, 96
          %v2414 = vpop.permute.xlu0 %2413
          %v2418 = vperm.slane %v2391, 0
          %v2419 = vperm.slane %v2392, 0
          %v2420 = vsel %vm2395, %v2419, %v2418
          %v2422 = vperm.slane %v2391, 1
          %v2423 = vperm.slane %v2392, 1
          %v2424 = vsel %vm2395, %v2423, %v2422
          %2425 = vrot.lane.b32.xlu0 %v2424, 32
          %v2426 = vpop.permute.xlu0 %2425
          %v2428 = vperm.slane %v2391, 2
          %v2429 = vperm.slane %v2392, 2
          %v2430 = vsel %vm2395, %v2429, %v2428
          %2431 = vrot.lane.b32.xlu0 %v2430, 64
          %v2432 = vpop.permute.xlu0 %2431
          %v2434 = vperm.slane %v2391, 3
          %v2435 = vperm.slane %v2392, 3
          %v2436 = vsel %vm2395, %v2435, %v2434
          %2437 = vrot.lane.b32.xlu0 %v2436, 96
          %v2438 = vpop.permute.xlu0 %2437
          %v2440 = vsel %vm2091, %v2396, %v2402
          %vm2441 = vcmask 523264
          %v2442 = vsel %vm2441, %v2440, %v2408
          %vm2443 = vcmask 785408
          %v2444 = vsel %vm2443, %v2442, %v2414
          %v2445 = vsel %vm2091, %v2420, %v2426
          %v2446 = vsel %vm2441, %v2445, %v2432
          %v2447 = vsel %vm2443, %v2446, %v2438
          %v2448 = vld [vmem:[%s14] sm:$0xff]
          %v2449 = vld [vmem:[%s14 + $0x8] sm:$0xff]
          %v2450 = vld [vmem:[%s14 + $0x10] sm:$0xff]
          %v2451 = vld [vmem:[%s14 + $0x18] sm:$0xff]
          %v2452 = vld [vmem:[%s14 + $0x20] sm:$0xff]
          %v2453 = vld [vmem:[%s14 + $0x28] sm:$0xff]
          %v2454 = vld [vmem:[%s14 + $0x30] sm:$0xff]
          %v2455 = vld [vmem:[%s14 + $0x38] sm:$0xff]
          %v2456 = vld [vmem:[%s14 + $0x40] sm:$0xff]
          %v2457 = vld [vmem:[%s14 + $0x48] sm:$0xff]
          %v2458 = vld [vmem:[%s14 + $0x50] sm:$0xff]
          %v2459 = vld [vmem:[%s14 + $0x58] sm:$0xff]
          %v2460 = vld [vmem:[%s14 + $0x60] sm:$0xff]
          %v2461 = vld [vmem:[%s14 + $0x68] sm:$0xff]
          %v2462 = vld [vmem:[%s14 + $0x70] sm:$0xff]
          %v2463 = vld [vmem:[%s14 + $0x78] sm:$0xff]
          %v2464 = vld [vmem:[%s14 + $0x80] sm:$0xff]
          %v2465 = vld [vmem:[%s14 + $0x88] sm:$0xff]
          %v2466 = vld [vmem:[%s14 + $0x90] sm:$0xff]
          %v2467 = vld [vmem:[%s14 + $0x98] sm:$0xff]
          %v2468 = vld [vmem:[%s14 + $0xa0] sm:$0xff]
          %v2469 = vld [vmem:[%s14 + $0xa8] sm:$0xff]
          %v2470 = vld [vmem:[%s14 + $0xb0] sm:$0xff]
          %v2471 = vld [vmem:[%s14 + $0xb8] sm:$0xff]
          %v2472 = vld [vmem:[%s14 + $0xc0] sm:$0xff]
          %v2473 = vld [vmem:[%s14 + $0xc8] sm:$0xff]
          %v2474 = vld [vmem:[%s14 + $0xd0] sm:$0xff]
          %v2475 = vld [vmem:[%s14 + $0xd8] sm:$0xff]
          %v2476 = vld [vmem:[%s14 + $0xe0] sm:$0xff]
          %v2477 = vld [vmem:[%s14 + $0xe8] sm:$0xff]
          %v2478 = vld [vmem:[%s14 + $0xf0] sm:$0xff]
          %v2479 = vld [vmem:[%s14 + $0xf8] sm:$0xff]
          %v2480 = vld [vmem:[%s15] sm:$0x1]
          %v2482 = vperm.slane %v2480, 0
          %2484 = vmatpush.msra.mxu0 %v2463
          %2485 = vmatpush.msra.mxu0 %v2462
          %2486 = vmatpush.msra.mxu0 %v2461
          %2487 = vmatpush.msra.mxu0 %v2460
          %2488 = vmatpush.msra.mxu0 %v2459
          %2489 = vmatpush.msra.mxu0 %v2458
          %2490 = vmatpush.msra.mxu0 %v2457
          %2491 = vmatpush.msra.mxu0 %v2456
          %2492 = vmatpush.msra.mxu0 %v2455
          %2493 = vmatpush.msra.mxu0 %v2454
          %2494 = vmatpush.msra.mxu0 %v2453
          %2495 = vmatpush.msra.mxu0 %v2452
          %2496 = vmatpush.msra.mxu0 %v2451
          %2497 = vmatpush.msra.mxu0 %v2450
          %2498 = vmatpush.msra.mxu0 %v2449
          %2499 = vmatpush.msra.mxu0 %v2448
          %2500 = vmatmul.f32.gmra.mxu0 %v2444
          %v2501 = vpop.f32.mrf.mxu0
          %v2502 = vadd.f32 %v2482, %v2501
          %2503 = vdwg.mxu0
          %2504 = vmatpush.msra.mxu0 %v2479
          %2505 = vmatpush.msra.mxu0 %v2478
          %2506 = vmatpush.msra.mxu0 %v2477
          %2507 = vmatpush.msra.mxu0 %v2476
          %2508 = vmatpush.msra.mxu0 %v2475
          %2509 = vmatpush.msra.mxu0 %v2474
          %2510 = vmatpush.msra.mxu0 %v2473
          %2511 = vmatpush.msra.mxu0 %v2472
          %2512 = vmatpush.msra.mxu0 %v2471
          %2513 = vmatpush.msra.mxu0 %v2470
          %2514 = vmatpush.msra.mxu0 %v2469
          %2515 = vmatpush.msra.mxu0 %v2468
          %2516 = vmatpush.msra.mxu0 %v2467
          %2517 = vmatpush.msra.mxu0 %v2466
          %2518 = vmatpush.msra.mxu0 %v2465
          %2519 = vmatpush.msra.mxu0 %v2464
          %2520 = vmatmul.f32.gmra.mxu0 %v2447
          %v2521 = vpop.f32.mrf.mxu0
          %v2522 = vadd.f32 %v2502, %v2521
          %2523 = vdwg.mxu0
          %vm2524 = vcmask 17408
          %v2525 = vsel %vm2524, %v2522, -inf
          %2526 = vmax.xlane.f32.xlu0 %v2525
          %v2527 = vpop.xlane.xlu0 %2526
          %v2528 = vsub.f32 %v2522, %v2527
          %v2529 = vmul.f32 %v2528, 1.442695
          %v2530 = vpow.pop %v2529
          %v2531 = vsel %vm2524, %v2530, 0.0
          %2532 = vadd.xlane.f32.xlu0 %v2531
          %v2533 = vpop.xlane.xlu0 %2532
          %v2534 = vlog2.pop %v2533
          %v2535 = vmul.f32 %v2534, 0.6931472
          %v2536 = vadd.f32 %v2527, %v2535
          %v2537 = vsub.f32 %v2522, %v2536
          %2538 = vst.msk [vmem:[#allocation3] sm:$0x3] %vm2524, %v2537
        $region92: #{eeg_model_apply.1} parent=83 // pred_fallthru
          _
        // Predicated region
        $region93: #{eeg_model_apply.1} parent=83 // pred_check
          %p2539 = pneg %p437
        $region94: #{eeg_model_apply.1} parent=83 // pred_check_branch
          %2541 = sbr.rel (%p2539) target = $region96
        $region95: #{eeg_model_apply.1} parent=83 // pred_region
          %2543 = vsyncadd [#allocation4], 0
          %s2545 = sshll.u32 [#allocation3], 4
          %s2546 = int_to_ptr.vmem [resolvable:$true] %s2545
          %s2547 = sshll.u32 %s16, 4
          %s2548 = int_to_ptr.hbm [resolvable:$true] %s2547
          %2550 = dma.vmem_to_hbm [thread:$0]  %s2546, 32, %s2548, [#allocation4]
        $region96: #{eeg_model_apply.1} parent=83 // pred_fallthru
          _
        // Predicated region
        $region97: #{eeg_model_apply.1} parent=83 // pred_check
          %p2551 = pneg %p437
        $region98: #{eeg_model_apply.1} parent=83 // pred_check_branch
          %2553 = sbr.rel (%p2551) target = $region100
        $region99: #{eeg_model_apply.1} parent=83 // pred_region
          %2555 = dma.done [#allocation4], 32
        $region100: #{eeg_model_apply.1} parent=83 // pred_fallthru
          _
      $region84: #{eeg_model_apply.1} parent=5 // pred_fallthru
        _
      %p2556 = scmp.le.s32.totalorder 2, %s23
      // Predicated region
      $region101: #{eeg_model_apply.1} parent=5 // pred_check
        %p2557 = pneg %p2556
      $region102: #{eeg_model_apply.1} parent=5 // pred_check_branch
        %2559 = sbr.rel (%p2557) target = $region104
      $region103: #{eeg_model_apply.1} parent=5 // pred_region
        %s2560 = ssub.s32 %s23, 2
      $region104: #{eeg_model_apply.1} parent=5 // pred_fallthru
        _
    $region6: #{eeg_model_apply.1} parent=1 // loop_footer
      %s27 = sadd.s32 1, %s23
    $region7: #{eeg_model_apply.1} parent=1 // loop_footer_branch
      %22 = sbr.rel target = $region3
    $region8: #{eeg_model_apply.1} parent=1 // loop_exit
      _
    %2561 = vsyncpa [#allocation4], 1
    %s2562 = scalar_lea.sflag [#allocation4], 1
    %2563 = vsyncpa %s2562, 1

</llo_original>
